<compile_context>
chip_gen: v5e
topology: v5e:2x2
jax: 0.10.0
libtpu: 0.0.40
codegen_flags: <defaults>
</compile_context>

<pallas_src>
import functools

import jax
import jax.numpy as jnp
from jax.experimental import pallas as pl
from jax.experimental.pallas import tpu as pltpu


def _fused_conv_stats_kernel(x_ref, w_ref, b_ref, m_ref, o_ref, s1_ref, s2_ref,
                             *, ksize, w_padded, tile_m):
    """One grid step: conv for `tile_m` flattened spatial positions + BN stats.

    x_ref : (rows_in, Cin)     padded NHWC input, spatially flattened, VMEM resident
    w_ref : (K*K, Cin, Cout)   conv weights per (kh, kw) tap
    b_ref : (1, Cout)          conv bias (f32)
    m_ref : (tile_m, 1)        1.0 for rows that are valid conv outputs, else 0.0
    o_ref : (tile_m, Cout)     conv output (pre-BN), f32
    s1/s2 : (1, 1, Cout)       per-parallel-slice sum / sum-of-squares accumulators
    """
    c = pl.program_id(0)
    i = pl.program_id(1)
    inner = pl.num_programs(1)
    base = pl.multiple_of((c * inner + i) * tile_m, tile_m)

    cout = o_ref.shape[1]
    acc = jnp.zeros((tile_m, cout), jnp.float32)
    # Fused im2col: one shifted window of the flattened input per (kh, kw) tap.
    for kk in range(ksize * ksize):
        kh, kw = kk // ksize, kk % ksize
        shift = kh * w_padded + kw
        lhs = x_ref[pl.ds(base + shift, tile_m), :]
        acc += jnp.dot(lhs, w_ref[kk], preferred_element_type=jnp.float32)
    acc = acc + b_ref[...]
    o_ref[...] = acc

    # Batch-norm statistics over valid rows only (mask is 0/1).
    @pl.when(i == 0)
    def _():
        s1_ref[...] = jnp.zeros_like(s1_ref)
        s2_ref[...] = jnp.zeros_like(s2_ref)

    acc_m = acc * m_ref[...]
    s1_ref[...] += jnp.sum(acc_m, axis=0, keepdims=True)[None]
    s2_ref[...] += jnp.sum(acc_m * acc_m, axis=0, keepdims=True)[None]


def conv_forward(x, weight, bias, gamma, beta, *, stride, padding,
                 bn=True, groups=1, eps=1e-5, tile_m=512, n_par=2,
                 compute_dtype=jnp.float32):
    """Forward pass matching PyTorch Conv (Conv2d(bias=True) + optional training-mode BatchNorm2d).

    x:      (N, Cin, H, W)    float32, NCHW
    weight: (Cout, Cin, K, K) float32, OIHW
    bias, gamma, beta: (Cout,)
    returns (N, Cout, Ho, Wo) float32, NCHW
    compute_dtype: jnp.bfloat16 halves matmul-input DMA bytes (accum stays f32).
    """
    assert groups == 1  # TODO(synk): grouped/depthwise convolution not implemented
    x = x.astype(jnp.float32)
    N, Cin, H, W = x.shape
    Cout, _, K, _ = weight.shape
    Hp, Wp = H + 2 * padding, W + 2 * padding
    Ho = (Hp - K) // stride + 1
    Wo = (Wp - K) // stride + 1

    # ---- layout glue (plain JAX, no K*K duplication): NCHW -> padded NHWC, flat ----
    xp = jnp.pad(x, ((0, 0), (0, 0), (padding, padding), (padding, padding)))
    x_flat = xp.transpose(0, 2, 3, 1).reshape(N * Hp * Wp, Cin)

    m_flat = N * Hp * Wp                       # dense (incl. invalid) positions
    tiles = -(-m_flat // tile_m)
    tiles = -(-tiles // n_par) * n_par         # pad tile count to a multiple of n_par
    inner = tiles // n_par
    m_pad = tiles * tile_m
    d_max = (K - 1) * Wp + (K - 1)             # largest in-kernel row shift
    rows_in = ((m_pad + d_max + 7) // 8) * 8

    x_in = jnp.zeros((rows_in, Cin), compute_dtype).at[:m_flat].set(
        x_flat.astype(compute_dtype))
    w_in = weight.transpose(2, 3, 1, 0).reshape(K * K, Cin, Cout).astype(compute_dtype)
    b_in = bias.reshape(1, Cout).astype(jnp.float32)

    # Validity mask over dense flattened positions (handles stride and padding).
    h_idx = jnp.arange(Hp)
    w_idx = jnp.arange(Wp)
    vh = (h_idx % stride == 0) & (h_idx // stride < Ho)
    vw = (w_idx % stride == 0) & (w_idx // stride < Wo)
    mask2d = (vh[:, None] & vw[None, :]).astype(jnp.float32)
    mask = jnp.broadcast_to(mask2d[None], (N, Hp, Wp)).reshape(m_flat)
    mask_in = jnp.zeros((m_pad, 1), jnp.float32).at[:m_flat, 0].set(mask)

    kernel = functools.partial(_fused_conv_stats_kernel,
                               ksize=K, w_padded=Wp, tile_m=tile_m)

    # TODO(synk): for production-sized Cin*K*K, add a K reduction grid axis so the
    # resident input band stays within v7x's 64 MiB VMEM.
    conv_flat, s1, s2 = pl.pallas_call(
        kernel,
        out_shape=(jax.ShapeDtypeStruct((m_pad, Cout), jnp.float32),
                   jax.ShapeDtypeStruct((n_par, 1, Cout), jnp.float32),
                   jax.ShapeDtypeStruct((n_par, 1, Cout), jnp.float32)),
        grid_spec=pltpu.PrefetchScalarGridSpec(
            num_scalar_prefetch=0,
            grid=(n_par, inner),
            in_specs=[
                pl.BlockSpec((rows_in, Cin), lambda c, i: (0, 0)),        # resident input
                pl.BlockSpec((K * K, Cin, Cout), lambda c, i: (0, 0, 0)),  # weights
                pl.BlockSpec((1, Cout), lambda c, i: (0, 0)),              # bias
                pl.BlockSpec((tile_m, 1), lambda c, i: (c * inner + i, 0)),  # mask
            ],
            out_specs=(
                pl.BlockSpec((tile_m, Cout), lambda c, i: (c * inner + i, 0)),
                pl.BlockSpec((1, 1, Cout), lambda c, i: (c, 0, 0)),
                pl.BlockSpec((1, 1, Cout), lambda c, i: (c, 0, 0)),
            )),
        compiler_params=pltpu.CompilerParams(
            dimension_semantics=("parallel", "arbitrary"),
            vmem_limit_bytes=32 * 1024 * 1024),
    )(x_in, w_in, b_in, mask_in)

    if bn:
        count = N * Ho * Wo
        ssum = s1.sum(axis=(0, 1))
        ssq = s2.sum(axis=(0, 1))
        mean = ssum / count
        # TODO(synk): E[x^2]-E[x]^2 can cancel for large activation means; switch to a
        # two-pass / Welford accumulation for production-scale data.
        var = ssq / count - mean * mean
        scale = gamma * jax.lax.rsqrt(var + eps)
        shift = beta - mean * scale
        y = conv_flat * scale[None, :] + shift[None, :]   # fused by XLA with repack below
    else:
        y = conv_flat

    # Extract valid positions and repack to NCHW (single fused XLA pass).
    y = y[:m_flat].reshape(N, Hp, Wp, Cout)
    y = y[:, : (Ho - 1) * stride + 1 : stride, : (Wo - 1) * stride + 1 : stride, :]
    return y.transpose(0, 3, 1, 2)


if __name__ == "__main__":
    # Module config: Conv(dim_in=4, dim_out=8, kernel_size=3, stride=1, padding=1, bn=True)
    N, Cin, H, W = 2, 4, 16, 16
    Cout, K, stride, padding = 8, 3, 1, 1

    key = jax.random.PRNGKey(0)
    kx, kw, kb = jax.random.split(key, 3)
    x = jax.random.normal(kx, (N, Cin, H, W), jnp.float32)
    weight = jax.random.normal(kw, (Cout, Cin, K, K), jnp.float32) * 0.1
    bias = jax.random.normal(kb, (Cout,), jnp.float32) * 0.1
    gamma = jnp.ones((Cout,), jnp.float32)   # BatchNorm2d default init
    beta = jnp.zeros((Cout,), jnp.float32)

    out = conv_forward(x, weight, bias, gamma, beta,
                       stride=stride, padding=padding, bn=True)
    out = jax.block_until_ready(out)

    out_nobn = conv_forward(x, weight, bias, gamma, beta,
                            stride=stride, padding=padding, bn=False)
    out_nobn = jax.block_until_ready(out_nobn)

    # Pure-JAX reference (PyTorch semantics: Conv2d + training-mode BatchNorm2d)
    ref_conv = jax.lax.conv_general_dilated(
        x, weight, window_strides=(stride, stride),
        padding=[(padding, padding), (padding, padding)],
        dimension_numbers=("NCHW", "OIHW", "NCHW")) + bias[None, :, None, None]
    mu = ref_conv.mean(axis=(0, 2, 3), keepdims=True)
    var = ref_conv.var(axis=(0, 2, 3), keepdims=True)
    ref = (gamma[None, :, None, None] * (ref_conv - mu) / jnp.sqrt(var + 1e-5)
           + beta[None, :, None, None])

    Ho = (H + 2 * padding - K) // stride + 1
    Wo = (W + 2 * padding - K) // stride + 1
    assert out.shape == (N, Cout, Ho, Wo), out.shape
    assert jnp.allclose(out, ref, atol=2e-3, rtol=2e-3), float(jnp.abs(out - ref).max())
    assert jnp.allclose(out_nobn, ref_conv, atol=2e-3, rtol=2e-3), \
        float(jnp.abs(out_nobn - ref_conv).max())
    print("KERNEL_OK")
</pallas_src>

<mosaic_0001>
module attributes {stable_mosaic.version = 11 : i64} {
  func.func @_fused_conv_stats_kernel(%arg0: i32, %arg1: i32, %arg2: memref<1064x4xf32, #tpu.memory_space<vmem>>, %arg3: memref<9x4x8xf32, #tpu.memory_space<vmem>>, %arg4: memref<1x8xf32, #tpu.memory_space<vmem>>, %arg5: memref<512x1xf32, #tpu.memory_space<vmem>>, %arg6: memref<512x8xf32, #tpu.memory_space<vmem>>, %arg7: memref<1x1x8xf32, #tpu.memory_space<vmem>>, %arg8: memref<1x1x8xf32, #tpu.memory_space<vmem>>) attributes {dimension_semantics = [#tpu.dimension_semantics<parallel>, #tpu.dimension_semantics<arbitrary>], iteration_bounds = array<i64: 2, 1>, scalar_prefetch = 0 : i64, scratch_operands = 0 : i64, tpu.core_type = #tpu.core_type<tc>, window_params = [{pipeline_mode = #tpu.pipeline_mode<synchronous>, transform_indices = @transform_0, window_bounds = array<i64: 1064, 4>}, {pipeline_mode = #tpu.pipeline_mode<synchronous>, transform_indices = @transform_1, window_bounds = array<i64: 9, 4, 8>}, {pipeline_mode = #tpu.pipeline_mode<synchronous>, transform_indices = @transform_2, window_bounds = array<i64: 1, 8>}, {transform_indices = @transform_3, window_bounds = array<i64: 512, 1>}, {transform_indices = @transform_4, window_bounds = array<i64: 512, 8>}, {transform_indices = @transform_5, window_bounds = array<i64: 1, 1, 8>}, {transform_indices = @transform_6, window_bounds = array<i64: 1, 1, 8>}]} {
    %c1_i32 = arith.constant 1 : i32
    %0 = arith.muli %arg0, %c1_i32 : i32
    %1 = arith.addi %0, %arg1 : i32
    %c512_i32 = arith.constant 512 : i32
    %2 = arith.muli %1, %c512_i32 : i32
    %3 = tpu.assume_multiple %2, 512 : i32
    %cst = arith.constant 0.000000e+00 : f32
    %4 = vector.broadcast %cst : f32 to vector<512x8xf32>
    %c0_i32 = arith.constant 0 : i32
    %5 = arith.addi %3, %c0_i32 : i32
    %6 = arith.index_cast %5 : i32 to index
    %c0 = arith.constant 0 : index
    %7 = vector.load %arg2[%6, %c0] : memref<1064x4xf32, #tpu.memory_space<vmem>>, vector<512x4xf32>
    %c0_0 = arith.constant 0 : index
    %c0_1 = arith.constant 0 : index
    %c0_2 = arith.constant 0 : index
    %8 = vector.load %arg3[%c0_0, %c0_1, %c0_2] : memref<9x4x8xf32, #tpu.memory_space<vmem>>, vector<1x4x8xf32>
    %9 = vector.shape_cast %8 : vector<1x4x8xf32> to vector<4x8xf32>
    %cst_3 = arith.constant dense<0.000000e+00> : vector<512x8xf32>
    %10 = tpu.matmul %7, %9, %cst_3 {dimension_numbers = #tpu.dot_dimension_numbers<[1], [0], [0], [1], [0, 0, 1, 1], [], []>} : vector<512x4xf32>, vector<4x8xf32>, vector<512x8xf32> -> vector<512x8xf32>
    %11 = arith.addf %4, %10 : vector<512x8xf32>
    %c1_i32_4 = arith.constant 1 : i32
    %12 = arith.addi %3, %c1_i32_4 : i32
    %13 = arith.index_cast %12 : i32 to index
    %c0_5 = arith.constant 0 : index
    %14 = vector.load %arg2[%13, %c0_5] : memref<1064x4xf32, #tpu.memory_space<vmem>>, vector<512x4xf32>
    %c1 = arith.constant 1 : index
    %c0_6 = arith.constant 0 : index
    %c0_7 = arith.constant 0 : index
    %15 = vector.load %arg3[%c1, %c0_6, %c0_7] : memref<9x4x8xf32, #tpu.memory_space<vmem>>, vector<1x4x8xf32>
    %16 = vector.shape_cast %15 : vector<1x4x8xf32> to vector<4x8xf32>
    %cst_8 = arith.constant dense<0.000000e+00> : vector<512x8xf32>
    %17 = tpu.matmul %14, %16, %cst_8 {dimension_numbers = #tpu.dot_dimension_numbers<[1], [0], [0], [1], [0, 0, 1, 1], [], []>} : vector<512x4xf32>, vector<4x8xf32>, vector<512x8xf32> -> vector<512x8xf32>
    %18 = arith.addf %11, %17 : vector<512x8xf32>
    %c2_i32 = arith.constant 2 : i32
    %19 = arith.addi %3, %c2_i32 : i32
    %20 = arith.index_cast %19 : i32 to index
    %c0_9 = arith.constant 0 : index
    %21 = vector.load %arg2[%20, %c0_9] : memref<1064x4xf32, #tpu.memory_space<vmem>>, vector<512x4xf32>
    %c2 = arith.constant 2 : index
    %c0_10 = arith.constant 0 : index
    %c0_11 = arith.constant 0 : index
    %22 = vector.load %arg3[%c2, %c0_10, %c0_11] : memref<9x4x8xf32, #tpu.memory_space<vmem>>, vector<1x4x8xf32>
    %23 = vector.shape_cast %22 : vector<1x4x8xf32> to vector<4x8xf32>
    %cst_12 = arith.constant dense<0.000000e+00> : vector<512x8xf32>
    %24 = tpu.matmul %21, %23, %cst_12 {dimension_numbers = #tpu.dot_dimension_numbers<[1], [0], [0], [1], [0, 0, 1, 1], [], []>} : vector<512x4xf32>, vector<4x8xf32>, vector<512x8xf32> -> vector<512x8xf32>
    %25 = arith.addf %18, %24 : vector<512x8xf32>
    %c18_i32 = arith.constant 18 : i32
    %26 = arith.addi %3, %c18_i32 : i32
    %27 = arith.index_cast %26 : i32 to index
    %c0_13 = arith.constant 0 : index
    %28 = vector.load %arg2[%27, %c0_13] : memref<1064x4xf32, #tpu.memory_space<vmem>>, vector<512x4xf32>
    %c3 = arith.constant 3 : index
    %c0_14 = arith.constant 0 : index
    %c0_15 = arith.constant 0 : index
    %29 = vector.load %arg3[%c3, %c0_14, %c0_15] : memref<9x4x8xf32, #tpu.memory_space<vmem>>, vector<1x4x8xf32>
    %30 = vector.shape_cast %29 : vector<1x4x8xf32> to vector<4x8xf32>
    %cst_16 = arith.constant dense<0.000000e+00> : vector<512x8xf32>
    %31 = tpu.matmul %28, %30, %cst_16 {dimension_numbers = #tpu.dot_dimension_numbers<[1], [0], [0], [1], [0, 0, 1, 1], [], []>} : vector<512x4xf32>, vector<4x8xf32>, vector<512x8xf32> -> vector<512x8xf32>
    %32 = arith.addf %25, %31 : vector<512x8xf32>
    %c19_i32 = arith.constant 19 : i32
    %33 = arith.addi %3, %c19_i32 : i32
    %34 = arith.index_cast %33 : i32 to index
    %c0_17 = arith.constant 0 : index
    %35 = vector.load %arg2[%34, %c0_17] : memref<1064x4xf32, #tpu.memory_space<vmem>>, vector<512x4xf32>
    %c4 = arith.constant 4 : index
    %c0_18 = arith.constant 0 : index
    %c0_19 = arith.constant 0 : index
    %36 = vector.load %arg3[%c4, %c0_18, %c0_19] : memref<9x4x8xf32, #tpu.memory_space<vmem>>, vector<1x4x8xf32>
    %37 = vector.shape_cast %36 : vector<1x4x8xf32> to vector<4x8xf32>
    %cst_20 = arith.constant dense<0.000000e+00> : vector<512x8xf32>
    %38 = tpu.matmul %35, %37, %cst_20 {dimension_numbers = #tpu.dot_dimension_numbers<[1], [0], [0], [1], [0, 0, 1, 1], [], []>} : vector<512x4xf32>, vector<4x8xf32>, vector<512x8xf32> -> vector<512x8xf32>
    %39 = arith.addf %32, %38 : vector<512x8xf32>
    %c20_i32 = arith.constant 20 : i32
    %40 = arith.addi %3, %c20_i32 : i32
    %41 = arith.index_cast %40 : i32 to index
    %c0_21 = arith.constant 0 : index
    %42 = vector.load %arg2[%41, %c0_21] : memref<1064x4xf32, #tpu.memory_space<vmem>>, vector<512x4xf32>
    %c5 = arith.constant 5 : index
    %c0_22 = arith.constant 0 : index
    %c0_23 = arith.constant 0 : index
    %43 = vector.load %arg3[%c5, %c0_22, %c0_23] : memref<9x4x8xf32, #tpu.memory_space<vmem>>, vector<1x4x8xf32>
    %44 = vector.shape_cast %43 : vector<1x4x8xf32> to vector<4x8xf32>
    %cst_24 = arith.constant dense<0.000000e+00> : vector<512x8xf32>
    %45 = tpu.matmul %42, %44, %cst_24 {dimension_numbers = #tpu.dot_dimension_numbers<[1], [0], [0], [1], [0, 0, 1, 1], [], []>} : vector<512x4xf32>, vector<4x8xf32>, vector<512x8xf32> -> vector<512x8xf32>
    %46 = arith.addf %39, %45 : vector<512x8xf32>
    %c36_i32 = arith.constant 36 : i32
    %47 = arith.addi %3, %c36_i32 : i32
    %48 = arith.index_cast %47 : i32 to index
    %c0_25 = arith.constant 0 : index
    %49 = vector.load %arg2[%48, %c0_25] : memref<1064x4xf32, #tpu.memory_space<vmem>>, vector<512x4xf32>
    %c6 = arith.constant 6 : index
    %c0_26 = arith.constant 0 : index
    %c0_27 = arith.constant 0 : index
    %50 = vector.load %arg3[%c6, %c0_26, %c0_27] : memref<9x4x8xf32, #tpu.memory_space<vmem>>, vector<1x4x8xf32>
    %51 = vector.shape_cast %50 : vector<1x4x8xf32> to vector<4x8xf32>
    %cst_28 = arith.constant dense<0.000000e+00> : vector<512x8xf32>
    %52 = tpu.matmul %49, %51, %cst_28 {dimension_numbers = #tpu.dot_dimension_numbers<[1], [0], [0], [1], [0, 0, 1, 1], [], []>} : vector<512x4xf32>, vector<4x8xf32>, vector<512x8xf32> -> vector<512x8xf32>
    %53 = arith.addf %46, %52 : vector<512x8xf32>
    %c37_i32 = arith.constant 37 : i32
    %54 = arith.addi %3, %c37_i32 : i32
    %55 = arith.index_cast %54 : i32 to index
    %c0_29 = arith.constant 0 : index
    %56 = vector.load %arg2[%55, %c0_29] : memref<1064x4xf32, #tpu.memory_space<vmem>>, vector<512x4xf32>
    %c7 = arith.constant 7 : index
    %c0_30 = arith.constant 0 : index
    %c0_31 = arith.constant 0 : index
    %57 = vector.load %arg3[%c7, %c0_30, %c0_31] : memref<9x4x8xf32, #tpu.memory_space<vmem>>, vector<1x4x8xf32>
    %58 = vector.shape_cast %57 : vector<1x4x8xf32> to vector<4x8xf32>
    %cst_32 = arith.constant dense<0.000000e+00> : vector<512x8xf32>
    %59 = tpu.matmul %56, %58, %cst_32 {dimension_numbers = #tpu.dot_dimension_numbers<[1], [0], [0], [1], [0, 0, 1, 1], [], []>} : vector<512x4xf32>, vector<4x8xf32>, vector<512x8xf32> -> vector<512x8xf32>
    %60 = arith.addf %53, %59 : vector<512x8xf32>
    %c38_i32 = arith.constant 38 : i32
    %61 = arith.addi %3, %c38_i32 : i32
    %62 = arith.index_cast %61 : i32 to index
    %c0_33 = arith.constant 0 : index
    %63 = vector.load %arg2[%62, %c0_33] : memref<1064x4xf32, #tpu.memory_space<vmem>>, vector<512x4xf32>
    %c8 = arith.constant 8 : index
    %c0_34 = arith.constant 0 : index
    %c0_35 = arith.constant 0 : index
    %64 = vector.load %arg3[%c8, %c0_34, %c0_35] : memref<9x4x8xf32, #tpu.memory_space<vmem>>, vector<1x4x8xf32>
    %65 = vector.shape_cast %64 : vector<1x4x8xf32> to vector<4x8xf32>
    %cst_36 = arith.constant dense<0.000000e+00> : vector<512x8xf32>
    %66 = tpu.matmul %63, %65, %cst_36 {dimension_numbers = #tpu.dot_dimension_numbers<[1], [0], [0], [1], [0, 0, 1, 1], [], []>} : vector<512x4xf32>, vector<4x8xf32>, vector<512x8xf32> -> vector<512x8xf32>
    %67 = arith.addf %60, %66 : vector<512x8xf32>
    %c0_37 = arith.constant 0 : index
    %c0_38 = arith.constant 0 : index
    %68 = vector.load %arg4[%c0_37, %c0_38] : memref<1x8xf32, #tpu.memory_space<vmem>>, vector<1x8xf32>
    %69 = vector.broadcast %68 : vector<1x8xf32> to vector<512x8xf32>
    %70 = arith.addf %67, %69 : vector<512x8xf32>
    %c0_39 = arith.constant 0 : index
    %c0_40 = arith.constant 0 : index
    %71 = vector.load %arg6[%c0_39, %c0_40] : memref<512x8xf32, #tpu.memory_space<vmem>>, vector<512x8xf32>
    tpu.vector_store %arg6[%c0_39, %c0_40], %70 {strides = array<i32>} : memref<512x8xf32, #tpu.memory_space<vmem>>, vector<512x8xf32>,
    %c0_i32_41 = arith.constant 0 : i32
    %72 = arith.cmpi eq, %arg1, %c0_i32_41 : i32
    %73 = arith.extui %72 : i1 to i32
    %c0_i32_42 = arith.constant 0 : i32
    %74 = arith.cmpi ne, %73, %c0_i32_42 : i32
    scf.if %74 {
      %cst_59 = arith.constant 0.000000e+00 : f32
      %91 = vector.broadcast %cst_59 : f32 to vector<1x1x8xf32>
      %c0_60 = arith.constant 0 : index
      %c0_61 = arith.constant 0 : index
      %c0_62 = arith.constant 0 : index
      %92 = vector.load %arg7[%c0_60, %c0_61, %c0_62] : memref<1x1x8xf32, #tpu.memory_space<vmem>>, vector<1x1x8xf32>
      tpu.vector_store %arg7[%c0_60, %c0_61, %c0_62], %91 {strides = array<i32>} : memref<1x1x8xf32, #tpu.memory_space<vmem>>, vector<1x1x8xf32>,
      %cst_63 = arith.constant 0.000000e+00 : f32
      %93 = vector.broadcast %cst_63 : f32 to vector<1x1x8xf32>
      %c0_64 = arith.constant 0 : index
      %c0_65 = arith.constant 0 : index
      %c0_66 = arith.constant 0 : index
      %94 = vector.load %arg8[%c0_64, %c0_65, %c0_66] : memref<1x1x8xf32, #tpu.memory_space<vmem>>, vector<1x1x8xf32>
      tpu.vector_store %arg8[%c0_64, %c0_65, %c0_66], %93 {strides = array<i32>} : memref<1x1x8xf32, #tpu.memory_space<vmem>>, vector<1x1x8xf32>,
    } else {
    }
    %c0_43 = arith.constant 0 : index
    %c0_44 = arith.constant 0 : index
    %75 = vector.load %arg5[%c0_43, %c0_44] : memref<512x1xf32, #tpu.memory_space<vmem>>, vector<512x1xf32>
    %76 = vector.broadcast %75 : vector<512x1xf32> to vector<512x8xf32>
    %77 = arith.mulf %70, %76 : vector<512x8xf32>
    %c0_45 = arith.constant 0 : index
    %c0_46 = arith.constant 0 : index
    %c0_47 = arith.constant 0 : index
    %78 = vector.load %arg7[%c0_45, %c0_46, %c0_47] : memref<1x1x8xf32, #tpu.memory_space<vmem>>, vector<1x1x8xf32>
    %cst_48 = arith.constant dense<0.000000e+00> : vector<8xf32>
    %79 = vector.multi_reduction <add>, %77, %cst_48 [0] : vector<512x8xf32> to vector<8xf32>
    %80 = vector.shape_cast %79 : vector<8xf32> to vector<1x8xf32>
    %81 = vector.shape_cast %80 : vector<1x8xf32> to vector<1x1x8xf32>
    %82 = arith.addf %78, %81 : vector<1x1x8xf32>
    %c0_49 = arith.constant 0 : index
    %c0_50 = arith.constant 0 : index
    %c0_51 = arith.constant 0 : index
    %83 = vector.load %arg7[%c0_49, %c0_50, %c0_51] : memref<1x1x8xf32, #tpu.memory_space<vmem>>, vector<1x1x8xf32>
    tpu.vector_store %arg7[%c0_49, %c0_50, %c0_51], %82 {strides = array<i32>} : memref<1x1x8xf32, #tpu.memory_space<vmem>>, vector<1x1x8xf32>,
    %c0_52 = arith.constant 0 : index
    %c0_53 = arith.constant 0 : index
    %c0_54 = arith.constant 0 : index
    %84 = vector.load %arg8[%c0_52, %c0_53, %c0_54] : memref<1x1x8xf32, #tpu.memory_space<vmem>>, vector<1x1x8xf32>
    %85 = arith.mulf %77, %77 : vector<512x8xf32>
    %cst_55 = arith.constant dense<0.000000e+00> : vector<8xf32>
    %86 = vector.multi_reduction <add>, %85, %cst_55 [0] : vector<512x8xf32> to vector<8xf32>
    %87 = vector.shape_cast %86 : vector<8xf32> to vector<1x8xf32>
    %88 = vector.shape_cast %87 : vector<1x8xf32> to vector<1x1x8xf32>
    %89 = arith.addf %84, %88 : vector<1x1x8xf32>
    %c0_56 = arith.constant 0 : index
    %c0_57 = arith.constant 0 : index
    %c0_58 = arith.constant 0 : index
    %90 = vector.load %arg8[%c0_56, %c0_57, %c0_58] : memref<1x1x8xf32, #tpu.memory_space<vmem>>, vector<1x1x8xf32>
    tpu.vector_store %arg8[%c0_56, %c0_57, %c0_58], %89 {strides = array<i32>} : memref<1x1x8xf32, #tpu.memory_space<vmem>>, vector<1x1x8xf32>,
    return
  }
  func.func @transform_0(%arg0: i32, %arg1: i32) -> (i32, i32) {
    %c0_i32 = arith.constant 0 : i32
    %c0_i32_0 = arith.constant 0 : i32
    %c0_i32_1 = arith.constant 0 : i32
    return %c0_i32, %c0_i32_0 : i32, i32
  }
  func.func @transform_1(%arg0: i32, %arg1: i32) -> (i32, i32, i32) {
    %c0_i32 = arith.constant 0 : i32
    %c0_i32_0 = arith.constant 0 : i32
    %c0_i32_1 = arith.constant 0 : i32
    %c0_i32_2 = arith.constant 0 : i32
    return %c0_i32, %c0_i32_0, %c0_i32_1 : i32, i32, i32
  }
  func.func @transform_2(%arg0: i32, %arg1: i32) -> (i32, i32) {
    %c0_i32 = arith.constant 0 : i32
    %c0_i32_0 = arith.constant 0 : i32
    %c0_i32_1 = arith.constant 0 : i32
    return %c0_i32, %c0_i32_0 : i32, i32
  }
  func.func @transform_3(%arg0: i32, %arg1: i32) -> (i32, i32) {
    %c1_i32 = arith.constant 1 : i32
    %0 = arith.muli %arg0, %c1_i32 : i32
    %1 = arith.addi %0, %arg1 : i32
    %c0_i32 = arith.constant 0 : i32
    %c0_i32_0 = arith.constant 0 : i32
    return %1, %c0_i32 : i32, i32
  }
  func.func @transform_4(%arg0: i32, %arg1: i32) -> (i32, i32) {
    %c1_i32 = arith.constant 1 : i32
    %0 = arith.muli %arg0, %c1_i32 : i32
    %1 = arith.addi %0, %arg1 : i32
    %c0_i32 = arith.constant 0 : i32
    %c0_i32_0 = arith.constant 0 : i32
    return %1, %c0_i32 : i32, i32
  }
  func.func @transform_5(%arg0: i32, %arg1: i32) -> (i32, i32, i32) {
    %c0_i32 = arith.constant 0 : i32
    %c0_i32_0 = arith.constant 0 : i32
    %c0_i32_1 = arith.constant 0 : i32
    return %arg0, %c0_i32, %c0_i32_0 : i32, i32, i32
  }
  func.func @transform_6(%arg0: i32, %arg1: i32) -> (i32, i32, i32) {
    %c0_i32 = arith.constant 0 : i32
    %c0_i32_0 = arith.constant 0 : i32
    %c0_i32_1 = arith.constant 0 : i32
    return %arg0, %c0_i32, %c0_i32_0 : i32, i32, i32
  }
}

</mosaic_0001>

<llo_original>
// kernel: tpu_custom_call.1
$region0: #{tpu_custom_call.1}
  #allocation0 [shape = 'u32[]', space=smem, size = 0x4, offset = 0x4, fixed_abs, tag = 'smem constant byte address 0x4 - core index']
  #allocation1 [shape = 'u32[72,128]{1,0:T(1,128)}', space=vmem, size = 0x9000, scoped, tag = 'internal scratch']
  %s0 = inlined_call_operand.vmem [shape: f32[1064,4], index: 0, kind: input, shape index: {}]
  %s1 = inlined_call_operand.vmem [shape: f32[9,4,8], index: 1, kind: input, shape index: {}]
  %s2 = inlined_call_operand.vmem [shape: f32[1,8], index: 2, kind: input, shape index: {}]
  %s3 = inlined_call_operand.vmem [shape: f32[1024,1], index: 3, kind: input, shape index: {}]
  %s4 = inlined_call_operand.vmem [shape: f32[1024,8], index: 4, kind: output, shape index: {0}]
  %s5 = inlined_call_operand.hbm [shape: f32[2,1,8], index: 5, kind: output, shape index: {1}]
  %s6 = inlined_call_operand.hbm [shape: f32[2,1,8], index: 6, kind: output, shape index: {2}]
  %7 = xla_tuple %s4, %s5, %s6
  %s8 = sld [smem:[#allocation0]]
  $region69: #{tpu_custom_call.1} parent=0
    _
  %s10 = ssub.s32 1, %s8
  %s11 = scalar_select 0, %s10, %s8
  $region1: #{tpu_custom_call.1} parent=0
    #allocation2 [shape = 'u8[1024]{0}', space=vmem, size = 0x400, scoped, tag = 'output window, operand 1']
    #allocation3 [shape = 's32[2]{0}', space=sflag, size = 0x8, scoped, tag = 'scoped memory for tpu_custom_call.1']
    #allocation4 [shape = 'u8[1024]{0}', space=vmem, size = 0x400, scoped, tag = 'output window, operand 2']
    #allocation5 [shape = 's32[2]{0}', space=sflag, size = 0x8, scoped, tag = 'scoped memory for tpu_custom_call.1']
    %12 = vsyncpa [#allocation3], 0
    %s13 = scalar_lea.sflag [#allocation3], 1
    %14 = vsyncpa %s13, 0
    %15 = vsyncpa [#allocation5], 0
    %s16 = scalar_lea.sflag [#allocation5], 1
    %17 = vsyncpa %s16, 0
    loop: start=0, step=1, limit=4
    $region2: #{tpu_custom_call.1} parent=1 // loop_pre_header
      _
    $region3: #{tpu_custom_call.1} parent=1 // loop_header
      %s19 = sphi 0, %s23
      %p20 = scmp.ge.s32.totalorder %s19, 4
      %s26 = sphi 0, %s38
      %s27 = sphi 0, %s34
      %s28 = sphi 0, %s26
      %s29 = sphi 0, %s27
      %s30 = sphi 0, %s28
      %s31 = sphi 0, %s29
      %s39 = sphi 0, %s39
      %s41 = sphi 0, %s39
      %s42 = sphi 0, %s41
      %s56 = sphi 0, %s42
      %s60 = sphi 0, %s60
      %s62 = sphi 0, %s60
      %s63 = sphi 0, %s62
      %s77 = sphi 0, %s63
      %s81 = sphi 0, %s81
      %s83 = sphi 0, %s81
      %s84 = sphi 0, %s83
      %s98 = sphi 0, %s84
      %s106 = sphi 0, %s108
      %s109 = sphi 0, %s106
      %s110 = sphi 0, %s109
      %s126 = sphi 0, %s110
      %s134 = sphi 0, %s136
      %s137 = sphi 0, %s134
      %s138 = sphi 0, %s137
      %s154 = sphi 0, %s138
      %s160 = sphi 0, %s162
      %s163 = sphi 0, %s160
      %s164 = sphi 0, %s163
      %s180 = sphi 0, %s164
      %s186 = sphi 0, %s188
      %s189 = sphi 0, %s186
      %s190 = sphi 0, %s189
      %s206 = sphi 0, %s190
    $region4: #{tpu_custom_call.1} parent=1 // loop_header_branch
      %22 = sbr.rel (%p20) target = $region8
    $region5: #{tpu_custom_call.1} parent=1 // loop_body
      %s24 = ssub.s32 %s19, 1
      %s25 = ssub.s32 %s19, 2
      %s32 = sadd.s32 1, %s27
      %p33 = scmp.ge.s32.totalorder %s32, 1
      %s34 = scalar_select %p33, 0, %s32
      %s35 = sadd.s32 1, %s26
      %s36 = scalar_select %p33, %s35, %s26
      %p37 = scmp.ge.s32.totalorder %s36, 2
      %s38 = scalar_select %p37, 0, %s36
      %s40 = sadd.s32 %s39, 1
      %p43 = scmp.eq.s32.totalorder %s19, 1
      %p44 = scmp.ne.s32.totalorder %s39, %s41
      %p45 = scmp.eq.s32.totalorder %s19, 0
      %p46 = por %p44, %p45
      %p47 = scmp.ne.s32.totalorder %s39, %s41
      %p48 = scmp.eq.s32.totalorder %s24, 1
      %p49 = por %p47, %p48
      %p50 = scmp.ne.s32.totalorder %s41, %s42
      %p51 = scmp.eq.s32.totalorder %s24, 0
      %p52 = por %p50, %p51
      %p53 = scmp.ne.s32.totalorder %s41, %s42
      %p54 = scmp.eq.s32.totalorder %s25, 1
      %p55 = por %p53, %p54
      %p57 = scmp.ne.s32.totalorder %s42, %s56
      %p58 = scmp.eq.s32.totalorder %s25, 0
      %p59 = por %p57, %p58
      %s61 = sadd.s32 %s60, 1
      %p64 = scmp.eq.s32.totalorder %s19, 1
      %p65 = scmp.ne.s32.totalorder %s60, %s62
      %p66 = scmp.eq.s32.totalorder %s19, 0
      %p67 = por %p65, %p66
      %p68 = scmp.ne.s32.totalorder %s60, %s62
      %p69 = scmp.eq.s32.totalorder %s24, 1
      %p70 = por %p68, %p69
      %p71 = scmp.ne.s32.totalorder %s62, %s63
      %p72 = scmp.eq.s32.totalorder %s24, 0
      %p73 = por %p71, %p72
      %p74 = scmp.ne.s32.totalorder %s62, %s63
      %p75 = scmp.eq.s32.totalorder %s25, 1
      %p76 = por %p74, %p75
      %p78 = scmp.ne.s32.totalorder %s63, %s77
      %p79 = scmp.eq.s32.totalorder %s25, 0
      %p80 = por %p78, %p79
      %s82 = sadd.s32 %s81, 1
      %p85 = scmp.eq.s32.totalorder %s19, 1
      %p86 = scmp.ne.s32.totalorder %s81, %s83
      %p87 = scmp.eq.s32.totalorder %s19, 0
      %p88 = por %p86, %p87
      %p89 = scmp.ne.s32.totalorder %s81, %s83
      %p90 = scmp.eq.s32.totalorder %s24, 1
      %p91 = por %p89, %p90
      %p92 = scmp.ne.s32.totalorder %s83, %s84
      %p93 = scmp.eq.s32.totalorder %s24, 0
      %p94 = por %p92, %p93
      %p95 = scmp.ne.s32.totalorder %s83, %s84
      %p96 = scmp.eq.s32.totalorder %s25, 1
      %p97 = por %p95, %p96
      %p99 = scmp.ne.s32.totalorder %s84, %s98
      %p100 = scmp.eq.s32.totalorder %s25, 0
      %p101 = por %p99, %p100
      %s102 = sadd.s32 %s26, %s27
      %s103 = sadd.s32 %s38, %s34
      %s104 = ssub.s32 %s102, %s103
      %p105 = scmp.eq.s32.totalorder %s104, 0
      %s107 = sadd.s32 %s106, 1
      %s108 = scalar_select %p105, %s106, %s107
      %p111 = pneg %p105
      %p112 = scmp.eq.s32.totalorder %s19, 1
      %p113 = por %p111, %p112
      %p114 = scmp.ne.s32.totalorder %s106, %s109
      %p115 = scmp.eq.s32.totalorder %s19, 0
      %p116 = por %p114, %p115
      %p117 = scmp.ne.s32.totalorder %s106, %s109
      %p118 = scmp.eq.s32.totalorder %s24, 1
      %p119 = por %p117, %p118
      %p120 = scmp.ne.s32.totalorder %s109, %s110
      %p121 = scmp.eq.s32.totalorder %s24, 0
      %p122 = por %p120, %p121
      %p123 = scmp.ne.s32.totalorder %s109, %s110
      %p124 = scmp.eq.s32.totalorder %s25, 1
      %p125 = por %p123, %p124
      %p127 = scmp.ne.s32.totalorder %s110, %s126
      %p128 = scmp.eq.s32.totalorder %s25, 0
      %p129 = por %p127, %p128
      %s130 = sadd.s32 %s26, %s27
      %s131 = sadd.s32 %s38, %s34
      %s132 = ssub.s32 %s130, %s131
      %p133 = scmp.eq.s32.totalorder %s132, 0
      %s135 = sadd.s32 %s134, 1
      %s136 = scalar_select %p133, %s134, %s135
      %p139 = pneg %p133
      %p140 = scmp.eq.s32.totalorder %s19, 1
      %p141 = por %p139, %p140
      %p142 = scmp.ne.s32.totalorder %s134, %s137
      %p143 = scmp.eq.s32.totalorder %s19, 0
      %p144 = por %p142, %p143
      %p145 = scmp.ne.s32.totalorder %s134, %s137
      %p146 = scmp.eq.s32.totalorder %s24, 1
      %p147 = por %p145, %p146
      %p148 = scmp.ne.s32.totalorder %s137, %s138
      %p149 = scmp.eq.s32.totalorder %s24, 0
      %p150 = por %p148, %p149
      %p151 = scmp.ne.s32.totalorder %s137, %s138
      %p152 = scmp.eq.s32.totalorder %s25, 1
      %p153 = por %p151, %p152
      %p155 = scmp.ne.s32.totalorder %s138, %s154
      %p156 = scmp.eq.s32.totalorder %s25, 0
      %p157 = por %p155, %p156
      %s158 = ssub.s32 %s26, %s38
      %p159 = scmp.eq.s32.totalorder %s158, 0
      %s161 = sadd.s32 %s160, 1
      %s162 = scalar_select %p159, %s160, %s161
      %p165 = pneg %p159
      %p166 = scmp.eq.s32.totalorder %s19, 1
      %p167 = por %p165, %p166
      %p168 = scmp.ne.s32.totalorder %s160, %s163
      %p169 = scmp.eq.s32.totalorder %s19, 0
      %p170 = por %p168, %p169
      %p171 = scmp.ne.s32.totalorder %s160, %s163
      %p172 = scmp.eq.s32.totalorder %s24, 1
      %p173 = por %p171, %p172
      %p174 = scmp.ne.s32.totalorder %s163, %s164
      %p175 = scmp.eq.s32.totalorder %s24, 0
      %p176 = por %p174, %p175
      %p177 = scmp.ne.s32.totalorder %s163, %s164
      %p178 = scmp.eq.s32.totalorder %s25, 1
      %p179 = por %p177, %p178
      %p181 = scmp.ne.s32.totalorder %s164, %s180
      %p182 = scmp.eq.s32.totalorder %s25, 0
      %p183 = por %p181, %p182
      %s184 = ssub.s32 %s26, %s38
      %p185 = scmp.eq.s32.totalorder %s184, 0
      %s187 = sadd.s32 %s186, 1
      %s188 = scalar_select %p185, %s186, %s187
      %p191 = pneg %p185
      %p192 = scmp.eq.s32.totalorder %s19, 1
      %p193 = por %p191, %p192
      %p194 = scmp.ne.s32.totalorder %s186, %s189
      %p195 = scmp.eq.s32.totalorder %s19, 0
      %p196 = por %p194, %p195
      %p197 = scmp.ne.s32.totalorder %s186, %s189
      %p198 = scmp.eq.s32.totalorder %s24, 1
      %p199 = por %p197, %p198
      %p200 = scmp.ne.s32.totalorder %s189, %s190
      %p201 = scmp.eq.s32.totalorder %s24, 0
      %p202 = por %p200, %p201
      %p203 = scmp.ne.s32.totalorder %s189, %s190
      %p204 = scmp.eq.s32.totalorder %s25, 1
      %p205 = por %p203, %p204
      %p207 = scmp.ne.s32.totalorder %s190, %s206
      %p208 = scmp.eq.s32.totalorder %s25, 0
      %p209 = por %p207, %p208
      %p210 = scmp.le.s32.totalorder 1, %s19
      %p211 = scmp.lt.s32.totalorder %s19, 3
      %p212 = pnand %p210, %p211
      %p213 = pneg %p212
      // Predicated region
      $region9: #{tpu_custom_call.1} parent=5 // pred_check
        _
      $region10: #{tpu_custom_call.1} parent=5 // pred_check_branch
        %215 = sbr.rel (%p212) target = $region12
      $region11: #{tpu_custom_call.1} parent=5 // pred_region
        %s216 = ssub.s32 %s19, 1
        // Predicated region
        $region13: #{tpu_custom_call.1} parent=11 // pred_check
          %p217 = pneg %p52
        $region14: #{tpu_custom_call.1} parent=11 // pred_check_branch
          %219 = sbr.rel (%p217) target = $region16
        $region15: #{tpu_custom_call.1} parent=11 // pred_region
          _
        $region16: #{tpu_custom_call.1} parent=11 // pred_fallthru
          _
        // Predicated region
        $region17: #{tpu_custom_call.1} parent=11 // pred_check
          %p220 = pneg %p73
        $region18: #{tpu_custom_call.1} parent=11 // pred_check_branch
          %222 = sbr.rel (%p220) target = $region20
        $region19: #{tpu_custom_call.1} parent=11 // pred_region
          _
        $region20: #{tpu_custom_call.1} parent=11 // pred_fallthru
          _
        // Predicated region
        $region21: #{tpu_custom_call.1} parent=11 // pred_check
          %p223 = pneg %p94
        $region22: #{tpu_custom_call.1} parent=11 // pred_check_branch
          %225 = sbr.rel (%p223) target = $region24
        $region23: #{tpu_custom_call.1} parent=11 // pred_region
          _
        $region24: #{tpu_custom_call.1} parent=11 // pred_fallthru
          _
      $region12: #{tpu_custom_call.1} parent=5 // pred_fallthru
        _
      %p226 = scmp.lt.s32.totalorder %s19, 2
      // Predicated region
      $region25: #{tpu_custom_call.1} parent=5 // pred_check
        %p227 = pneg %p226
      $region26: #{tpu_custom_call.1} parent=5 // pred_check_branch
        %229 = sbr.rel (%p227) target = $region28
      $region27: #{tpu_custom_call.1} parent=5 // pred_region
        // Predicated region
        $region29: #{tpu_custom_call.1} parent=27 // pred_check
          %p230 = pneg %p116
        $region30: #{tpu_custom_call.1} parent=27 // pred_check_branch
          %232 = sbr.rel (%p230) target = $region32
        $region31: #{tpu_custom_call.1} parent=27 // pred_region
          %s233 = sadd.s32 %s26, %s27
          %s234 = smul.u32 64, %s233
          %p235 = scmp.lt.s32.totalorder %s234, 127
          %s236 = scalar_select %p235, %s234, 127
          %s237 = smul.addr %s236, 8
          %s238 = scalar_lea.vmem %s3, %s237
          %s239 = sadd.s32 %s26, %s27
          %s240 = smul.u32 64, %s239
        $region32: #{tpu_custom_call.1} parent=27 // pred_fallthru
          _
      $region28: #{tpu_custom_call.1} parent=5 // pred_fallthru
        _
      %p241 = scmp.le.s32.totalorder 1, %s19
      %p242 = scmp.lt.s32.totalorder %s19, 3
      %p243 = pnand %p241, %p242
      %p244 = pneg %p243
      // Predicated region
      $region33: #{tpu_custom_call.1} parent=5 // pred_check
        _
      $region34: #{tpu_custom_call.1} parent=5 // pred_check_branch
        %246 = sbr.rel (%p243) target = $region36
      $region35: #{tpu_custom_call.1} parent=5 // pred_region
        %s247 = ssub.s32 %s19, 1
        %p248 = pneg %p52
        %p249 = pneg %p49
        %p250 = pneg %p73
        %p251 = pneg %p70
        %p252 = pneg %p94
        %p253 = pneg %p91
        %s254 = sadd.s32 %s28, %s29
        %s255 = smul.u32 64, %s254
        %p256 = scmp.lt.s32.totalorder %s255, 127
        %s257 = scalar_select %p256, %s255, 127
        %s258 = smul.addr %s257, 8
        %s259 = scalar_lea.vmem %s3, %s258
        %p260 = pneg %p122
        %p261 = pneg %p119
        %p262 = pneg %p150
        %p263 = pneg %p147
        %s264 = sadd.s32 %s28, %s29
        %s265 = smul.u32 64, %s264
        %p266 = scmp.lt.s32.totalorder %s265, 127
        %s267 = scalar_select %p266, %s265, 127
        %s268 = smul.addr %s267, 8
        %s269 = scalar_lea.vmem %s4, %s268
        %p270 = pneg %p176
        %p271 = pneg %p173
        %s272 = sand.u32 %s163, 1
        %s273 = scalar_lea.sflag [#allocation3], %s272
        %s274 = sand.u32 %s163, 1
        %s275 = scalar_lea.vmem [#allocation2], %s274
        %p276 = pneg %p202
        %p277 = pneg %p199
        %s278 = sand.u32 %s189, 1
        %s279 = scalar_lea.sflag [#allocation5], %s278
        %s280 = sand.u32 %s189, 1
        %s281 = scalar_lea.vmem [#allocation4], %s280
        %s282 = sadd.s32 %s28, %s29
        %s283 = smul.u32 64, %s282
        %p284 = scmp.lt.s32.totalorder %s283, 127
        %s285 = scalar_select %p284, %s283, 127
        %s286 = smul.addr %s285, 8
        %s287 = scalar_lea.vmem %s3, %s286
        %s288 = sadd.s32 %s28, %s29
        %s289 = smul.u32 64, %s288
        %s290 = sadd.s32 %s28, %s29
        %s291 = smul.u32 64, %s290
        %p292 = scmp.lt.s32.totalorder %s291, 127
        %s293 = scalar_select %p292, %s291, 127
        %s294 = smul.addr %s293, 8
        %s295 = scalar_lea.vmem %s4, %s294
        %s296 = sadd.s32 %s28, %s29
        %s297 = smul.u32 64, %s296
        %s298 = sadd.s32 %s28, %s29
        %s299 = smul.u32 %s298, 512
        %s300 = scalar_lea.vmem %s0, %s299
        %v301 = vld [vmem:[%s300] sm:$0xff]
        %v302 = vld [vmem:[%s300 + $0x8] sm:$0xff]
        %v303 = vld [vmem:[%s300 + $0x10] sm:$0xff]
        %v304 = vld [vmem:[%s300 + $0x18] sm:$0xff]
        %v305 = vld [vmem:[%s300 + $0x20] sm:$0xff]
        %v306 = vld [vmem:[%s300 + $0x28] sm:$0xff]
        %v307 = vld [vmem:[%s300 + $0x30] sm:$0xff]
        %v308 = vld [vmem:[%s300 + $0x38] sm:$0xff]
        %v309 = vld [vmem:[%s300 + $0x40] sm:$0xff]
        %v310 = vld [vmem:[%s300 + $0x48] sm:$0xff]
        %v311 = vld [vmem:[%s300 + $0x50] sm:$0xff]
        %v312 = vld [vmem:[%s300 + $0x58] sm:$0xff]
        %v313 = vld [vmem:[%s300 + $0x60] sm:$0xff]
        %v314 = vld [vmem:[%s300 + $0x68] sm:$0xff]
        %v315 = vld [vmem:[%s300 + $0x70] sm:$0xff]
        %v316 = vld [vmem:[%s300 + $0x78] sm:$0xff]
        %v317 = vld [vmem:[%s300 + $0x80] sm:$0xff]
        %v318 = vld [vmem:[%s300 + $0x88] sm:$0xff]
        %v319 = vld [vmem:[%s300 + $0x90] sm:$0xff]
        %v320 = vld [vmem:[%s300 + $0x98] sm:$0xff]
        %v321 = vld [vmem:[%s300 + $0xa0] sm:$0xff]
        %v322 = vld [vmem:[%s300 + $0xa8] sm:$0xff]
        %v323 = vld [vmem:[%s300 + $0xb0] sm:$0xff]
        %v324 = vld [vmem:[%s300 + $0xb8] sm:$0xff]
        %v325 = vld [vmem:[%s300 + $0xc0] sm:$0xff]
        %v326 = vld [vmem:[%s300 + $0xc8] sm:$0xff]
        %v327 = vld [vmem:[%s300 + $0xd0] sm:$0xff]
        %v328 = vld [vmem:[%s300 + $0xd8] sm:$0xff]
        %v329 = vld [vmem:[%s300 + $0xe0] sm:$0xff]
        %v330 = vld [vmem:[%s300 + $0xe8] sm:$0xff]
        %v331 = vld [vmem:[%s300 + $0xf0] sm:$0xff]
        %v332 = vld [vmem:[%s300 + $0xf8] sm:$0xff]
        %v333 = vld [vmem:[%s300 + $0x100] sm:$0xff]
        %v334 = vld [vmem:[%s300 + $0x108] sm:$0xff]
        %v335 = vld [vmem:[%s300 + $0x110] sm:$0xff]
        %v336 = vld [vmem:[%s300 + $0x118] sm:$0xff]
        %v337 = vld [vmem:[%s300 + $0x120] sm:$0xff]
        %v338 = vld [vmem:[%s300 + $0x128] sm:$0xff]
        %v339 = vld [vmem:[%s300 + $0x130] sm:$0xff]
        %v340 = vld [vmem:[%s300 + $0x138] sm:$0xff]
        %v341 = vld [vmem:[%s300 + $0x140] sm:$0xff]
        %v342 = vld [vmem:[%s300 + $0x148] sm:$0xff]
        %v343 = vld [vmem:[%s300 + $0x150] sm:$0xff]
        %v344 = vld [vmem:[%s300 + $0x158] sm:$0xff]
        %v345 = vld [vmem:[%s300 + $0x160] sm:$0xff]
        %v346 = vld [vmem:[%s300 + $0x168] sm:$0xff]
        %v347 = vld [vmem:[%s300 + $0x170] sm:$0xff]
        %v348 = vld [vmem:[%s300 + $0x178] sm:$0xff]
        %v349 = vld [vmem:[%s300 + $0x180] sm:$0xff]
        %v350 = vld [vmem:[%s300 + $0x188] sm:$0xff]
        %v351 = vld [vmem:[%s300 + $0x190] sm:$0xff]
        %v352 = vld [vmem:[%s300 + $0x198] sm:$0xff]
        %v353 = vld [vmem:[%s300 + $0x1a0] sm:$0xff]
        %v354 = vld [vmem:[%s300 + $0x1a8] sm:$0xff]
        %v355 = vld [vmem:[%s300 + $0x1b0] sm:$0xff]
        %v356 = vld [vmem:[%s300 + $0x1b8] sm:$0xff]
        %v357 = vld [vmem:[%s300 + $0x1c0] sm:$0xff]
        %v358 = vld [vmem:[%s300 + $0x1c8] sm:$0xff]
        %v359 = vld [vmem:[%s300 + $0x1d0] sm:$0xff]
        %v360 = vld [vmem:[%s300 + $0x1d8] sm:$0xff]
        %v361 = vld [vmem:[%s300 + $0x1e0] sm:$0xff]
        %v362 = vld [vmem:[%s300 + $0x1e8] sm:$0xff]
        %v363 = vld [vmem:[%s300 + $0x1f0] sm:$0xff]
        %v364 = vld [vmem:[%s300 + $0x1f8] sm:$0xff]
        %v365 = vld [vmem:[%s1] sm:$0xf]
        %s366 = sadd.s32 %s299, 1
        %s367 = scalar_lea.vmem %s0, %s366
        %v368 = vld [vmem:[%s367] sm:$0xff]
        %v369 = vld [vmem:[%s367 + $0x8] sm:$0xff]
        %v370 = vld [vmem:[%s367 + $0x10] sm:$0xff]
        %v371 = vld [vmem:[%s367 + $0x18] sm:$0xff]
        %v372 = vld [vmem:[%s367 + $0x20] sm:$0xff]
        %v373 = vld [vmem:[%s367 + $0x28] sm:$0xff]
        %v374 = vld [vmem:[%s367 + $0x30] sm:$0xff]
        %v375 = vld [vmem:[%s367 + $0x38] sm:$0xff]
        %v376 = vld [vmem:[%s367 + $0x40] sm:$0xff]
        %v377 = vld [vmem:[%s367 + $0x48] sm:$0xff]
        %v378 = vld [vmem:[%s367 + $0x50] sm:$0xff]
        %v379 = vld [vmem:[%s367 + $0x58] sm:$0xff]
        %v380 = vld [vmem:[%s367 + $0x60] sm:$0xff]
        %v381 = vld [vmem:[%s367 + $0x68] sm:$0xff]
        %v382 = vld [vmem:[%s367 + $0x70] sm:$0xff]
        %v383 = vld [vmem:[%s367 + $0x78] sm:$0xff]
        %v384 = vld [vmem:[%s367 + $0x80] sm:$0xff]
        %v385 = vld [vmem:[%s367 + $0x88] sm:$0xff]
        %v386 = vld [vmem:[%s367 + $0x90] sm:$0xff]
        %v387 = vld [vmem:[%s367 + $0x98] sm:$0xff]
        %v388 = vld [vmem:[%s367 + $0xa0] sm:$0xff]
        %v389 = vld [vmem:[%s367 + $0xa8] sm:$0xff]
        %v390 = vld [vmem:[%s367 + $0xb0] sm:$0xff]
        %v391 = vld [vmem:[%s367 + $0xb8] sm:$0xff]
        %v392 = vld [vmem:[%s367 + $0xc0] sm:$0xff]
        %v393 = vld [vmem:[%s367 + $0xc8] sm:$0xff]
        %v394 = vld [vmem:[%s367 + $0xd0] sm:$0xff]
        %v395 = vld [vmem:[%s367 + $0xd8] sm:$0xff]
        %v396 = vld [vmem:[%s367 + $0xe0] sm:$0xff]
        %v397 = vld [vmem:[%s367 + $0xe8] sm:$0xff]
        %v398 = vld [vmem:[%s367 + $0xf0] sm:$0xff]
        %v399 = vld [vmem:[%s367 + $0xf8] sm:$0xff]
        %v400 = vld [vmem:[%s367 + $0x100] sm:$0xff]
        %v401 = vld [vmem:[%s367 + $0x108] sm:$0xff]
        %v402 = vld [vmem:[%s367 + $0x110] sm:$0xff]
        %v403 = vld [vmem:[%s367 + $0x118] sm:$0xff]
        %v404 = vld [vmem:[%s367 + $0x120] sm:$0xff]
        %v405 = vld [vmem:[%s367 + $0x128] sm:$0xff]
        %v406 = vld [vmem:[%s367 + $0x130] sm:$0xff]
        %v407 = vld [vmem:[%s367 + $0x138] sm:$0xff]
        %v408 = vld [vmem:[%s367 + $0x140] sm:$0xff]
        %v409 = vld [vmem:[%s367 + $0x148] sm:$0xff]
        %v410 = vld [vmem:[%s367 + $0x150] sm:$0xff]
        %v411 = vld [vmem:[%s367 + $0x158] sm:$0xff]
        %v412 = vld [vmem:[%s367 + $0x160] sm:$0xff]
        %v413 = vld [vmem:[%s367 + $0x168] sm:$0xff]
        %v414 = vld [vmem:[%s367 + $0x170] sm:$0xff]
        %v415 = vld [vmem:[%s367 + $0x178] sm:$0xff]
        %v416 = vld [vmem:[%s367 + $0x180] sm:$0xff]
        %v417 = vld [vmem:[%s367 + $0x188] sm:$0xff]
        %v418 = vld [vmem:[%s367 + $0x190] sm:$0xff]
        %v419 = vld [vmem:[%s367 + $0x198] sm:$0xff]
        %v420 = vld [vmem:[%s367 + $0x1a0] sm:$0xff]
        %v421 = vld [vmem:[%s367 + $0x1a8] sm:$0xff]
        %v422 = vld [vmem:[%s367 + $0x1b0] sm:$0xff]
        %v423 = vld [vmem:[%s367 + $0x1b8] sm:$0xff]
        %v424 = vld [vmem:[%s367 + $0x1c0] sm:$0xff]
        %v425 = vld [vmem:[%s367 + $0x1c8] sm:$0xff]
        %v426 = vld [vmem:[%s367 + $0x1d0] sm:$0xff]
        %v427 = vld [vmem:[%s367 + $0x1d8] sm:$0xff]
        %v428 = vld [vmem:[%s367 + $0x1e0] sm:$0xff]
        %v429 = vld [vmem:[%s367 + $0x1e8] sm:$0xff]
        %v430 = vld [vmem:[%s367 + $0x1f0] sm:$0xff]
        %v431 = vld [vmem:[%s367 + $0x1f8] sm:$0xff]
        %s432 = scalar_lea.vmem %s1, 4
        %v433 = vld [vmem:[%s432] sm:$0xf]
        %vm434 = vcmask 31744
        %v436 = vsel %vm434, %v368, 0
        %v439 = vsel %vm434, %v369, 0
        %v442 = vsel %vm434, %v370, 0
        %v445 = vsel %vm434, %v371, 0
        %v448 = vsel %vm434, %v372, 0
        %v451 = vsel %vm434, %v373, 0
        %v454 = vsel %vm434, %v374, 0
        %v457 = vsel %vm434, %v375, 0
        %v460 = vsel %vm434, %v376, 0
        %v463 = vsel %vm434, %v377, 0
        %v466 = vsel %vm434, %v378, 0
        %v469 = vsel %vm434, %v379, 0
        %v472 = vsel %vm434, %v380, 0
        %v475 = vsel %vm434, %v381, 0
        %v478 = vsel %vm434, %v382, 0
        %v481 = vsel %vm434, %v383, 0
        %v484 = vsel %vm434, %v384, 0
        %v487 = vsel %vm434, %v385, 0
        %v490 = vsel %vm434, %v386, 0
        %v493 = vsel %vm434, %v387, 0
        %v496 = vsel %vm434, %v388, 0
        %v499 = vsel %vm434, %v389, 0
        %v502 = vsel %vm434, %v390, 0
        %v505 = vsel %vm434, %v391, 0
        %v508 = vsel %vm434, %v392, 0
        %v511 = vsel %vm434, %v393, 0
        %v514 = vsel %vm434, %v394, 0
        %v517 = vsel %vm434, %v395, 0
        %v520 = vsel %vm434, %v396, 0
        %v523 = vsel %vm434, %v397, 0
        %v526 = vsel %vm434, %v398, 0
        %v529 = vsel %vm434, %v399, 0
        %v532 = vsel %vm434, %v400, 0
        %v535 = vsel %vm434, %v401, 0
        %v538 = vsel %vm434, %v402, 0
        %v541 = vsel %vm434, %v403, 0
        %v544 = vsel %vm434, %v404, 0
        %v547 = vsel %vm434, %v405, 0
        %v550 = vsel %vm434, %v406, 0
        %v553 = vsel %vm434, %v407, 0
        %v556 = vsel %vm434, %v408, 0
        %v559 = vsel %vm434, %v409, 0
        %v562 = vsel %vm434, %v410, 0
        %v565 = vsel %vm434, %v411, 0
        %v568 = vsel %vm434, %v412, 0
        %v571 = vsel %vm434, %v413, 0
        %v574 = vsel %vm434, %v414, 0
        %v577 = vsel %vm434, %v415, 0
        %v580 = vsel %vm434, %v416, 0
        %v583 = vsel %vm434, %v417, 0
        %v586 = vsel %vm434, %v418, 0
        %v589 = vsel %vm434, %v419, 0
        %v592 = vsel %vm434, %v420, 0
        %v595 = vsel %vm434, %v421, 0
        %v598 = vsel %vm434, %v422, 0
        %v601 = vsel %vm434, %v423, 0
        %v604 = vsel %vm434, %v424, 0
        %v607 = vsel %vm434, %v425, 0
        %v610 = vsel %vm434, %v426, 0
        %v613 = vsel %vm434, %v427, 0
        %v616 = vsel %vm434, %v428, 0
        %v619 = vsel %vm434, %v429, 0
        %v622 = vsel %vm434, %v430, 0
        %v625 = vsel %vm434, %v431, 0
        %vm627 = vcmask 1043456
        %v629 = vsel %vm627, %v433, 0
        %631 = vmatpush.msra.mxu0 0.0
        %632 = vmatpush.msra.mxu0 0.0
        %633 = vmatpush.msra.mxu0 0.0
        %634 = vmatpush.msra.mxu0 0.0
        %635 = vmatpush.msra.mxu0 0.0
        %636 = vmatpush.msra.mxu0 0.0
        %637 = vmatpush.msra.mxu0 0.0
        %638 = vmatpush.msra.mxu0 0.0
        %639 = vmatpush.msra.mxu0 0.0
        %640 = vmatpush.msra.mxu0 0.0
        %641 = vmatpush.msra.mxu0 0.0
        %642 = vmatpush.msra.mxu0 0.0
        %643 = vmatpush.msra.mxu0 0.0
        %644 = vmatpush.msra.mxu0 0.0
        %645 = vmatpush.msra.mxu0 0.0
        %646 = vmatpush.msra.mxu0 %v629
        %647 = vmatmul.f32.gmra.mxu0 %v436
        %v648 = vpop.f32.mrf.mxu0
        %v649 = vadd.f32 0.0, %v648
        %650 = vmatmul.f32.gmra.mxu0 %v439
        %v651 = vpop.f32.mrf.mxu0
        %v652 = vadd.f32 0.0, %v651
        %653 = vmatmul.f32.gmra.mxu0 %v442
        %v654 = vpop.f32.mrf.mxu0
        %v655 = vadd.f32 0.0, %v654
        %656 = vmatmul.f32.gmra.mxu0 %v445
        %v657 = vpop.f32.mrf.mxu0
        %v658 = vadd.f32 0.0, %v657
        %659 = vmatmul.f32.gmra.mxu0 %v448
        %v660 = vpop.f32.mrf.mxu0
        %v661 = vadd.f32 0.0, %v660
        %662 = vmatmul.f32.gmra.mxu0 %v451
        %v663 = vpop.f32.mrf.mxu0
        %v664 = vadd.f32 0.0, %v663
        %665 = vmatmul.f32.gmra.mxu0 %v454
        %v666 = vpop.f32.mrf.mxu0
        %v667 = vadd.f32 0.0, %v666
        %668 = vmatmul.f32.gmra.mxu0 %v457
        %v669 = vpop.f32.mrf.mxu0
        %v670 = vadd.f32 0.0, %v669
        %671 = vmatmul.f32.gmra.mxu0 %v460
        %v672 = vpop.f32.mrf.mxu0
        %v673 = vadd.f32 0.0, %v672
        %674 = vmatmul.f32.gmra.mxu0 %v463
        %v675 = vpop.f32.mrf.mxu0
        %v676 = vadd.f32 0.0, %v675
        %677 = vmatmul.f32.gmra.mxu0 %v466
        %v678 = vpop.f32.mrf.mxu0
        %v679 = vadd.f32 0.0, %v678
        %680 = vmatmul.f32.gmra.mxu0 %v469
        %v681 = vpop.f32.mrf.mxu0
        %v682 = vadd.f32 0.0, %v681
        %683 = vmatmul.f32.gmra.mxu0 %v472
        %v684 = vpop.f32.mrf.mxu0
        %v685 = vadd.f32 0.0, %v684
        %686 = vmatmul.f32.gmra.mxu0 %v475
        %v687 = vpop.f32.mrf.mxu0
        %v688 = vadd.f32 0.0, %v687
        %689 = vmatmul.f32.gmra.mxu0 %v478
        %v690 = vpop.f32.mrf.mxu0
        %v691 = vadd.f32 0.0, %v690
        %692 = vmatmul.f32.gmra.mxu0 %v481
        %v693 = vpop.f32.mrf.mxu0
        %v694 = vadd.f32 0.0, %v693
        %695 = vmatmul.f32.gmra.mxu0 %v484
        %v696 = vpop.f32.mrf.mxu0
        %v697 = vadd.f32 0.0, %v696
        %698 = vmatmul.f32.gmra.mxu0 %v487
        %v699 = vpop.f32.mrf.mxu0
        %v700 = vadd.f32 0.0, %v699
        %701 = vmatmul.f32.gmra.mxu0 %v490
        %v702 = vpop.f32.mrf.mxu0
        %v703 = vadd.f32 0.0, %v702
        %704 = vmatmul.f32.gmra.mxu0 %v493
        %v705 = vpop.f32.mrf.mxu0
        %v706 = vadd.f32 0.0, %v705
        %707 = vmatmul.f32.gmra.mxu0 %v496
        %v708 = vpop.f32.mrf.mxu0
        %v709 = vadd.f32 0.0, %v708
        %710 = vmatmul.f32.gmra.mxu0 %v499
        %v711 = vpop.f32.mrf.mxu0
        %v712 = vadd.f32 0.0, %v711
        %713 = vmatmul.f32.gmra.mxu0 %v502
        %v714 = vpop.f32.mrf.mxu0
        %v715 = vadd.f32 0.0, %v714
        %716 = vmatmul.f32.gmra.mxu0 %v505
        %v717 = vpop.f32.mrf.mxu0
        %v718 = vadd.f32 0.0, %v717
        %719 = vmatmul.f32.gmra.mxu0 %v508
        %v720 = vpop.f32.mrf.mxu0
        %v721 = vadd.f32 0.0, %v720
        %722 = vmatmul.f32.gmra.mxu0 %v511
        %v723 = vpop.f32.mrf.mxu0
        %v724 = vadd.f32 0.0, %v723
        %725 = vmatmul.f32.gmra.mxu0 %v514
        %v726 = vpop.f32.mrf.mxu0
        %v727 = vadd.f32 0.0, %v726
        %728 = vmatmul.f32.gmra.mxu0 %v517
        %v729 = vpop.f32.mrf.mxu0
        %v730 = vadd.f32 0.0, %v729
        %731 = vmatmul.f32.gmra.mxu0 %v520
        %v732 = vpop.f32.mrf.mxu0
        %v733 = vadd.f32 0.0, %v732
        %734 = vmatmul.f32.gmra.mxu0 %v523
        %v735 = vpop.f32.mrf.mxu0
        %v736 = vadd.f32 0.0, %v735
        %737 = vmatmul.f32.gmra.mxu0 %v526
        %v738 = vpop.f32.mrf.mxu0
        %v739 = vadd.f32 0.0, %v738
        %740 = vmatmul.f32.gmra.mxu0 %v529
        %v741 = vpop.f32.mrf.mxu0
        %v742 = vadd.f32 0.0, %v741
        %743 = vmatmul.f32.gmra.mxu0 %v532
        %v744 = vpop.f32.mrf.mxu0
        %v745 = vadd.f32 0.0, %v744
        %746 = vmatmul.f32.gmra.mxu0 %v535
        %v747 = vpop.f32.mrf.mxu0
        %v748 = vadd.f32 0.0, %v747
        %749 = vmatmul.f32.gmra.mxu0 %v538
        %v750 = vpop.f32.mrf.mxu0
        %v751 = vadd.f32 0.0, %v750
        %752 = vmatmul.f32.gmra.mxu0 %v541
        %v753 = vpop.f32.mrf.mxu0
        %v754 = vadd.f32 0.0, %v753
        %755 = vmatmul.f32.gmra.mxu0 %v544
        %v756 = vpop.f32.mrf.mxu0
        %v757 = vadd.f32 0.0, %v756
        %758 = vmatmul.f32.gmra.mxu0 %v547
        %v759 = vpop.f32.mrf.mxu0
        %v760 = vadd.f32 0.0, %v759
        %761 = vmatmul.f32.gmra.mxu0 %v550
        %v762 = vpop.f32.mrf.mxu0
        %v763 = vadd.f32 0.0, %v762
        %764 = vmatmul.f32.gmra.mxu0 %v553
        %v765 = vpop.f32.mrf.mxu0
        %v766 = vadd.f32 0.0, %v765
        %767 = vmatmul.f32.gmra.mxu0 %v556
        %v768 = vpop.f32.mrf.mxu0
        %v769 = vadd.f32 0.0, %v768
        %770 = vmatmul.f32.gmra.mxu0 %v559
        %v771 = vpop.f32.mrf.mxu0
        %v772 = vadd.f32 0.0, %v771
        %773 = vmatmul.f32.gmra.mxu0 %v562
        %v774 = vpop.f32.mrf.mxu0
        %v775 = vadd.f32 0.0, %v774
        %776 = vmatmul.f32.gmra.mxu0 %v565
        %v777 = vpop.f32.mrf.mxu0
        %v778 = vadd.f32 0.0, %v777
        %779 = vmatmul.f32.gmra.mxu0 %v568
        %v780 = vpop.f32.mrf.mxu0
        %v781 = vadd.f32 0.0, %v780
        %782 = vmatmul.f32.gmra.mxu0 %v571
        %v783 = vpop.f32.mrf.mxu0
        %v784 = vadd.f32 0.0, %v783
        %785 = vmatmul.f32.gmra.mxu0 %v574
        %v786 = vpop.f32.mrf.mxu0
        %v787 = vadd.f32 0.0, %v786
        %788 = vmatmul.f32.gmra.mxu0 %v577
        %v789 = vpop.f32.mrf.mxu0
        %v790 = vadd.f32 0.0, %v789
        %791 = vmatmul.f32.gmra.mxu0 %v580
        %v792 = vpop.f32.mrf.mxu0
        %v793 = vadd.f32 0.0, %v792
        %794 = vmatmul.f32.gmra.mxu0 %v583
        %v795 = vpop.f32.mrf.mxu0
        %v796 = vadd.f32 0.0, %v795
        %797 = vmatmul.f32.gmra.mxu0 %v586
        %v798 = vpop.f32.mrf.mxu0
        %v799 = vadd.f32 0.0, %v798
        %800 = vmatmul.f32.gmra.mxu0 %v589
        %v801 = vpop.f32.mrf.mxu0
        %v802 = vadd.f32 0.0, %v801
        %803 = vmatmul.f32.gmra.mxu0 %v592
        %v804 = vpop.f32.mrf.mxu0
        %v805 = vadd.f32 0.0, %v804
        %806 = vmatmul.f32.gmra.mxu0 %v595
        %v807 = vpop.f32.mrf.mxu0
        %v808 = vadd.f32 0.0, %v807
        %809 = vmatmul.f32.gmra.mxu0 %v598
        %v810 = vpop.f32.mrf.mxu0
        %v811 = vadd.f32 0.0, %v810
        %812 = vmatmul.f32.gmra.mxu0 %v601
        %v813 = vpop.f32.mrf.mxu0
        %v814 = vadd.f32 0.0, %v813
        %815 = vmatmul.f32.gmra.mxu0 %v604
        %v816 = vpop.f32.mrf.mxu0
        %v817 = vadd.f32 0.0, %v816
        %818 = vmatmul.f32.gmra.mxu0 %v607
        %v819 = vpop.f32.mrf.mxu0
        %v820 = vadd.f32 0.0, %v819
        %821 = vmatmul.f32.gmra.mxu0 %v610
        %v822 = vpop.f32.mrf.mxu0
        %v823 = vadd.f32 0.0, %v822
        %824 = vmatmul.f32.gmra.mxu0 %v613
        %v825 = vpop.f32.mrf.mxu0
        %v826 = vadd.f32 0.0, %v825
        %827 = vmatmul.f32.gmra.mxu0 %v616
        %v828 = vpop.f32.mrf.mxu0
        %v829 = vadd.f32 0.0, %v828
        %830 = vmatmul.f32.gmra.mxu0 %v619
        %v831 = vpop.f32.mrf.mxu0
        %v832 = vadd.f32 0.0, %v831
        %833 = vmatmul.f32.gmra.mxu0 %v622
        %v834 = vpop.f32.mrf.mxu0
        %v835 = vadd.f32 0.0, %v834
        %836 = vmatmul.f32.gmra.mxu0 %v625
        %v837 = vpop.f32.mrf.mxu0
        %v838 = vadd.f32 0.0, %v837
        %839 = vdwg.mxu0
        %v841 = vsel %vm434, %v301, 0
        %v844 = vsel %vm434, %v302, 0
        %v847 = vsel %vm434, %v303, 0
        %v850 = vsel %vm434, %v304, 0
        %v853 = vsel %vm434, %v305, 0
        %v856 = vsel %vm434, %v306, 0
        %v859 = vsel %vm434, %v307, 0
        %v862 = vsel %vm434, %v308, 0
        %v865 = vsel %vm434, %v309, 0
        %v868 = vsel %vm434, %v310, 0
        %v871 = vsel %vm434, %v311, 0
        %v874 = vsel %vm434, %v312, 0
        %v877 = vsel %vm434, %v313, 0
        %v880 = vsel %vm434, %v314, 0
        %v883 = vsel %vm434, %v315, 0
        %v886 = vsel %vm434, %v316, 0
        %v889 = vsel %vm434, %v317, 0
        %v892 = vsel %vm434, %v318, 0
        %v895 = vsel %vm434, %v319, 0
        %v898 = vsel %vm434, %v320, 0
        %v901 = vsel %vm434, %v321, 0
        %v904 = vsel %vm434, %v322, 0
        %v907 = vsel %vm434, %v323, 0
        %v910 = vsel %vm434, %v324, 0
        %v913 = vsel %vm434, %v325, 0
        %v916 = vsel %vm434, %v326, 0
        %v919 = vsel %vm434, %v327, 0
        %v922 = vsel %vm434, %v328, 0
        %v925 = vsel %vm434, %v329, 0
        %v928 = vsel %vm434, %v330, 0
        %v931 = vsel %vm434, %v331, 0
        %v934 = vsel %vm434, %v332, 0
        %v937 = vsel %vm434, %v333, 0
        %v940 = vsel %vm434, %v334, 0
        %v943 = vsel %vm434, %v335, 0
        %v946 = vsel %vm434, %v336, 0
        %v949 = vsel %vm434, %v337, 0
        %v952 = vsel %vm434, %v338, 0
        %v955 = vsel %vm434, %v339, 0
        %v958 = vsel %vm434, %v340, 0
        %v961 = vsel %vm434, %v341, 0
        %v964 = vsel %vm434, %v342, 0
        %v967 = vsel %vm434, %v343, 0
        %v970 = vsel %vm434, %v344, 0
        %v973 = vsel %vm434, %v345, 0
        %v976 = vsel %vm434, %v346, 0
        %v979 = vsel %vm434, %v347, 0
        %v982 = vsel %vm434, %v348, 0
        %v985 = vsel %vm434, %v349, 0
        %v988 = vsel %vm434, %v350, 0
        %v991 = vsel %vm434, %v351, 0
        %v994 = vsel %vm434, %v352, 0
        %v997 = vsel %vm434, %v353, 0
        %v1000 = vsel %vm434, %v354, 0
        %v1003 = vsel %vm434, %v355, 0
        %v1006 = vsel %vm434, %v356, 0
        %v1009 = vsel %vm434, %v357, 0
        %v1012 = vsel %vm434, %v358, 0
        %v1015 = vsel %vm434, %v359, 0
        %v1018 = vsel %vm434, %v360, 0
        %v1021 = vsel %vm434, %v361, 0
        %v1024 = vsel %vm434, %v362, 0
        %v1027 = vsel %vm434, %v363, 0
        %v1030 = vsel %vm434, %v364, 0
        %v1033 = vsel %vm627, %v365, 0
        %1035 = vmatpush.msra.mxu0 0.0
        %1036 = vmatpush.msra.mxu0 0.0
        %1037 = vmatpush.msra.mxu0 0.0
        %1038 = vmatpush.msra.mxu0 0.0
        %1039 = vmatpush.msra.mxu0 0.0
        %1040 = vmatpush.msra.mxu0 0.0
        %1041 = vmatpush.msra.mxu0 0.0
        %1042 = vmatpush.msra.mxu0 0.0
        %1043 = vmatpush.msra.mxu0 0.0
        %1044 = vmatpush.msra.mxu0 0.0
        %1045 = vmatpush.msra.mxu0 0.0
        %1046 = vmatpush.msra.mxu0 0.0
        %1047 = vmatpush.msra.mxu0 0.0
        %1048 = vmatpush.msra.mxu0 0.0
        %1049 = vmatpush.msra.mxu0 0.0
        %1050 = vmatpush.msra.mxu0 %v1033
        %1051 = vmatmul.f32.gmra.mxu0 %v841
        %v1052 = vpop.f32.mrf.mxu0
        %v1053 = vadd.f32 %v649, %v1052
        %1054 = vmatmul.f32.gmra.mxu0 %v844
        %v1055 = vpop.f32.mrf.mxu0
        %v1056 = vadd.f32 %v652, %v1055
        %1057 = vmatmul.f32.gmra.mxu0 %v847
        %v1058 = vpop.f32.mrf.mxu0
        %v1059 = vadd.f32 %v655, %v1058
        %1060 = vmatmul.f32.gmra.mxu0 %v850
        %v1061 = vpop.f32.mrf.mxu0
        %v1062 = vadd.f32 %v658, %v1061
        %1063 = vmatmul.f32.gmra.mxu0 %v853
        %v1064 = vpop.f32.mrf.mxu0
        %v1065 = vadd.f32 %v661, %v1064
        %1066 = vmatmul.f32.gmra.mxu0 %v856
        %v1067 = vpop.f32.mrf.mxu0
        %v1068 = vadd.f32 %v664, %v1067
        %1069 = vmatmul.f32.gmra.mxu0 %v859
        %v1070 = vpop.f32.mrf.mxu0
        %v1071 = vadd.f32 %v667, %v1070
        %1072 = vmatmul.f32.gmra.mxu0 %v862
        %v1073 = vpop.f32.mrf.mxu0
        %v1074 = vadd.f32 %v670, %v1073
        %1075 = vmatmul.f32.gmra.mxu0 %v865
        %v1076 = vpop.f32.mrf.mxu0
        %v1077 = vadd.f32 %v673, %v1076
        %1078 = vmatmul.f32.gmra.mxu0 %v868
        %v1079 = vpop.f32.mrf.mxu0
        %v1080 = vadd.f32 %v676, %v1079
        %1081 = vmatmul.f32.gmra.mxu0 %v871
        %v1082 = vpop.f32.mrf.mxu0
        %v1083 = vadd.f32 %v679, %v1082
        %1084 = vmatmul.f32.gmra.mxu0 %v874
        %v1085 = vpop.f32.mrf.mxu0
        %v1086 = vadd.f32 %v682, %v1085
        %1087 = vmatmul.f32.gmra.mxu0 %v877
        %v1088 = vpop.f32.mrf.mxu0
        %v1089 = vadd.f32 %v685, %v1088
        %1090 = vmatmul.f32.gmra.mxu0 %v880
        %v1091 = vpop.f32.mrf.mxu0
        %v1092 = vadd.f32 %v688, %v1091
        %1093 = vmatmul.f32.gmra.mxu0 %v883
        %v1094 = vpop.f32.mrf.mxu0
        %v1095 = vadd.f32 %v691, %v1094
        %1096 = vmatmul.f32.gmra.mxu0 %v886
        %v1097 = vpop.f32.mrf.mxu0
        %v1098 = vadd.f32 %v694, %v1097
        %1099 = vmatmul.f32.gmra.mxu0 %v889
        %v1100 = vpop.f32.mrf.mxu0
        %v1101 = vadd.f32 %v697, %v1100
        %1102 = vmatmul.f32.gmra.mxu0 %v892
        %v1103 = vpop.f32.mrf.mxu0
        %v1104 = vadd.f32 %v700, %v1103
        %1105 = vmatmul.f32.gmra.mxu0 %v895
        %v1106 = vpop.f32.mrf.mxu0
        %v1107 = vadd.f32 %v703, %v1106
        %1108 = vmatmul.f32.gmra.mxu0 %v898
        %v1109 = vpop.f32.mrf.mxu0
        %v1110 = vadd.f32 %v706, %v1109
        %1111 = vmatmul.f32.gmra.mxu0 %v901
        %v1112 = vpop.f32.mrf.mxu0
        %v1113 = vadd.f32 %v709, %v1112
        %1114 = vmatmul.f32.gmra.mxu0 %v904
        %v1115 = vpop.f32.mrf.mxu0
        %v1116 = vadd.f32 %v712, %v1115
        %1117 = vmatmul.f32.gmra.mxu0 %v907
        %v1118 = vpop.f32.mrf.mxu0
        %v1119 = vadd.f32 %v715, %v1118
        %1120 = vmatmul.f32.gmra.mxu0 %v910
        %v1121 = vpop.f32.mrf.mxu0
        %v1122 = vadd.f32 %v718, %v1121
        %1123 = vmatmul.f32.gmra.mxu0 %v913
        %v1124 = vpop.f32.mrf.mxu0
        %v1125 = vadd.f32 %v721, %v1124
        %1126 = vmatmul.f32.gmra.mxu0 %v916
        %v1127 = vpop.f32.mrf.mxu0
        %v1128 = vadd.f32 %v724, %v1127
        %1129 = vmatmul.f32.gmra.mxu0 %v919
        %v1130 = vpop.f32.mrf.mxu0
        %v1131 = vadd.f32 %v727, %v1130
        %1132 = vmatmul.f32.gmra.mxu0 %v922
        %v1133 = vpop.f32.mrf.mxu0
        %v1134 = vadd.f32 %v730, %v1133
        %1135 = vmatmul.f32.gmra.mxu0 %v925
        %v1136 = vpop.f32.mrf.mxu0
        %v1137 = vadd.f32 %v733, %v1136
        %1138 = vmatmul.f32.gmra.mxu0 %v928
        %v1139 = vpop.f32.mrf.mxu0
        %v1140 = vadd.f32 %v736, %v1139
        %1141 = vmatmul.f32.gmra.mxu0 %v931
        %v1142 = vpop.f32.mrf.mxu0
        %v1143 = vadd.f32 %v739, %v1142
        %1144 = vmatmul.f32.gmra.mxu0 %v934
        %v1145 = vpop.f32.mrf.mxu0
        %v1146 = vadd.f32 %v742, %v1145
        %1147 = vmatmul.f32.gmra.mxu0 %v937
        %v1148 = vpop.f32.mrf.mxu0
        %v1149 = vadd.f32 %v745, %v1148
        %1150 = vmatmul.f32.gmra.mxu0 %v940
        %v1151 = vpop.f32.mrf.mxu0
        %v1152 = vadd.f32 %v748, %v1151
        %1153 = vmatmul.f32.gmra.mxu0 %v943
        %v1154 = vpop.f32.mrf.mxu0
        %v1155 = vadd.f32 %v751, %v1154
        %1156 = vmatmul.f32.gmra.mxu0 %v946
        %v1157 = vpop.f32.mrf.mxu0
        %v1158 = vadd.f32 %v754, %v1157
        %1159 = vmatmul.f32.gmra.mxu0 %v949
        %v1160 = vpop.f32.mrf.mxu0
        %v1161 = vadd.f32 %v757, %v1160
        %1162 = vmatmul.f32.gmra.mxu0 %v952
        %v1163 = vpop.f32.mrf.mxu0
        %v1164 = vadd.f32 %v760, %v1163
        %1165 = vmatmul.f32.gmra.mxu0 %v955
        %v1166 = vpop.f32.mrf.mxu0
        %v1167 = vadd.f32 %v763, %v1166
        %1168 = vmatmul.f32.gmra.mxu0 %v958
        %v1169 = vpop.f32.mrf.mxu0
        %v1170 = vadd.f32 %v766, %v1169
        %1171 = vmatmul.f32.gmra.mxu0 %v961
        %v1172 = vpop.f32.mrf.mxu0
        %v1173 = vadd.f32 %v769, %v1172
        %1174 = vmatmul.f32.gmra.mxu0 %v964
        %v1175 = vpop.f32.mrf.mxu0
        %v1176 = vadd.f32 %v772, %v1175
        %1177 = vmatmul.f32.gmra.mxu0 %v967
        %v1178 = vpop.f32.mrf.mxu0
        %v1179 = vadd.f32 %v775, %v1178
        %1180 = vmatmul.f32.gmra.mxu0 %v970
        %v1181 = vpop.f32.mrf.mxu0
        %v1182 = vadd.f32 %v778, %v1181
        %1183 = vmatmul.f32.gmra.mxu0 %v973
        %v1184 = vpop.f32.mrf.mxu0
        %v1185 = vadd.f32 %v781, %v1184
        %1186 = vmatmul.f32.gmra.mxu0 %v976
        %v1187 = vpop.f32.mrf.mxu0
        %v1188 = vadd.f32 %v784, %v1187
        %1189 = vmatmul.f32.gmra.mxu0 %v979
        %v1190 = vpop.f32.mrf.mxu0
        %v1191 = vadd.f32 %v787, %v1190
        %1192 = vmatmul.f32.gmra.mxu0 %v982
        %v1193 = vpop.f32.mrf.mxu0
        %v1194 = vadd.f32 %v790, %v1193
        %1195 = vmatmul.f32.gmra.mxu0 %v985
        %v1196 = vpop.f32.mrf.mxu0
        %v1197 = vadd.f32 %v793, %v1196
        %1198 = vmatmul.f32.gmra.mxu0 %v988
        %v1199 = vpop.f32.mrf.mxu0
        %v1200 = vadd.f32 %v796, %v1199
        %1201 = vmatmul.f32.gmra.mxu0 %v991
        %v1202 = vpop.f32.mrf.mxu0
        %v1203 = vadd.f32 %v799, %v1202
        %1204 = vmatmul.f32.gmra.mxu0 %v994
        %v1205 = vpop.f32.mrf.mxu0
        %v1206 = vadd.f32 %v802, %v1205
        %1207 = vmatmul.f32.gmra.mxu0 %v997
        %v1208 = vpop.f32.mrf.mxu0
        %v1209 = vadd.f32 %v805, %v1208
        %1210 = vmatmul.f32.gmra.mxu0 %v1000
        %v1211 = vpop.f32.mrf.mxu0
        %v1212 = vadd.f32 %v808, %v1211
        %1213 = vmatmul.f32.gmra.mxu0 %v1003
        %v1214 = vpop.f32.mrf.mxu0
        %v1215 = vadd.f32 %v811, %v1214
        %1216 = vmatmul.f32.gmra.mxu0 %v1006
        %v1217 = vpop.f32.mrf.mxu0
        %v1218 = vadd.f32 %v814, %v1217
        %1219 = vmatmul.f32.gmra.mxu0 %v1009
        %v1220 = vpop.f32.mrf.mxu0
        %v1221 = vadd.f32 %v817, %v1220
        %1222 = vmatmul.f32.gmra.mxu0 %v1012
        %v1223 = vpop.f32.mrf.mxu0
        %v1224 = vadd.f32 %v820, %v1223
        %1225 = vmatmul.f32.gmra.mxu0 %v1015
        %v1226 = vpop.f32.mrf.mxu0
        %v1227 = vadd.f32 %v823, %v1226
        %1228 = vmatmul.f32.gmra.mxu0 %v1018
        %v1229 = vpop.f32.mrf.mxu0
        %v1230 = vadd.f32 %v826, %v1229
        %1231 = vmatmul.f32.gmra.mxu0 %v1021
        %v1232 = vpop.f32.mrf.mxu0
        %v1233 = vadd.f32 %v829, %v1232
        %1234 = vmatmul.f32.gmra.mxu0 %v1024
        %v1235 = vpop.f32.mrf.mxu0
        %v1236 = vadd.f32 %v832, %v1235
        %1237 = vmatmul.f32.gmra.mxu0 %v1027
        %v1238 = vpop.f32.mrf.mxu0
        %v1239 = vadd.f32 %v835, %v1238
        %1240 = vmatmul.f32.gmra.mxu0 %v1030
        %v1241 = vpop.f32.mrf.mxu0
        %v1242 = vadd.f32 %v838, %v1241
        %1243 = vdwg.mxu0
        %s1244 = sadd.s32 %s299, 2
        %s1245 = scalar_lea.vmem %s0, %s1244
        %v1246 = vld [vmem:[%s1245] sm:$0xff]
        %v1247 = vld [vmem:[%s1245 + $0x8] sm:$0xff]
        %v1248 = vld [vmem:[%s1245 + $0x10] sm:$0xff]
        %v1249 = vld [vmem:[%s1245 + $0x18] sm:$0xff]
        %v1250 = vld [vmem:[%s1245 + $0x20] sm:$0xff]
        %v1251 = vld [vmem:[%s1245 + $0x28] sm:$0xff]
        %v1252 = vld [vmem:[%s1245 + $0x30] sm:$0xff]
        %v1253 = vld [vmem:[%s1245 + $0x38] sm:$0xff]
        %v1254 = vld [vmem:[%s1245 + $0x40] sm:$0xff]
        %v1255 = vld [vmem:[%s1245 + $0x48] sm:$0xff]
        %v1256 = vld [vmem:[%s1245 + $0x50] sm:$0xff]
        %v1257 = vld [vmem:[%s1245 + $0x58] sm:$0xff]
        %v1258 = vld [vmem:[%s1245 + $0x60] sm:$0xff]
        %v1259 = vld [vmem:[%s1245 + $0x68] sm:$0xff]
        %v1260 = vld [vmem:[%s1245 + $0x70] sm:$0xff]
        %v1261 = vld [vmem:[%s1245 + $0x78] sm:$0xff]
        %v1262 = vld [vmem:[%s1245 + $0x80] sm:$0xff]
        %v1263 = vld [vmem:[%s1245 + $0x88] sm:$0xff]
        %v1264 = vld [vmem:[%s1245 + $0x90] sm:$0xff]
        %v1265 = vld [vmem:[%s1245 + $0x98] sm:$0xff]
        %v1266 = vld [vmem:[%s1245 + $0xa0] sm:$0xff]
        %v1267 = vld [vmem:[%s1245 + $0xa8] sm:$0xff]
        %v1268 = vld [vmem:[%s1245 + $0xb0] sm:$0xff]
        %v1269 = vld [vmem:[%s1245 + $0xb8] sm:$0xff]
        %v1270 = vld [vmem:[%s1245 + $0xc0] sm:$0xff]
        %v1271 = vld [vmem:[%s1245 + $0xc8] sm:$0xff]
        %v1272 = vld [vmem:[%s1245 + $0xd0] sm:$0xff]
        %v1273 = vld [vmem:[%s1245 + $0xd8] sm:$0xff]
        %v1274 = vld [vmem:[%s1245 + $0xe0] sm:$0xff]
        %v1275 = vld [vmem:[%s1245 + $0xe8] sm:$0xff]
        %v1276 = vld [vmem:[%s1245 + $0xf0] sm:$0xff]
        %v1277 = vld [vmem:[%s1245 + $0xf8] sm:$0xff]
        %v1278 = vld [vmem:[%s1245 + $0x100] sm:$0xff]
        %v1279 = vld [vmem:[%s1245 + $0x108] sm:$0xff]
        %v1280 = vld [vmem:[%s1245 + $0x110] sm:$0xff]
        %v1281 = vld [vmem:[%s1245 + $0x118] sm:$0xff]
        %v1282 = vld [vmem:[%s1245 + $0x120] sm:$0xff]
        %v1283 = vld [vmem:[%s1245 + $0x128] sm:$0xff]
        %v1284 = vld [vmem:[%s1245 + $0x130] sm:$0xff]
        %v1285 = vld [vmem:[%s1245 + $0x138] sm:$0xff]
        %v1286 = vld [vmem:[%s1245 + $0x140] sm:$0xff]
        %v1287 = vld [vmem:[%s1245 + $0x148] sm:$0xff]
        %v1288 = vld [vmem:[%s1245 + $0x150] sm:$0xff]
        %v1289 = vld [vmem:[%s1245 + $0x158] sm:$0xff]
        %v1290 = vld [vmem:[%s1245 + $0x160] sm:$0xff]
        %v1291 = vld [vmem:[%s1245 + $0x168] sm:$0xff]
        %v1292 = vld [vmem:[%s1245 + $0x170] sm:$0xff]
        %v1293 = vld [vmem:[%s1245 + $0x178] sm:$0xff]
        %v1294 = vld [vmem:[%s1245 + $0x180] sm:$0xff]
        %v1295 = vld [vmem:[%s1245 + $0x188] sm:$0xff]
        %v1296 = vld [vmem:[%s1245 + $0x190] sm:$0xff]
        %v1297 = vld [vmem:[%s1245 + $0x198] sm:$0xff]
        %v1298 = vld [vmem:[%s1245 + $0x1a0] sm:$0xff]
        %v1299 = vld [vmem:[%s1245 + $0x1a8] sm:$0xff]
        %v1300 = vld [vmem:[%s1245 + $0x1b0] sm:$0xff]
        %v1301 = vld [vmem:[%s1245 + $0x1b8] sm:$0xff]
        %v1302 = vld [vmem:[%s1245 + $0x1c0] sm:$0xff]
        %v1303 = vld [vmem:[%s1245 + $0x1c8] sm:$0xff]
        %v1304 = vld [vmem:[%s1245 + $0x1d0] sm:$0xff]
        %v1305 = vld [vmem:[%s1245 + $0x1d8] sm:$0xff]
        %v1306 = vld [vmem:[%s1245 + $0x1e0] sm:$0xff]
        %v1307 = vld [vmem:[%s1245 + $0x1e8] sm:$0xff]
        %v1308 = vld [vmem:[%s1245 + $0x1f0] sm:$0xff]
        %v1309 = vld [vmem:[%s1245 + $0x1f8] sm:$0xff]
        %s1310 = scalar_lea.vmem %s1, 8
        %v1311 = vld [vmem:[%s1310] sm:$0xf]
        %v1313 = vsel %vm434, %v1246, 0
        %v1316 = vsel %vm434, %v1247, 0
        %v1319 = vsel %vm434, %v1248, 0
        %v1322 = vsel %vm434, %v1249, 0
        %v1325 = vsel %vm434, %v1250, 0
        %v1328 = vsel %vm434, %v1251, 0
        %v1331 = vsel %vm434, %v1252, 0
        %v1334 = vsel %vm434, %v1253, 0
        %v1337 = vsel %vm434, %v1254, 0
        %v1340 = vsel %vm434, %v1255, 0
        %v1343 = vsel %vm434, %v1256, 0
        %v1346 = vsel %vm434, %v1257, 0
        %v1349 = vsel %vm434, %v1258, 0
        %v1352 = vsel %vm434, %v1259, 0
        %v1355 = vsel %vm434, %v1260, 0
        %v1358 = vsel %vm434, %v1261, 0
        %v1361 = vsel %vm434, %v1262, 0
        %v1364 = vsel %vm434, %v1263, 0
        %v1367 = vsel %vm434, %v1264, 0
        %v1370 = vsel %vm434, %v1265, 0
        %v1373 = vsel %vm434, %v1266, 0
        %v1376 = vsel %vm434, %v1267, 0
        %v1379 = vsel %vm434, %v1268, 0
        %v1382 = vsel %vm434, %v1269, 0
        %v1385 = vsel %vm434, %v1270, 0
        %v1388 = vsel %vm434, %v1271, 0
        %v1391 = vsel %vm434, %v1272, 0
        %v1394 = vsel %vm434, %v1273, 0
        %v1397 = vsel %vm434, %v1274, 0
        %v1400 = vsel %vm434, %v1275, 0
        %v1403 = vsel %vm434, %v1276, 0
        %v1406 = vsel %vm434, %v1277, 0
        %v1409 = vsel %vm434, %v1278, 0
        %v1412 = vsel %vm434, %v1279, 0
        %v1415 = vsel %vm434, %v1280, 0
        %v1418 = vsel %vm434, %v1281, 0
        %v1421 = vsel %vm434, %v1282, 0
        %v1424 = vsel %vm434, %v1283, 0
        %v1427 = vsel %vm434, %v1284, 0
        %v1430 = vsel %vm434, %v1285, 0
        %v1433 = vsel %vm434, %v1286, 0
        %v1436 = vsel %vm434, %v1287, 0
        %v1439 = vsel %vm434, %v1288, 0
        %v1442 = vsel %vm434, %v1289, 0
        %v1445 = vsel %vm434, %v1290, 0
        %v1448 = vsel %vm434, %v1291, 0
        %v1451 = vsel %vm434, %v1292, 0
        %v1454 = vsel %vm434, %v1293, 0
        %v1457 = vsel %vm434, %v1294, 0
        %v1460 = vsel %vm434, %v1295, 0
        %v1463 = vsel %vm434, %v1296, 0
        %v1466 = vsel %vm434, %v1297, 0
        %v1469 = vsel %vm434, %v1298, 0
        %v1472 = vsel %vm434, %v1299, 0
        %v1475 = vsel %vm434, %v1300, 0
        %v1478 = vsel %vm434, %v1301, 0
        %v1481 = vsel %vm434, %v1302, 0
        %v1484 = vsel %vm434, %v1303, 0
        %v1487 = vsel %vm434, %v1304, 0
        %v1490 = vsel %vm434, %v1305, 0
        %v1493 = vsel %vm434, %v1306, 0
        %v1496 = vsel %vm434, %v1307, 0
        %v1499 = vsel %vm434, %v1308, 0
        %v1502 = vsel %vm434, %v1309, 0
        %v1505 = vsel %vm627, %v1311, 0
        %1507 = vmatpush.msra.mxu0 0.0
        %1508 = vmatpush.msra.mxu0 0.0
        %1509 = vmatpush.msra.mxu0 0.0
        %1510 = vmatpush.msra.mxu0 0.0
        %1511 = vmatpush.msra.mxu0 0.0
        %1512 = vmatpush.msra.mxu0 0.0
        %1513 = vmatpush.msra.mxu0 0.0
        %1514 = vmatpush.msra.mxu0 0.0
        %1515 = vmatpush.msra.mxu0 0.0
        %1516 = vmatpush.msra.mxu0 0.0
        %1517 = vmatpush.msra.mxu0 0.0
        %1518 = vmatpush.msra.mxu0 0.0
        %1519 = vmatpush.msra.mxu0 0.0
        %1520 = vmatpush.msra.mxu0 0.0
        %1521 = vmatpush.msra.mxu0 0.0
        %1522 = vmatpush.msra.mxu0 %v1505
        %1523 = vmatmul.f32.gmra.mxu0 %v1313
        %v1524 = vpop.f32.mrf.mxu0
        %v1525 = vadd.f32 0.0, %v1524
        %1526 = vmatmul.f32.gmra.mxu0 %v1316
        %v1527 = vpop.f32.mrf.mxu0
        %v1528 = vadd.f32 0.0, %v1527
        %1529 = vmatmul.f32.gmra.mxu0 %v1319
        %v1530 = vpop.f32.mrf.mxu0
        %v1531 = vadd.f32 0.0, %v1530
        %1532 = vmatmul.f32.gmra.mxu0 %v1322
        %v1533 = vpop.f32.mrf.mxu0
        %v1534 = vadd.f32 0.0, %v1533
        %1535 = vmatmul.f32.gmra.mxu0 %v1325
        %v1536 = vpop.f32.mrf.mxu0
        %v1537 = vadd.f32 0.0, %v1536
        %1538 = vmatmul.f32.gmra.mxu0 %v1328
        %v1539 = vpop.f32.mrf.mxu0
        %v1540 = vadd.f32 0.0, %v1539
        %1541 = vmatmul.f32.gmra.mxu0 %v1331
        %v1542 = vpop.f32.mrf.mxu0
        %v1543 = vadd.f32 0.0, %v1542
        %1544 = vmatmul.f32.gmra.mxu0 %v1334
        %v1545 = vpop.f32.mrf.mxu0
        %v1546 = vadd.f32 0.0, %v1545
        %1547 = vmatmul.f32.gmra.mxu0 %v1337
        %v1548 = vpop.f32.mrf.mxu0
        %v1549 = vadd.f32 0.0, %v1548
        %1550 = vmatmul.f32.gmra.mxu0 %v1340
        %v1551 = vpop.f32.mrf.mxu0
        %v1552 = vadd.f32 0.0, %v1551
        %1553 = vmatmul.f32.gmra.mxu0 %v1343
        %v1554 = vpop.f32.mrf.mxu0
        %v1555 = vadd.f32 0.0, %v1554
        %1556 = vmatmul.f32.gmra.mxu0 %v1346
        %v1557 = vpop.f32.mrf.mxu0
        %v1558 = vadd.f32 0.0, %v1557
        %1559 = vmatmul.f32.gmra.mxu0 %v1349
        %v1560 = vpop.f32.mrf.mxu0
        %v1561 = vadd.f32 0.0, %v1560
        %1562 = vmatmul.f32.gmra.mxu0 %v1352
        %v1563 = vpop.f32.mrf.mxu0
        %v1564 = vadd.f32 0.0, %v1563
        %1565 = vmatmul.f32.gmra.mxu0 %v1355
        %v1566 = vpop.f32.mrf.mxu0
        %v1567 = vadd.f32 0.0, %v1566
        %1568 = vmatmul.f32.gmra.mxu0 %v1358
        %v1569 = vpop.f32.mrf.mxu0
        %v1570 = vadd.f32 0.0, %v1569
        %1571 = vmatmul.f32.gmra.mxu0 %v1361
        %v1572 = vpop.f32.mrf.mxu0
        %v1573 = vadd.f32 0.0, %v1572
        %1574 = vmatmul.f32.gmra.mxu0 %v1364
        %v1575 = vpop.f32.mrf.mxu0
        %v1576 = vadd.f32 0.0, %v1575
        %1577 = vmatmul.f32.gmra.mxu0 %v1367
        %v1578 = vpop.f32.mrf.mxu0
        %v1579 = vadd.f32 0.0, %v1578
        %1580 = vmatmul.f32.gmra.mxu0 %v1370
        %v1581 = vpop.f32.mrf.mxu0
        %v1582 = vadd.f32 0.0, %v1581
        %1583 = vmatmul.f32.gmra.mxu0 %v1373
        %v1584 = vpop.f32.mrf.mxu0
        %v1585 = vadd.f32 0.0, %v1584
        %1586 = vmatmul.f32.gmra.mxu0 %v1376
        %v1587 = vpop.f32.mrf.mxu0
        %v1588 = vadd.f32 0.0, %v1587
        %1589 = vmatmul.f32.gmra.mxu0 %v1379
        %v1590 = vpop.f32.mrf.mxu0
        %v1591 = vadd.f32 0.0, %v1590
        %1592 = vmatmul.f32.gmra.mxu0 %v1382
        %v1593 = vpop.f32.mrf.mxu0
        %v1594 = vadd.f32 0.0, %v1593
        %1595 = vmatmul.f32.gmra.mxu0 %v1385
        %v1596 = vpop.f32.mrf.mxu0
        %v1597 = vadd.f32 0.0, %v1596
        %1598 = vmatmul.f32.gmra.mxu0 %v1388
        %v1599 = vpop.f32.mrf.mxu0
        %v1600 = vadd.f32 0.0, %v1599
        %1601 = vmatmul.f32.gmra.mxu0 %v1391
        %v1602 = vpop.f32.mrf.mxu0
        %v1603 = vadd.f32 0.0, %v1602
        %1604 = vmatmul.f32.gmra.mxu0 %v1394
        %v1605 = vpop.f32.mrf.mxu0
        %v1606 = vadd.f32 0.0, %v1605
        %1607 = vmatmul.f32.gmra.mxu0 %v1397
        %v1608 = vpop.f32.mrf.mxu0
        %v1609 = vadd.f32 0.0, %v1608
        %1610 = vmatmul.f32.gmra.mxu0 %v1400
        %v1611 = vpop.f32.mrf.mxu0
        %v1612 = vadd.f32 0.0, %v1611
        %1613 = vmatmul.f32.gmra.mxu0 %v1403
        %v1614 = vpop.f32.mrf.mxu0
        %v1615 = vadd.f32 0.0, %v1614
        %1616 = vmatmul.f32.gmra.mxu0 %v1406
        %v1617 = vpop.f32.mrf.mxu0
        %v1618 = vadd.f32 0.0, %v1617
        %1619 = vmatmul.f32.gmra.mxu0 %v1409
        %v1620 = vpop.f32.mrf.mxu0
        %v1621 = vadd.f32 0.0, %v1620
        %1622 = vmatmul.f32.gmra.mxu0 %v1412
        %v1623 = vpop.f32.mrf.mxu0
        %v1624 = vadd.f32 0.0, %v1623
        %1625 = vmatmul.f32.gmra.mxu0 %v1415
        %v1626 = vpop.f32.mrf.mxu0
        %v1627 = vadd.f32 0.0, %v1626
        %1628 = vmatmul.f32.gmra.mxu0 %v1418
        %v1629 = vpop.f32.mrf.mxu0
        %v1630 = vadd.f32 0.0, %v1629
        %1631 = vmatmul.f32.gmra.mxu0 %v1421
        %v1632 = vpop.f32.mrf.mxu0
        %v1633 = vadd.f32 0.0, %v1632
        %1634 = vmatmul.f32.gmra.mxu0 %v1424
        %v1635 = vpop.f32.mrf.mxu0
        %v1636 = vadd.f32 0.0, %v1635
        %1637 = vmatmul.f32.gmra.mxu0 %v1427
        %v1638 = vpop.f32.mrf.mxu0
        %v1639 = vadd.f32 0.0, %v1638
        %1640 = vmatmul.f32.gmra.mxu0 %v1430
        %v1641 = vpop.f32.mrf.mxu0
        %v1642 = vadd.f32 0.0, %v1641
        %1643 = vmatmul.f32.gmra.mxu0 %v1433
        %v1644 = vpop.f32.mrf.mxu0
        %v1645 = vadd.f32 0.0, %v1644
        %1646 = vmatmul.f32.gmra.mxu0 %v1436
        %v1647 = vpop.f32.mrf.mxu0
        %v1648 = vadd.f32 0.0, %v1647
        %1649 = vmatmul.f32.gmra.mxu0 %v1439
        %v1650 = vpop.f32.mrf.mxu0
        %v1651 = vadd.f32 0.0, %v1650
        %1652 = vmatmul.f32.gmra.mxu0 %v1442
        %v1653 = vpop.f32.mrf.mxu0
        %v1654 = vadd.f32 0.0, %v1653
        %1655 = vmatmul.f32.gmra.mxu0 %v1445
        %v1656 = vpop.f32.mrf.mxu0
        %v1657 = vadd.f32 0.0, %v1656
        %1658 = vmatmul.f32.gmra.mxu0 %v1448
        %v1659 = vpop.f32.mrf.mxu0
        %v1660 = vadd.f32 0.0, %v1659
        %1661 = vmatmul.f32.gmra.mxu0 %v1451
        %v1662 = vpop.f32.mrf.mxu0
        %v1663 = vadd.f32 0.0, %v1662
        %1664 = vmatmul.f32.gmra.mxu0 %v1454
        %v1665 = vpop.f32.mrf.mxu0
        %v1666 = vadd.f32 0.0, %v1665
        %1667 = vmatmul.f32.gmra.mxu0 %v1457
        %v1668 = vpop.f32.mrf.mxu0
        %v1669 = vadd.f32 0.0, %v1668
        %1670 = vmatmul.f32.gmra.mxu0 %v1460
        %v1671 = vpop.f32.mrf.mxu0
        %v1672 = vadd.f32 0.0, %v1671
        %1673 = vmatmul.f32.gmra.mxu0 %v1463
        %v1674 = vpop.f32.mrf.mxu0
        %v1675 = vadd.f32 0.0, %v1674
        %1676 = vmatmul.f32.gmra.mxu0 %v1466
        %v1677 = vpop.f32.mrf.mxu0
        %v1678 = vadd.f32 0.0, %v1677
        %1679 = vmatmul.f32.gmra.mxu0 %v1469
        %v1680 = vpop.f32.mrf.mxu0
        %v1681 = vadd.f32 0.0, %v1680
        %1682 = vmatmul.f32.gmra.mxu0 %v1472
        %v1683 = vpop.f32.mrf.mxu0
        %v1684 = vadd.f32 0.0, %v1683
        %1685 = vmatmul.f32.gmra.mxu0 %v1475
        %v1686 = vpop.f32.mrf.mxu0
        %v1687 = vadd.f32 0.0, %v1686
        %1688 = vmatmul.f32.gmra.mxu0 %v1478
        %v1689 = vpop.f32.mrf.mxu0
        %v1690 = vadd.f32 0.0, %v1689
        %1691 = vmatmul.f32.gmra.mxu0 %v1481
        %v1692 = vpop.f32.mrf.mxu0
        %v1693 = vadd.f32 0.0, %v1692
        %1694 = vmatmul.f32.gmra.mxu0 %v1484
        %v1695 = vpop.f32.mrf.mxu0
        %v1696 = vadd.f32 0.0, %v1695
        %1697 = vmatmul.f32.gmra.mxu0 %v1487
        %v1698 = vpop.f32.mrf.mxu0
        %v1699 = vadd.f32 0.0, %v1698
        %1700 = vmatmul.f32.gmra.mxu0 %v1490
        %v1701 = vpop.f32.mrf.mxu0
        %v1702 = vadd.f32 0.0, %v1701
        %1703 = vmatmul.f32.gmra.mxu0 %v1493
        %v1704 = vpop.f32.mrf.mxu0
        %v1705 = vadd.f32 0.0, %v1704
        %1706 = vmatmul.f32.gmra.mxu0 %v1496
        %v1707 = vpop.f32.mrf.mxu0
        %v1708 = vadd.f32 0.0, %v1707
        %1709 = vmatmul.f32.gmra.mxu0 %v1499
        %v1710 = vpop.f32.mrf.mxu0
        %v1711 = vadd.f32 0.0, %v1710
        %1712 = vmatmul.f32.gmra.mxu0 %v1502
        %v1713 = vpop.f32.mrf.mxu0
        %v1714 = vadd.f32 0.0, %v1713
        %1715 = vdwg.mxu0
        %v1716 = vadd.f32 %v1053, %v1525
        %v1717 = vadd.f32 %v1056, %v1528
        %v1718 = vadd.f32 %v1059, %v1531
        %v1719 = vadd.f32 %v1062, %v1534
        %v1720 = vadd.f32 %v1065, %v1537
        %v1721 = vadd.f32 %v1068, %v1540
        %v1722 = vadd.f32 %v1071, %v1543
        %v1723 = vadd.f32 %v1074, %v1546
        %v1724 = vadd.f32 %v1077, %v1549
        %v1725 = vadd.f32 %v1080, %v1552
        %v1726 = vadd.f32 %v1083, %v1555
        %v1727 = vadd.f32 %v1086, %v1558
        %v1728 = vadd.f32 %v1089, %v1561
        %v1729 = vadd.f32 %v1092, %v1564
        %v1730 = vadd.f32 %v1095, %v1567
        %v1731 = vadd.f32 %v1098, %v1570
        %v1732 = vadd.f32 %v1101, %v1573
        %v1733 = vadd.f32 %v1104, %v1576
        %v1734 = vadd.f32 %v1107, %v1579
        %v1735 = vadd.f32 %v1110, %v1582
        %v1736 = vadd.f32 %v1113, %v1585
        %v1737 = vadd.f32 %v1116, %v1588
        %v1738 = vadd.f32 %v1119, %v1591
        %v1739 = vadd.f32 %v1122, %v1594
        %v1740 = vadd.f32 %v1125, %v1597
        %v1741 = vadd.f32 %v1128, %v1600
        %v1742 = vadd.f32 %v1131, %v1603
        %v1743 = vadd.f32 %v1134, %v1606
        %v1744 = vadd.f32 %v1137, %v1609
        %v1745 = vadd.f32 %v1140, %v1612
        %v1746 = vadd.f32 %v1143, %v1615
        %v1747 = vadd.f32 %v1146, %v1618
        %v1748 = vadd.f32 %v1149, %v1621
        %v1749 = vadd.f32 %v1152, %v1624
        %v1750 = vadd.f32 %v1155, %v1627
        %v1751 = vadd.f32 %v1158, %v1630
        %v1752 = vadd.f32 %v1161, %v1633
        %v1753 = vadd.f32 %v1164, %v1636
        %v1754 = vadd.f32 %v1167, %v1639
        %v1755 = vadd.f32 %v1170, %v1642
        %v1756 = vadd.f32 %v1173, %v1645
        %v1757 = vadd.f32 %v1176, %v1648
        %v1758 = vadd.f32 %v1179, %v1651
        %v1759 = vadd.f32 %v1182, %v1654
        %v1760 = vadd.f32 %v1185, %v1657
        %v1761 = vadd.f32 %v1188, %v1660
        %v1762 = vadd.f32 %v1191, %v1663
        %v1763 = vadd.f32 %v1194, %v1666
        %v1764 = vadd.f32 %v1197, %v1669
        %v1765 = vadd.f32 %v1200, %v1672
        %v1766 = vadd.f32 %v1203, %v1675
        %v1767 = vadd.f32 %v1206, %v1678
        %v1768 = vadd.f32 %v1209, %v1681
        %v1769 = vadd.f32 %v1212, %v1684
        %v1770 = vadd.f32 %v1215, %v1687
        %v1771 = vadd.f32 %v1218, %v1690
        %v1772 = vadd.f32 %v1221, %v1693
        %v1773 = vadd.f32 %v1224, %v1696
        %v1774 = vadd.f32 %v1227, %v1699
        %v1775 = vadd.f32 %v1230, %v1702
        %v1776 = vadd.f32 %v1233, %v1705
        %v1777 = vadd.f32 %v1236, %v1708
        %v1778 = vadd.f32 %v1239, %v1711
        %v1779 = vadd.f32 %v1242, %v1714
        %s1780 = sadd.s32 %s299, 18
        %s1781 = scalar_lea.vmem %s0, %s1780
        %v1782 = vld [vmem:[%s1781] sm:$0xff]
        %v1783 = vld [vmem:[%s1781 + $0x8] sm:$0xff]
        %v1784 = vld [vmem:[%s1781 + $0x10] sm:$0xff]
        %v1785 = vld [vmem:[%s1781 + $0x18] sm:$0xff]
        %v1786 = vld [vmem:[%s1781 + $0x20] sm:$0xff]
        %v1787 = vld [vmem:[%s1781 + $0x28] sm:$0xff]
        %v1788 = vld [vmem:[%s1781 + $0x30] sm:$0xff]
        %v1789 = vld [vmem:[%s1781 + $0x38] sm:$0xff]
        %v1790 = vld [vmem:[%s1781 + $0x40] sm:$0xff]
        %v1791 = vld [vmem:[%s1781 + $0x48] sm:$0xff]
        %v1792 = vld [vmem:[%s1781 + $0x50] sm:$0xff]
        %v1793 = vld [vmem:[%s1781 + $0x58] sm:$0xff]
        %v1794 = vld [vmem:[%s1781 + $0x60] sm:$0xff]
        %v1795 = vld [vmem:[%s1781 + $0x68] sm:$0xff]
        %v1796 = vld [vmem:[%s1781 + $0x70] sm:$0xff]
        %v1797 = vld [vmem:[%s1781 + $0x78] sm:$0xff]
        %v1798 = vld [vmem:[%s1781 + $0x80] sm:$0xff]
        %v1799 = vld [vmem:[%s1781 + $0x88] sm:$0xff]
        %v1800 = vld [vmem:[%s1781 + $0x90] sm:$0xff]
        %v1801 = vld [vmem:[%s1781 + $0x98] sm:$0xff]
        %v1802 = vld [vmem:[%s1781 + $0xa0] sm:$0xff]
        %v1803 = vld [vmem:[%s1781 + $0xa8] sm:$0xff]
        %v1804 = vld [vmem:[%s1781 + $0xb0] sm:$0xff]
        %v1805 = vld [vmem:[%s1781 + $0xb8] sm:$0xff]
        %v1806 = vld [vmem:[%s1781 + $0xc0] sm:$0xff]
        %v1807 = vld [vmem:[%s1781 + $0xc8] sm:$0xff]
        %v1808 = vld [vmem:[%s1781 + $0xd0] sm:$0xff]
        %v1809 = vld [vmem:[%s1781 + $0xd8] sm:$0xff]
        %v1810 = vld [vmem:[%s1781 + $0xe0] sm:$0xff]
        %v1811 = vld [vmem:[%s1781 + $0xe8] sm:$0xff]
        %v1812 = vld [vmem:[%s1781 + $0xf0] sm:$0xff]
        %v1813 = vld [vmem:[%s1781 + $0xf8] sm:$0xff]
        %v1814 = vld [vmem:[%s1781 + $0x100] sm:$0xff]
        %v1815 = vld [vmem:[%s1781 + $0x108] sm:$0xff]
        %v1816 = vld [vmem:[%s1781 + $0x110] sm:$0xff]
        %v1817 = vld [vmem:[%s1781 + $0x118] sm:$0xff]
        %v1818 = vld [vmem:[%s1781 + $0x120] sm:$0xff]
        %v1819 = vld [vmem:[%s1781 + $0x128] sm:$0xff]
        %v1820 = vld [vmem:[%s1781 + $0x130] sm:$0xff]
        %v1821 = vld [vmem:[%s1781 + $0x138] sm:$0xff]
        %v1822 = vld [vmem:[%s1781 + $0x140] sm:$0xff]
        %v1823 = vld [vmem:[%s1781 + $0x148] sm:$0xff]
        %v1824 = vld [vmem:[%s1781 + $0x150] sm:$0xff]
        %v1825 = vld [vmem:[%s1781 + $0x158] sm:$0xff]
        %v1826 = vld [vmem:[%s1781 + $0x160] sm:$0xff]
        %v1827 = vld [vmem:[%s1781 + $0x168] sm:$0xff]
        %v1828 = vld [vmem:[%s1781 + $0x170] sm:$0xff]
        %v1829 = vld [vmem:[%s1781 + $0x178] sm:$0xff]
        %v1830 = vld [vmem:[%s1781 + $0x180] sm:$0xff]
        %v1831 = vld [vmem:[%s1781 + $0x188] sm:$0xff]
        %v1832 = vld [vmem:[%s1781 + $0x190] sm:$0xff]
        %v1833 = vld [vmem:[%s1781 + $0x198] sm:$0xff]
        %v1834 = vld [vmem:[%s1781 + $0x1a0] sm:$0xff]
        %v1835 = vld [vmem:[%s1781 + $0x1a8] sm:$0xff]
        %v1836 = vld [vmem:[%s1781 + $0x1b0] sm:$0xff]
        %v1837 = vld [vmem:[%s1781 + $0x1b8] sm:$0xff]
        %v1838 = vld [vmem:[%s1781 + $0x1c0] sm:$0xff]
        %v1839 = vld [vmem:[%s1781 + $0x1c8] sm:$0xff]
        %v1840 = vld [vmem:[%s1781 + $0x1d0] sm:$0xff]
        %v1841 = vld [vmem:[%s1781 + $0x1d8] sm:$0xff]
        %v1842 = vld [vmem:[%s1781 + $0x1e0] sm:$0xff]
        %v1843 = vld [vmem:[%s1781 + $0x1e8] sm:$0xff]
        %v1844 = vld [vmem:[%s1781 + $0x1f0] sm:$0xff]
        %v1845 = vld [vmem:[%s1781 + $0x1f8] sm:$0xff]
        %s1846 = scalar_lea.vmem %s1, 12
        %v1847 = vld [vmem:[%s1846] sm:$0xf]
        %v1849 = vsel %vm434, %v1782, 0
        %v1852 = vsel %vm434, %v1783, 0
        %v1855 = vsel %vm434, %v1784, 0
        %v1858 = vsel %vm434, %v1785, 0
        %v1861 = vsel %vm434, %v1786, 0
        %v1864 = vsel %vm434, %v1787, 0
        %v1867 = vsel %vm434, %v1788, 0
        %v1870 = vsel %vm434, %v1789, 0
        %v1873 = vsel %vm434, %v1790, 0
        %v1876 = vsel %vm434, %v1791, 0
        %v1879 = vsel %vm434, %v1792, 0
        %v1882 = vsel %vm434, %v1793, 0
        %v1885 = vsel %vm434, %v1794, 0
        %v1888 = vsel %vm434, %v1795, 0
        %v1891 = vsel %vm434, %v1796, 0
        %v1894 = vsel %vm434, %v1797, 0
        %v1897 = vsel %vm434, %v1798, 0
        %v1900 = vsel %vm434, %v1799, 0
        %v1903 = vsel %vm434, %v1800, 0
        %v1906 = vsel %vm434, %v1801, 0
        %v1909 = vsel %vm434, %v1802, 0
        %v1912 = vsel %vm434, %v1803, 0
        %v1915 = vsel %vm434, %v1804, 0
        %v1918 = vsel %vm434, %v1805, 0
        %v1921 = vsel %vm434, %v1806, 0
        %v1924 = vsel %vm434, %v1807, 0
        %v1927 = vsel %vm434, %v1808, 0
        %v1930 = vsel %vm434, %v1809, 0
        %v1933 = vsel %vm434, %v1810, 0
        %v1936 = vsel %vm434, %v1811, 0
        %v1939 = vsel %vm434, %v1812, 0
        %v1942 = vsel %vm434, %v1813, 0
        %v1945 = vsel %vm434, %v1814, 0
        %v1948 = vsel %vm434, %v1815, 0
        %v1951 = vsel %vm434, %v1816, 0
        %v1954 = vsel %vm434, %v1817, 0
        %v1957 = vsel %vm434, %v1818, 0
        %v1960 = vsel %vm434, %v1819, 0
        %v1963 = vsel %vm434, %v1820, 0
        %v1966 = vsel %vm434, %v1821, 0
        %v1969 = vsel %vm434, %v1822, 0
        %v1972 = vsel %vm434, %v1823, 0
        %v1975 = vsel %vm434, %v1824, 0
        %v1978 = vsel %vm434, %v1825, 0
        %v1981 = vsel %vm434, %v1826, 0
        %v1984 = vsel %vm434, %v1827, 0
        %v1987 = vsel %vm434, %v1828, 0
        %v1990 = vsel %vm434, %v1829, 0
        %v1993 = vsel %vm434, %v1830, 0
        %v1996 = vsel %vm434, %v1831, 0
        %v1999 = vsel %vm434, %v1832, 0
        %v2002 = vsel %vm434, %v1833, 0
        %v2005 = vsel %vm434, %v1834, 0
        %v2008 = vsel %vm434, %v1835, 0
        %v2011 = vsel %vm434, %v1836, 0
        %v2014 = vsel %vm434, %v1837, 0
        %v2017 = vsel %vm434, %v1838, 0
        %v2020 = vsel %vm434, %v1839, 0
        %v2023 = vsel %vm434, %v1840, 0
        %v2026 = vsel %vm434, %v1841, 0
        %v2029 = vsel %vm434, %v1842, 0
        %v2032 = vsel %vm434, %v1843, 0
        %v2035 = vsel %vm434, %v1844, 0
        %v2038 = vsel %vm434, %v1845, 0
        %v2041 = vsel %vm627, %v1847, 0
        %2043 = vmatpush.msra.mxu0 0.0
        %2044 = vmatpush.msra.mxu0 0.0
        %2045 = vmatpush.msra.mxu0 0.0
        %2046 = vmatpush.msra.mxu0 0.0
        %2047 = vmatpush.msra.mxu0 0.0
        %2048 = vmatpush.msra.mxu0 0.0
        %2049 = vmatpush.msra.mxu0 0.0
        %2050 = vmatpush.msra.mxu0 0.0
        %2051 = vmatpush.msra.mxu0 0.0
        %2052 = vmatpush.msra.mxu0 0.0
        %2053 = vmatpush.msra.mxu0 0.0
        %2054 = vmatpush.msra.mxu0 0.0
        %2055 = vmatpush.msra.mxu0 0.0
        %2056 = vmatpush.msra.mxu0 0.0
        %2057 = vmatpush.msra.mxu0 0.0
        %2058 = vmatpush.msra.mxu0 %v2041
        %2059 = vmatmul.f32.gmra.mxu0 %v1849
        %v2060 = vpop.f32.mrf.mxu0
        %v2061 = vadd.f32 0.0, %v2060
        %2062 = vmatmul.f32.gmra.mxu0 %v1852
        %v2063 = vpop.f32.mrf.mxu0
        %v2064 = vadd.f32 0.0, %v2063
        %2065 = vmatmul.f32.gmra.mxu0 %v1855
        %v2066 = vpop.f32.mrf.mxu0
        %v2067 = vadd.f32 0.0, %v2066
        %2068 = vmatmul.f32.gmra.mxu0 %v1858
        %v2069 = vpop.f32.mrf.mxu0
        %v2070 = vadd.f32 0.0, %v2069
        %2071 = vmatmul.f32.gmra.mxu0 %v1861
        %v2072 = vpop.f32.mrf.mxu0
        %v2073 = vadd.f32 0.0, %v2072
        %2074 = vmatmul.f32.gmra.mxu0 %v1864
        %v2075 = vpop.f32.mrf.mxu0
        %v2076 = vadd.f32 0.0, %v2075
        %2077 = vmatmul.f32.gmra.mxu0 %v1867
        %v2078 = vpop.f32.mrf.mxu0
        %v2079 = vadd.f32 0.0, %v2078
        %2080 = vmatmul.f32.gmra.mxu0 %v1870
        %v2081 = vpop.f32.mrf.mxu0
        %v2082 = vadd.f32 0.0, %v2081
        %2083 = vmatmul.f32.gmra.mxu0 %v1873
        %v2084 = vpop.f32.mrf.mxu0
        %v2085 = vadd.f32 0.0, %v2084
        %2086 = vmatmul.f32.gmra.mxu0 %v1876
        %v2087 = vpop.f32.mrf.mxu0
        %v2088 = vadd.f32 0.0, %v2087
        %2089 = vmatmul.f32.gmra.mxu0 %v1879
        %v2090 = vpop.f32.mrf.mxu0
        %v2091 = vadd.f32 0.0, %v2090
        %2092 = vmatmul.f32.gmra.mxu0 %v1882
        %v2093 = vpop.f32.mrf.mxu0
        %v2094 = vadd.f32 0.0, %v2093
        %2095 = vmatmul.f32.gmra.mxu0 %v1885
        %v2096 = vpop.f32.mrf.mxu0
        %v2097 = vadd.f32 0.0, %v2096
        %2098 = vmatmul.f32.gmra.mxu0 %v1888
        %v2099 = vpop.f32.mrf.mxu0
        %v2100 = vadd.f32 0.0, %v2099
        %2101 = vmatmul.f32.gmra.mxu0 %v1891
        %v2102 = vpop.f32.mrf.mxu0
        %v2103 = vadd.f32 0.0, %v2102
        %2104 = vmatmul.f32.gmra.mxu0 %v1894
        %v2105 = vpop.f32.mrf.mxu0
        %v2106 = vadd.f32 0.0, %v2105
        %2107 = vmatmul.f32.gmra.mxu0 %v1897
        %v2108 = vpop.f32.mrf.mxu0
        %v2109 = vadd.f32 0.0, %v2108
        %2110 = vmatmul.f32.gmra.mxu0 %v1900
        %v2111 = vpop.f32.mrf.mxu0
        %v2112 = vadd.f32 0.0, %v2111
        %2113 = vmatmul.f32.gmra.mxu0 %v1903
        %v2114 = vpop.f32.mrf.mxu0
        %v2115 = vadd.f32 0.0, %v2114
        %2116 = vmatmul.f32.gmra.mxu0 %v1906
        %v2117 = vpop.f32.mrf.mxu0
        %v2118 = vadd.f32 0.0, %v2117
        %2119 = vmatmul.f32.gmra.mxu0 %v1909
        %v2120 = vpop.f32.mrf.mxu0
        %v2121 = vadd.f32 0.0, %v2120
        %2122 = vmatmul.f32.gmra.mxu0 %v1912
        %v2123 = vpop.f32.mrf.mxu0
        %v2124 = vadd.f32 0.0, %v2123
        %2125 = vmatmul.f32.gmra.mxu0 %v1915
        %v2126 = vpop.f32.mrf.mxu0
        %v2127 = vadd.f32 0.0, %v2126
        %2128 = vmatmul.f32.gmra.mxu0 %v1918
        %v2129 = vpop.f32.mrf.mxu0
        %v2130 = vadd.f32 0.0, %v2129
        %2131 = vmatmul.f32.gmra.mxu0 %v1921
        %v2132 = vpop.f32.mrf.mxu0
        %v2133 = vadd.f32 0.0, %v2132
        %2134 = vmatmul.f32.gmra.mxu0 %v1924
        %v2135 = vpop.f32.mrf.mxu0
        %v2136 = vadd.f32 0.0, %v2135
        %2137 = vmatmul.f32.gmra.mxu0 %v1927
        %v2138 = vpop.f32.mrf.mxu0
        %v2139 = vadd.f32 0.0, %v2138
        %2140 = vmatmul.f32.gmra.mxu0 %v1930
        %v2141 = vpop.f32.mrf.mxu0
        %v2142 = vadd.f32 0.0, %v2141
        %2143 = vmatmul.f32.gmra.mxu0 %v1933
        %v2144 = vpop.f32.mrf.mxu0
        %v2145 = vadd.f32 0.0, %v2144
        %2146 = vmatmul.f32.gmra.mxu0 %v1936
        %v2147 = vpop.f32.mrf.mxu0
        %v2148 = vadd.f32 0.0, %v2147
        %2149 = vmatmul.f32.gmra.mxu0 %v1939
        %v2150 = vpop.f32.mrf.mxu0
        %v2151 = vadd.f32 0.0, %v2150
        %2152 = vmatmul.f32.gmra.mxu0 %v1942
        %v2153 = vpop.f32.mrf.mxu0
        %v2154 = vadd.f32 0.0, %v2153
        %2155 = vmatmul.f32.gmra.mxu0 %v1945
        %v2156 = vpop.f32.mrf.mxu0
        %v2157 = vadd.f32 0.0, %v2156
        %2158 = vmatmul.f32.gmra.mxu0 %v1948
        %v2159 = vpop.f32.mrf.mxu0
        %v2160 = vadd.f32 0.0, %v2159
        %2161 = vmatmul.f32.gmra.mxu0 %v1951
        %v2162 = vpop.f32.mrf.mxu0
        %v2163 = vadd.f32 0.0, %v2162
        %2164 = vmatmul.f32.gmra.mxu0 %v1954
        %v2165 = vpop.f32.mrf.mxu0
        %v2166 = vadd.f32 0.0, %v2165
        %2167 = vmatmul.f32.gmra.mxu0 %v1957
        %v2168 = vpop.f32.mrf.mxu0
        %v2169 = vadd.f32 0.0, %v2168
        %2170 = vmatmul.f32.gmra.mxu0 %v1960
        %v2171 = vpop.f32.mrf.mxu0
        %v2172 = vadd.f32 0.0, %v2171
        %2173 = vmatmul.f32.gmra.mxu0 %v1963
        %v2174 = vpop.f32.mrf.mxu0
        %v2175 = vadd.f32 0.0, %v2174
        %2176 = vmatmul.f32.gmra.mxu0 %v1966
        %v2177 = vpop.f32.mrf.mxu0
        %v2178 = vadd.f32 0.0, %v2177
        %2179 = vmatmul.f32.gmra.mxu0 %v1969
        %v2180 = vpop.f32.mrf.mxu0
        %v2181 = vadd.f32 0.0, %v2180
        %2182 = vmatmul.f32.gmra.mxu0 %v1972
        %v2183 = vpop.f32.mrf.mxu0
        %v2184 = vadd.f32 0.0, %v2183
        %2185 = vmatmul.f32.gmra.mxu0 %v1975
        %v2186 = vpop.f32.mrf.mxu0
        %v2187 = vadd.f32 0.0, %v2186
        %2188 = vmatmul.f32.gmra.mxu0 %v1978
        %v2189 = vpop.f32.mrf.mxu0
        %v2190 = vadd.f32 0.0, %v2189
        %2191 = vmatmul.f32.gmra.mxu0 %v1981
        %v2192 = vpop.f32.mrf.mxu0
        %v2193 = vadd.f32 0.0, %v2192
        %2194 = vmatmul.f32.gmra.mxu0 %v1984
        %v2195 = vpop.f32.mrf.mxu0
        %v2196 = vadd.f32 0.0, %v2195
        %2197 = vmatmul.f32.gmra.mxu0 %v1987
        %v2198 = vpop.f32.mrf.mxu0
        %v2199 = vadd.f32 0.0, %v2198
        %2200 = vmatmul.f32.gmra.mxu0 %v1990
        %v2201 = vpop.f32.mrf.mxu0
        %v2202 = vadd.f32 0.0, %v2201
        %2203 = vmatmul.f32.gmra.mxu0 %v1993
        %v2204 = vpop.f32.mrf.mxu0
        %v2205 = vadd.f32 0.0, %v2204
        %2206 = vmatmul.f32.gmra.mxu0 %v1996
        %v2207 = vpop.f32.mrf.mxu0
        %v2208 = vadd.f32 0.0, %v2207
        %2209 = vmatmul.f32.gmra.mxu0 %v1999
        %v2210 = vpop.f32.mrf.mxu0
        %v2211 = vadd.f32 0.0, %v2210
        %2212 = vmatmul.f32.gmra.mxu0 %v2002
        %v2213 = vpop.f32.mrf.mxu0
        %v2214 = vadd.f32 0.0, %v2213
        %2215 = vmatmul.f32.gmra.mxu0 %v2005
        %v2216 = vpop.f32.mrf.mxu0
        %v2217 = vadd.f32 0.0, %v2216
        %2218 = vmatmul.f32.gmra.mxu0 %v2008
        %v2219 = vpop.f32.mrf.mxu0
        %v2220 = vadd.f32 0.0, %v2219
        %2221 = vmatmul.f32.gmra.mxu0 %v2011
        %v2222 = vpop.f32.mrf.mxu0
        %v2223 = vadd.f32 0.0, %v2222
        %2224 = vmatmul.f32.gmra.mxu0 %v2014
        %v2225 = vpop.f32.mrf.mxu0
        %v2226 = vadd.f32 0.0, %v2225
        %2227 = vmatmul.f32.gmra.mxu0 %v2017
        %v2228 = vpop.f32.mrf.mxu0
        %v2229 = vadd.f32 0.0, %v2228
        %2230 = vmatmul.f32.gmra.mxu0 %v2020
        %v2231 = vpop.f32.mrf.mxu0
        %v2232 = vadd.f32 0.0, %v2231
        %2233 = vmatmul.f32.gmra.mxu0 %v2023
        %v2234 = vpop.f32.mrf.mxu0
        %v2235 = vadd.f32 0.0, %v2234
        %2236 = vmatmul.f32.gmra.mxu0 %v2026
        %v2237 = vpop.f32.mrf.mxu0
        %v2238 = vadd.f32 0.0, %v2237
        %2239 = vmatmul.f32.gmra.mxu0 %v2029
        %v2240 = vpop.f32.mrf.mxu0
        %v2241 = vadd.f32 0.0, %v2240
        %2242 = vmatmul.f32.gmra.mxu0 %v2032
        %v2243 = vpop.f32.mrf.mxu0
        %v2244 = vadd.f32 0.0, %v2243
        %2245 = vmatmul.f32.gmra.mxu0 %v2035
        %v2246 = vpop.f32.mrf.mxu0
        %v2247 = vadd.f32 0.0, %v2246
        %2248 = vmatmul.f32.gmra.mxu0 %v2038
        %v2249 = vpop.f32.mrf.mxu0
        %v2250 = vadd.f32 0.0, %v2249
        %2251 = vdwg.mxu0
        %v2252 = vadd.f32 %v1716, %v2061
        %v2253 = vadd.f32 %v1717, %v2064
        %v2254 = vadd.f32 %v1718, %v2067
        %v2255 = vadd.f32 %v1719, %v2070
        %v2256 = vadd.f32 %v1720, %v2073
        %v2257 = vadd.f32 %v1721, %v2076
        %v2258 = vadd.f32 %v1722, %v2079
        %v2259 = vadd.f32 %v1723, %v2082
        %v2260 = vadd.f32 %v1724, %v2085
        %v2261 = vadd.f32 %v1725, %v2088
        %v2262 = vadd.f32 %v1726, %v2091
        %v2263 = vadd.f32 %v1727, %v2094
        %v2264 = vadd.f32 %v1728, %v2097
        %v2265 = vadd.f32 %v1729, %v2100
        %v2266 = vadd.f32 %v1730, %v2103
        %v2267 = vadd.f32 %v1731, %v2106
        %v2268 = vadd.f32 %v1732, %v2109
        %v2269 = vadd.f32 %v1733, %v2112
        %v2270 = vadd.f32 %v1734, %v2115
        %v2271 = vadd.f32 %v1735, %v2118
        %v2272 = vadd.f32 %v1736, %v2121
        %v2273 = vadd.f32 %v1737, %v2124
        %v2274 = vadd.f32 %v1738, %v2127
        %v2275 = vadd.f32 %v1739, %v2130
        %v2276 = vadd.f32 %v1740, %v2133
        %v2277 = vadd.f32 %v1741, %v2136
        %v2278 = vadd.f32 %v1742, %v2139
        %v2279 = vadd.f32 %v1743, %v2142
        %v2280 = vadd.f32 %v1744, %v2145
        %v2281 = vadd.f32 %v1745, %v2148
        %v2282 = vadd.f32 %v1746, %v2151
        %v2283 = vadd.f32 %v1747, %v2154
        %v2284 = vadd.f32 %v1748, %v2157
        %v2285 = vadd.f32 %v1749, %v2160
        %v2286 = vadd.f32 %v1750, %v2163
        %v2287 = vadd.f32 %v1751, %v2166
        %v2288 = vadd.f32 %v1752, %v2169
        %v2289 = vadd.f32 %v1753, %v2172
        %v2290 = vadd.f32 %v1754, %v2175
        %v2291 = vadd.f32 %v1755, %v2178
        %v2292 = vadd.f32 %v1756, %v2181
        %v2293 = vadd.f32 %v1757, %v2184
        %v2294 = vadd.f32 %v1758, %v2187
        %v2295 = vadd.f32 %v1759, %v2190
        %v2296 = vadd.f32 %v1760, %v2193
        %v2297 = vadd.f32 %v1761, %v2196
        %v2298 = vadd.f32 %v1762, %v2199
        %v2299 = vadd.f32 %v1763, %v2202
        %v2300 = vadd.f32 %v1764, %v2205
        %v2301 = vadd.f32 %v1765, %v2208
        %v2302 = vadd.f32 %v1766, %v2211
        %v2303 = vadd.f32 %v1767, %v2214
        %v2304 = vadd.f32 %v1768, %v2217
        %v2305 = vadd.f32 %v1769, %v2220
        %v2306 = vadd.f32 %v1770, %v2223
        %v2307 = vadd.f32 %v1771, %v2226
        %v2308 = vadd.f32 %v1772, %v2229
        %v2309 = vadd.f32 %v1773, %v2232
        %v2310 = vadd.f32 %v1774, %v2235
        %v2311 = vadd.f32 %v1775, %v2238
        %v2312 = vadd.f32 %v1776, %v2241
        %v2313 = vadd.f32 %v1777, %v2244
        %v2314 = vadd.f32 %v1778, %v2247
        %v2315 = vadd.f32 %v1779, %v2250
        %s2316 = sadd.s32 %s299, 19
        %s2317 = scalar_lea.vmem %s0, %s2316
        %v2318 = vld [vmem:[%s2317] sm:$0xff]
        %v2319 = vld [vmem:[%s2317 + $0x8] sm:$0xff]
        %v2320 = vld [vmem:[%s2317 + $0x10] sm:$0xff]
        %v2321 = vld [vmem:[%s2317 + $0x18] sm:$0xff]
        %v2322 = vld [vmem:[%s2317 + $0x20] sm:$0xff]
        %v2323 = vld [vmem:[%s2317 + $0x28] sm:$0xff]
        %v2324 = vld [vmem:[%s2317 + $0x30] sm:$0xff]
        %v2325 = vld [vmem:[%s2317 + $0x38] sm:$0xff]
        %v2326 = vld [vmem:[%s2317 + $0x40] sm:$0xff]
        %v2327 = vld [vmem:[%s2317 + $0x48] sm:$0xff]
        %v2328 = vld [vmem:[%s2317 + $0x50] sm:$0xff]
        %v2329 = vld [vmem:[%s2317 + $0x58] sm:$0xff]
        %v2330 = vld [vmem:[%s2317 + $0x60] sm:$0xff]
        %v2331 = vld [vmem:[%s2317 + $0x68] sm:$0xff]
        %v2332 = vld [vmem:[%s2317 + $0x70] sm:$0xff]
        %v2333 = vld [vmem:[%s2317 + $0x78] sm:$0xff]
        %v2334 = vld [vmem:[%s2317 + $0x80] sm:$0xff]
        %v2335 = vld [vmem:[%s2317 + $0x88] sm:$0xff]
        %v2336 = vld [vmem:[%s2317 + $0x90] sm:$0xff]
        %v2337 = vld [vmem:[%s2317 + $0x98] sm:$0xff]
        %v2338 = vld [vmem:[%s2317 + $0xa0] sm:$0xff]
        %v2339 = vld [vmem:[%s2317 + $0xa8] sm:$0xff]
        %v2340 = vld [vmem:[%s2317 + $0xb0] sm:$0xff]
        %v2341 = vld [vmem:[%s2317 + $0xb8] sm:$0xff]
        %v2342 = vld [vmem:[%s2317 + $0xc0] sm:$0xff]
        %v2343 = vld [vmem:[%s2317 + $0xc8] sm:$0xff]
        %v2344 = vld [vmem:[%s2317 + $0xd0] sm:$0xff]
        %v2345 = vld [vmem:[%s2317 + $0xd8] sm:$0xff]
        %v2346 = vld [vmem:[%s2317 + $0xe0] sm:$0xff]
        %v2347 = vld [vmem:[%s2317 + $0xe8] sm:$0xff]
        %v2348 = vld [vmem:[%s2317 + $0xf0] sm:$0xff]
        %v2349 = vld [vmem:[%s2317 + $0xf8] sm:$0xff]
        %v2350 = vld [vmem:[%s2317 + $0x100] sm:$0xff]
        %v2351 = vld [vmem:[%s2317 + $0x108] sm:$0xff]
        %v2352 = vld [vmem:[%s2317 + $0x110] sm:$0xff]
        %v2353 = vld [vmem:[%s2317 + $0x118] sm:$0xff]
        %v2354 = vld [vmem:[%s2317 + $0x120] sm:$0xff]
        %v2355 = vld [vmem:[%s2317 + $0x128] sm:$0xff]
        %v2356 = vld [vmem:[%s2317 + $0x130] sm:$0xff]
        %v2357 = vld [vmem:[%s2317 + $0x138] sm:$0xff]
        %v2358 = vld [vmem:[%s2317 + $0x140] sm:$0xff]
        %v2359 = vld [vmem:[%s2317 + $0x148] sm:$0xff]
        %v2360 = vld [vmem:[%s2317 + $0x150] sm:$0xff]
        %v2361 = vld [vmem:[%s2317 + $0x158] sm:$0xff]
        %v2362 = vld [vmem:[%s2317 + $0x160] sm:$0xff]
        %v2363 = vld [vmem:[%s2317 + $0x168] sm:$0xff]
        %v2364 = vld [vmem:[%s2317 + $0x170] sm:$0xff]
        %v2365 = vld [vmem:[%s2317 + $0x178] sm:$0xff]
        %v2366 = vld [vmem:[%s2317 + $0x180] sm:$0xff]
        %v2367 = vld [vmem:[%s2317 + $0x188] sm:$0xff]
        %v2368 = vld [vmem:[%s2317 + $0x190] sm:$0xff]
        %v2369 = vld [vmem:[%s2317 + $0x198] sm:$0xff]
        %v2370 = vld [vmem:[%s2317 + $0x1a0] sm:$0xff]
        %v2371 = vld [vmem:[%s2317 + $0x1a8] sm:$0xff]
        %v2372 = vld [vmem:[%s2317 + $0x1b0] sm:$0xff]
        %v2373 = vld [vmem:[%s2317 + $0x1b8] sm:$0xff]
        %v2374 = vld [vmem:[%s2317 + $0x1c0] sm:$0xff]
        %v2375 = vld [vmem:[%s2317 + $0x1c8] sm:$0xff]
        %v2376 = vld [vmem:[%s2317 + $0x1d0] sm:$0xff]
        %v2377 = vld [vmem:[%s2317 + $0x1d8] sm:$0xff]
        %v2378 = vld [vmem:[%s2317 + $0x1e0] sm:$0xff]
        %v2379 = vld [vmem:[%s2317 + $0x1e8] sm:$0xff]
        %v2380 = vld [vmem:[%s2317 + $0x1f0] sm:$0xff]
        %v2381 = vld [vmem:[%s2317 + $0x1f8] sm:$0xff]
        %s2382 = scalar_lea.vmem %s1, 16
        %v2383 = vld [vmem:[%s2382] sm:$0xf]
        %v2385 = vsel %vm434, %v2318, 0
        %v2388 = vsel %vm434, %v2319, 0
        %v2391 = vsel %vm434, %v2320, 0
        %v2394 = vsel %vm434, %v2321, 0
        %v2397 = vsel %vm434, %v2322, 0
        %v2400 = vsel %vm434, %v2323, 0
        %v2403 = vsel %vm434, %v2324, 0
        %v2406 = vsel %vm434, %v2325, 0
        %v2409 = vsel %vm434, %v2326, 0
        %v2412 = vsel %vm434, %v2327, 0
        %v2415 = vsel %vm434, %v2328, 0
        %v2418 = vsel %vm434, %v2329, 0
        %v2421 = vsel %vm434, %v2330, 0
        %v2424 = vsel %vm434, %v2331, 0
        %v2427 = vsel %vm434, %v2332, 0
        %v2430 = vsel %vm434, %v2333, 0
        %v2433 = vsel %vm434, %v2334, 0
        %v2436 = vsel %vm434, %v2335, 0
        %v2439 = vsel %vm434, %v2336, 0
        %v2442 = vsel %vm434, %v2337, 0
        %v2445 = vsel %vm434, %v2338, 0
        %v2448 = vsel %vm434, %v2339, 0
        %v2451 = vsel %vm434, %v2340, 0
        %v2454 = vsel %vm434, %v2341, 0
        %v2457 = vsel %vm434, %v2342, 0
        %v2460 = vsel %vm434, %v2343, 0
        %v2463 = vsel %vm434, %v2344, 0
        %v2466 = vsel %vm434, %v2345, 0
        %v2469 = vsel %vm434, %v2346, 0
        %v2472 = vsel %vm434, %v2347, 0
        %v2475 = vsel %vm434, %v2348, 0
        %v2478 = vsel %vm434, %v2349, 0
        %v2481 = vsel %vm434, %v2350, 0
        %v2484 = vsel %vm434, %v2351, 0
        %v2487 = vsel %vm434, %v2352, 0
        %v2490 = vsel %vm434, %v2353, 0
        %v2493 = vsel %vm434, %v2354, 0
        %v2496 = vsel %vm434, %v2355, 0
        %v2499 = vsel %vm434, %v2356, 0
        %v2502 = vsel %vm434, %v2357, 0
        %v2505 = vsel %vm434, %v2358, 0
        %v2508 = vsel %vm434, %v2359, 0
        %v2511 = vsel %vm434, %v2360, 0
        %v2514 = vsel %vm434, %v2361, 0
        %v2517 = vsel %vm434, %v2362, 0
        %v2520 = vsel %vm434, %v2363, 0
        %v2523 = vsel %vm434, %v2364, 0
        %v2526 = vsel %vm434, %v2365, 0
        %v2529 = vsel %vm434, %v2366, 0
        %v2532 = vsel %vm434, %v2367, 0
        %v2535 = vsel %vm434, %v2368, 0
        %v2538 = vsel %vm434, %v2369, 0
        %v2541 = vsel %vm434, %v2370, 0
        %v2544 = vsel %vm434, %v2371, 0
        %v2547 = vsel %vm434, %v2372, 0
        %v2550 = vsel %vm434, %v2373, 0
        %v2553 = vsel %vm434, %v2374, 0
        %v2556 = vsel %vm434, %v2375, 0
        %v2559 = vsel %vm434, %v2376, 0
        %v2562 = vsel %vm434, %v2377, 0
        %v2565 = vsel %vm434, %v2378, 0
        %v2568 = vsel %vm434, %v2379, 0
        %v2571 = vsel %vm434, %v2380, 0
        %v2574 = vsel %vm434, %v2381, 0
        %v2577 = vsel %vm627, %v2383, 0
        %2579 = vmatpush.msra.mxu0 0.0
        %2580 = vmatpush.msra.mxu0 0.0
        %2581 = vmatpush.msra.mxu0 0.0
        %2582 = vmatpush.msra.mxu0 0.0
        %2583 = vmatpush.msra.mxu0 0.0
        %2584 = vmatpush.msra.mxu0 0.0
        %2585 = vmatpush.msra.mxu0 0.0
        %2586 = vmatpush.msra.mxu0 0.0
        %2587 = vmatpush.msra.mxu0 0.0
        %2588 = vmatpush.msra.mxu0 0.0
        %2589 = vmatpush.msra.mxu0 0.0
        %2590 = vmatpush.msra.mxu0 0.0
        %2591 = vmatpush.msra.mxu0 0.0
        %2592 = vmatpush.msra.mxu0 0.0
        %2593 = vmatpush.msra.mxu0 0.0
        %2594 = vmatpush.msra.mxu0 %v2577
        %2595 = vmatmul.f32.gmra.mxu0 %v2385
        %v2596 = vpop.f32.mrf.mxu0
        %v2597 = vadd.f32 0.0, %v2596
        %2598 = vmatmul.f32.gmra.mxu0 %v2388
        %v2599 = vpop.f32.mrf.mxu0
        %v2600 = vadd.f32 0.0, %v2599
        %2601 = vmatmul.f32.gmra.mxu0 %v2391
        %v2602 = vpop.f32.mrf.mxu0
        %v2603 = vadd.f32 0.0, %v2602
        %2604 = vmatmul.f32.gmra.mxu0 %v2394
        %v2605 = vpop.f32.mrf.mxu0
        %v2606 = vadd.f32 0.0, %v2605
        %2607 = vmatmul.f32.gmra.mxu0 %v2397
        %v2608 = vpop.f32.mrf.mxu0
        %v2609 = vadd.f32 0.0, %v2608
        %2610 = vmatmul.f32.gmra.mxu0 %v2400
        %v2611 = vpop.f32.mrf.mxu0
        %v2612 = vadd.f32 0.0, %v2611
        %2613 = vmatmul.f32.gmra.mxu0 %v2403
        %v2614 = vpop.f32.mrf.mxu0
        %v2615 = vadd.f32 0.0, %v2614
        %2616 = vmatmul.f32.gmra.mxu0 %v2406
        %v2617 = vpop.f32.mrf.mxu0
        %v2618 = vadd.f32 0.0, %v2617
        %2619 = vmatmul.f32.gmra.mxu0 %v2409
        %v2620 = vpop.f32.mrf.mxu0
        %v2621 = vadd.f32 0.0, %v2620
        %2622 = vmatmul.f32.gmra.mxu0 %v2412
        %v2623 = vpop.f32.mrf.mxu0
        %v2624 = vadd.f32 0.0, %v2623
        %2625 = vmatmul.f32.gmra.mxu0 %v2415
        %v2626 = vpop.f32.mrf.mxu0
        %v2627 = vadd.f32 0.0, %v2626
        %2628 = vmatmul.f32.gmra.mxu0 %v2418
        %v2629 = vpop.f32.mrf.mxu0
        %v2630 = vadd.f32 0.0, %v2629
        %2631 = vmatmul.f32.gmra.mxu0 %v2421
        %v2632 = vpop.f32.mrf.mxu0
        %v2633 = vadd.f32 0.0, %v2632
        %2634 = vmatmul.f32.gmra.mxu0 %v2424
        %v2635 = vpop.f32.mrf.mxu0
        %v2636 = vadd.f32 0.0, %v2635
        %2637 = vmatmul.f32.gmra.mxu0 %v2427
        %v2638 = vpop.f32.mrf.mxu0
        %v2639 = vadd.f32 0.0, %v2638
        %2640 = vmatmul.f32.gmra.mxu0 %v2430
        %v2641 = vpop.f32.mrf.mxu0
        %v2642 = vadd.f32 0.0, %v2641
        %2643 = vmatmul.f32.gmra.mxu0 %v2433
        %v2644 = vpop.f32.mrf.mxu0
        %v2645 = vadd.f32 0.0, %v2644
        %2646 = vmatmul.f32.gmra.mxu0 %v2436
        %v2647 = vpop.f32.mrf.mxu0
        %v2648 = vadd.f32 0.0, %v2647
        %2649 = vmatmul.f32.gmra.mxu0 %v2439
        %v2650 = vpop.f32.mrf.mxu0
        %v2651 = vadd.f32 0.0, %v2650
        %2652 = vmatmul.f32.gmra.mxu0 %v2442
        %v2653 = vpop.f32.mrf.mxu0
        %v2654 = vadd.f32 0.0, %v2653
        %2655 = vmatmul.f32.gmra.mxu0 %v2445
        %v2656 = vpop.f32.mrf.mxu0
        %v2657 = vadd.f32 0.0, %v2656
        %2658 = vmatmul.f32.gmra.mxu0 %v2448
        %v2659 = vpop.f32.mrf.mxu0
        %v2660 = vadd.f32 0.0, %v2659
        %2661 = vmatmul.f32.gmra.mxu0 %v2451
        %v2662 = vpop.f32.mrf.mxu0
        %v2663 = vadd.f32 0.0, %v2662
        %2664 = vmatmul.f32.gmra.mxu0 %v2454
        %v2665 = vpop.f32.mrf.mxu0
        %v2666 = vadd.f32 0.0, %v2665
        %2667 = vmatmul.f32.gmra.mxu0 %v2457
        %v2668 = vpop.f32.mrf.mxu0
        %v2669 = vadd.f32 0.0, %v2668
        %2670 = vmatmul.f32.gmra.mxu0 %v2460
        %v2671 = vpop.f32.mrf.mxu0
        %v2672 = vadd.f32 0.0, %v2671
        %2673 = vmatmul.f32.gmra.mxu0 %v2463
        %v2674 = vpop.f32.mrf.mxu0
        %v2675 = vadd.f32 0.0, %v2674
        %2676 = vmatmul.f32.gmra.mxu0 %v2466
        %v2677 = vpop.f32.mrf.mxu0
        %v2678 = vadd.f32 0.0, %v2677
        %2679 = vmatmul.f32.gmra.mxu0 %v2469
        %v2680 = vpop.f32.mrf.mxu0
        %v2681 = vadd.f32 0.0, %v2680
        %2682 = vmatmul.f32.gmra.mxu0 %v2472
        %v2683 = vpop.f32.mrf.mxu0
        %v2684 = vadd.f32 0.0, %v2683
        %2685 = vmatmul.f32.gmra.mxu0 %v2475
        %v2686 = vpop.f32.mrf.mxu0
        %v2687 = vadd.f32 0.0, %v2686
        %2688 = vmatmul.f32.gmra.mxu0 %v2478
        %v2689 = vpop.f32.mrf.mxu0
        %v2690 = vadd.f32 0.0, %v2689
        %2691 = vmatmul.f32.gmra.mxu0 %v2481
        %v2692 = vpop.f32.mrf.mxu0
        %v2693 = vadd.f32 0.0, %v2692
        %2694 = vmatmul.f32.gmra.mxu0 %v2484
        %v2695 = vpop.f32.mrf.mxu0
        %v2696 = vadd.f32 0.0, %v2695
        %2697 = vmatmul.f32.gmra.mxu0 %v2487
        %v2698 = vpop.f32.mrf.mxu0
        %v2699 = vadd.f32 0.0, %v2698
        %2700 = vmatmul.f32.gmra.mxu0 %v2490
        %v2701 = vpop.f32.mrf.mxu0
        %v2702 = vadd.f32 0.0, %v2701
        %2703 = vmatmul.f32.gmra.mxu0 %v2493
        %v2704 = vpop.f32.mrf.mxu0
        %v2705 = vadd.f32 0.0, %v2704
        %2706 = vmatmul.f32.gmra.mxu0 %v2496
        %v2707 = vpop.f32.mrf.mxu0
        %v2708 = vadd.f32 0.0, %v2707
        %2709 = vmatmul.f32.gmra.mxu0 %v2499
        %v2710 = vpop.f32.mrf.mxu0
        %v2711 = vadd.f32 0.0, %v2710
        %2712 = vmatmul.f32.gmra.mxu0 %v2502
        %v2713 = vpop.f32.mrf.mxu0
        %v2714 = vadd.f32 0.0, %v2713
        %2715 = vmatmul.f32.gmra.mxu0 %v2505
        %v2716 = vpop.f32.mrf.mxu0
        %v2717 = vadd.f32 0.0, %v2716
        %2718 = vmatmul.f32.gmra.mxu0 %v2508
        %v2719 = vpop.f32.mrf.mxu0
        %v2720 = vadd.f32 0.0, %v2719
        %2721 = vmatmul.f32.gmra.mxu0 %v2511
        %v2722 = vpop.f32.mrf.mxu0
        %v2723 = vadd.f32 0.0, %v2722
        %2724 = vmatmul.f32.gmra.mxu0 %v2514
        %v2725 = vpop.f32.mrf.mxu0
        %v2726 = vadd.f32 0.0, %v2725
        %2727 = vmatmul.f32.gmra.mxu0 %v2517
        %v2728 = vpop.f32.mrf.mxu0
        %v2729 = vadd.f32 0.0, %v2728
        %2730 = vmatmul.f32.gmra.mxu0 %v2520
        %v2731 = vpop.f32.mrf.mxu0
        %v2732 = vadd.f32 0.0, %v2731
        %2733 = vmatmul.f32.gmra.mxu0 %v2523
        %v2734 = vpop.f32.mrf.mxu0
        %v2735 = vadd.f32 0.0, %v2734
        %2736 = vmatmul.f32.gmra.mxu0 %v2526
        %v2737 = vpop.f32.mrf.mxu0
        %v2738 = vadd.f32 0.0, %v2737
        %2739 = vmatmul.f32.gmra.mxu0 %v2529
        %v2740 = vpop.f32.mrf.mxu0
        %v2741 = vadd.f32 0.0, %v2740
        %2742 = vmatmul.f32.gmra.mxu0 %v2532
        %v2743 = vpop.f32.mrf.mxu0
        %v2744 = vadd.f32 0.0, %v2743
        %2745 = vmatmul.f32.gmra.mxu0 %v2535
        %v2746 = vpop.f32.mrf.mxu0
        %v2747 = vadd.f32 0.0, %v2746
        %2748 = vmatmul.f32.gmra.mxu0 %v2538
        %v2749 = vpop.f32.mrf.mxu0
        %v2750 = vadd.f32 0.0, %v2749
        %2751 = vmatmul.f32.gmra.mxu0 %v2541
        %v2752 = vpop.f32.mrf.mxu0
        %v2753 = vadd.f32 0.0, %v2752
        %2754 = vmatmul.f32.gmra.mxu0 %v2544
        %v2755 = vpop.f32.mrf.mxu0
        %v2756 = vadd.f32 0.0, %v2755
        %2757 = vmatmul.f32.gmra.mxu0 %v2547
        %v2758 = vpop.f32.mrf.mxu0
        %v2759 = vadd.f32 0.0, %v2758
        %2760 = vmatmul.f32.gmra.mxu0 %v2550
        %v2761 = vpop.f32.mrf.mxu0
        %v2762 = vadd.f32 0.0, %v2761
        %2763 = vmatmul.f32.gmra.mxu0 %v2553
        %v2764 = vpop.f32.mrf.mxu0
        %v2765 = vadd.f32 0.0, %v2764
        %2766 = vmatmul.f32.gmra.mxu0 %v2556
        %v2767 = vpop.f32.mrf.mxu0
        %v2768 = vadd.f32 0.0, %v2767
        %2769 = vmatmul.f32.gmra.mxu0 %v2559
        %v2770 = vpop.f32.mrf.mxu0
        %v2771 = vadd.f32 0.0, %v2770
        %2772 = vmatmul.f32.gmra.mxu0 %v2562
        %v2773 = vpop.f32.mrf.mxu0
        %v2774 = vadd.f32 0.0, %v2773
        %2775 = vmatmul.f32.gmra.mxu0 %v2565
        %v2776 = vpop.f32.mrf.mxu0
        %v2777 = vadd.f32 0.0, %v2776
        %2778 = vmatmul.f32.gmra.mxu0 %v2568
        %v2779 = vpop.f32.mrf.mxu0
        %v2780 = vadd.f32 0.0, %v2779
        %2781 = vmatmul.f32.gmra.mxu0 %v2571
        %v2782 = vpop.f32.mrf.mxu0
        %v2783 = vadd.f32 0.0, %v2782
        %2784 = vmatmul.f32.gmra.mxu0 %v2574
        %v2785 = vpop.f32.mrf.mxu0
        %v2786 = vadd.f32 0.0, %v2785
        %2787 = vdwg.mxu0
        %v2788 = vadd.f32 %v2252, %v2597
        %v2789 = vadd.f32 %v2253, %v2600
        %v2790 = vadd.f32 %v2254, %v2603
        %v2791 = vadd.f32 %v2255, %v2606
        %v2792 = vadd.f32 %v2256, %v2609
        %v2793 = vadd.f32 %v2257, %v2612
        %v2794 = vadd.f32 %v2258, %v2615
        %v2795 = vadd.f32 %v2259, %v2618
        %v2796 = vadd.f32 %v2260, %v2621
        %v2797 = vadd.f32 %v2261, %v2624
        %v2798 = vadd.f32 %v2262, %v2627
        %v2799 = vadd.f32 %v2263, %v2630
        %v2800 = vadd.f32 %v2264, %v2633
        %v2801 = vadd.f32 %v2265, %v2636
        %v2802 = vadd.f32 %v2266, %v2639
        %v2803 = vadd.f32 %v2267, %v2642
        %v2804 = vadd.f32 %v2268, %v2645
        %v2805 = vadd.f32 %v2269, %v2648
        %v2806 = vadd.f32 %v2270, %v2651
        %v2807 = vadd.f32 %v2271, %v2654
        %v2808 = vadd.f32 %v2272, %v2657
        %v2809 = vadd.f32 %v2273, %v2660
        %v2810 = vadd.f32 %v2274, %v2663
        %v2811 = vadd.f32 %v2275, %v2666
        %v2812 = vadd.f32 %v2276, %v2669
        %v2813 = vadd.f32 %v2277, %v2672
        %v2814 = vadd.f32 %v2278, %v2675
        %v2815 = vadd.f32 %v2279, %v2678
        %v2816 = vadd.f32 %v2280, %v2681
        %v2817 = vadd.f32 %v2281, %v2684
        %v2818 = vadd.f32 %v2282, %v2687
        %v2819 = vadd.f32 %v2283, %v2690
        %v2820 = vadd.f32 %v2284, %v2693
        %v2821 = vadd.f32 %v2285, %v2696
        %v2822 = vadd.f32 %v2286, %v2699
        %v2823 = vadd.f32 %v2287, %v2702
        %v2824 = vadd.f32 %v2288, %v2705
        %v2825 = vadd.f32 %v2289, %v2708
        %v2826 = vadd.f32 %v2290, %v2711
        %v2827 = vadd.f32 %v2291, %v2714
        %v2828 = vadd.f32 %v2292, %v2717
        %v2829 = vadd.f32 %v2293, %v2720
        %v2830 = vadd.f32 %v2294, %v2723
        %v2831 = vadd.f32 %v2295, %v2726
        %v2832 = vadd.f32 %v2296, %v2729
        %v2833 = vadd.f32 %v2297, %v2732
        %v2834 = vadd.f32 %v2298, %v2735
        %v2835 = vadd.f32 %v2299, %v2738
        %v2836 = vadd.f32 %v2300, %v2741
        %v2837 = vadd.f32 %v2301, %v2744
        %v2838 = vadd.f32 %v2302, %v2747
        %v2839 = vadd.f32 %v2303, %v2750
        %v2840 = vadd.f32 %v2304, %v2753
        %v2841 = vadd.f32 %v2305, %v2756
        %v2842 = vadd.f32 %v2306, %v2759
        %v2843 = vadd.f32 %v2307, %v2762
        %v2844 = vadd.f32 %v2308, %v2765
        %v2845 = vadd.f32 %v2309, %v2768
        %v2846 = vadd.f32 %v2310, %v2771
        %v2847 = vadd.f32 %v2311, %v2774
        %v2848 = vadd.f32 %v2312, %v2777
        %v2849 = vadd.f32 %v2313, %v2780
        %v2850 = vadd.f32 %v2314, %v2783
        %v2851 = vadd.f32 %v2315, %v2786
        %s2852 = sadd.s32 %s299, 20
        %s2853 = scalar_lea.vmem %s0, %s2852
        %v2854 = vld [vmem:[%s2853] sm:$0xff]
        %v2855 = vld [vmem:[%s2853 + $0x8] sm:$0xff]
        %v2856 = vld [vmem:[%s2853 + $0x10] sm:$0xff]
        %v2857 = vld [vmem:[%s2853 + $0x18] sm:$0xff]
        %v2858 = vld [vmem:[%s2853 + $0x20] sm:$0xff]
        %v2859 = vld [vmem:[%s2853 + $0x28] sm:$0xff]
        %v2860 = vld [vmem:[%s2853 + $0x30] sm:$0xff]
        %v2861 = vld [vmem:[%s2853 + $0x38] sm:$0xff]
        %v2862 = vld [vmem:[%s2853 + $0x40] sm:$0xff]
        %v2863 = vld [vmem:[%s2853 + $0x48] sm:$0xff]
        %v2864 = vld [vmem:[%s2853 + $0x50] sm:$0xff]
        %v2865 = vld [vmem:[%s2853 + $0x58] sm:$0xff]
        %v2866 = vld [vmem:[%s2853 + $0x60] sm:$0xff]
        %v2867 = vld [vmem:[%s2853 + $0x68] sm:$0xff]
        %v2868 = vld [vmem:[%s2853 + $0x70] sm:$0xff]
        %v2869 = vld [vmem:[%s2853 + $0x78] sm:$0xff]
        %v2870 = vld [vmem:[%s2853 + $0x80] sm:$0xff]
        %v2871 = vld [vmem:[%s2853 + $0x88] sm:$0xff]
        %v2872 = vld [vmem:[%s2853 + $0x90] sm:$0xff]
        %v2873 = vld [vmem:[%s2853 + $0x98] sm:$0xff]
        %v2874 = vld [vmem:[%s2853 + $0xa0] sm:$0xff]
        %v2875 = vld [vmem:[%s2853 + $0xa8] sm:$0xff]
        %v2876 = vld [vmem:[%s2853 + $0xb0] sm:$0xff]
        %v2877 = vld [vmem:[%s2853 + $0xb8] sm:$0xff]
        %v2878 = vld [vmem:[%s2853 + $0xc0] sm:$0xff]
        %v2879 = vld [vmem:[%s2853 + $0xc8] sm:$0xff]
        %v2880 = vld [vmem:[%s2853 + $0xd0] sm:$0xff]
        %v2881 = vld [vmem:[%s2853 + $0xd8] sm:$0xff]
        %v2882 = vld [vmem:[%s2853 + $0xe0] sm:$0xff]
        %v2883 = vld [vmem:[%s2853 + $0xe8] sm:$0xff]
        %v2884 = vld [vmem:[%s2853 + $0xf0] sm:$0xff]
        %v2885 = vld [vmem:[%s2853 + $0xf8] sm:$0xff]
        %v2886 = vld [vmem:[%s2853 + $0x100] sm:$0xff]
        %v2887 = vld [vmem:[%s2853 + $0x108] sm:$0xff]
        %v2888 = vld [vmem:[%s2853 + $0x110] sm:$0xff]
        %v2889 = vld [vmem:[%s2853 + $0x118] sm:$0xff]
        %v2890 = vld [vmem:[%s2853 + $0x120] sm:$0xff]
        %v2891 = vld [vmem:[%s2853 + $0x128] sm:$0xff]
        %v2892 = vld [vmem:[%s2853 + $0x130] sm:$0xff]
        %v2893 = vld [vmem:[%s2853 + $0x138] sm:$0xff]
        %v2894 = vld [vmem:[%s2853 + $0x140] sm:$0xff]
        %v2895 = vld [vmem:[%s2853 + $0x148] sm:$0xff]
        %v2896 = vld [vmem:[%s2853 + $0x150] sm:$0xff]
        %v2897 = vld [vmem:[%s2853 + $0x158] sm:$0xff]
        %v2898 = vld [vmem:[%s2853 + $0x160] sm:$0xff]
        %v2899 = vld [vmem:[%s2853 + $0x168] sm:$0xff]
        %v2900 = vld [vmem:[%s2853 + $0x170] sm:$0xff]
        %v2901 = vld [vmem:[%s2853 + $0x178] sm:$0xff]
        %v2902 = vld [vmem:[%s2853 + $0x180] sm:$0xff]
        %v2903 = vld [vmem:[%s2853 + $0x188] sm:$0xff]
        %v2904 = vld [vmem:[%s2853 + $0x190] sm:$0xff]
        %v2905 = vld [vmem:[%s2853 + $0x198] sm:$0xff]
        %v2906 = vld [vmem:[%s2853 + $0x1a0] sm:$0xff]
        %v2907 = vld [vmem:[%s2853 + $0x1a8] sm:$0xff]
        %v2908 = vld [vmem:[%s2853 + $0x1b0] sm:$0xff]
        %v2909 = vld [vmem:[%s2853 + $0x1b8] sm:$0xff]
        %v2910 = vld [vmem:[%s2853 + $0x1c0] sm:$0xff]
        %v2911 = vld [vmem:[%s2853 + $0x1c8] sm:$0xff]
        %v2912 = vld [vmem:[%s2853 + $0x1d0] sm:$0xff]
        %v2913 = vld [vmem:[%s2853 + $0x1d8] sm:$0xff]
        %v2914 = vld [vmem:[%s2853 + $0x1e0] sm:$0xff]
        %v2915 = vld [vmem:[%s2853 + $0x1e8] sm:$0xff]
        %v2916 = vld [vmem:[%s2853 + $0x1f0] sm:$0xff]
        %v2917 = vld [vmem:[%s2853 + $0x1f8] sm:$0xff]
        %s2918 = scalar_lea.vmem %s1, 20
        %v2919 = vld [vmem:[%s2918] sm:$0xf]
        %v2921 = vsel %vm434, %v2854, 0
        %v2924 = vsel %vm434, %v2855, 0
        %v2927 = vsel %vm434, %v2856, 0
        %v2930 = vsel %vm434, %v2857, 0
        %v2933 = vsel %vm434, %v2858, 0
        %v2936 = vsel %vm434, %v2859, 0
        %v2939 = vsel %vm434, %v2860, 0
        %v2942 = vsel %vm434, %v2861, 0
        %v2945 = vsel %vm434, %v2862, 0
        %v2948 = vsel %vm434, %v2863, 0
        %v2951 = vsel %vm434, %v2864, 0
        %v2954 = vsel %vm434, %v2865, 0
        %v2957 = vsel %vm434, %v2866, 0
        %v2960 = vsel %vm434, %v2867, 0
        %v2963 = vsel %vm434, %v2868, 0
        %v2966 = vsel %vm434, %v2869, 0
        %v2969 = vsel %vm434, %v2870, 0
        %v2972 = vsel %vm434, %v2871, 0
        %v2975 = vsel %vm434, %v2872, 0
        %v2978 = vsel %vm434, %v2873, 0
        %v2981 = vsel %vm434, %v2874, 0
        %v2984 = vsel %vm434, %v2875, 0
        %v2987 = vsel %vm434, %v2876, 0
        %v2990 = vsel %vm434, %v2877, 0
        %v2993 = vsel %vm434, %v2878, 0
        %v2996 = vsel %vm434, %v2879, 0
        %v2999 = vsel %vm434, %v2880, 0
        %v3002 = vsel %vm434, %v2881, 0
        %v3005 = vsel %vm434, %v2882, 0
        %v3008 = vsel %vm434, %v2883, 0
        %v3011 = vsel %vm434, %v2884, 0
        %v3014 = vsel %vm434, %v2885, 0
        %v3017 = vsel %vm434, %v2886, 0
        %v3020 = vsel %vm434, %v2887, 0
        %v3023 = vsel %vm434, %v2888, 0
        %v3026 = vsel %vm434, %v2889, 0
        %v3029 = vsel %vm434, %v2890, 0
        %v3032 = vsel %vm434, %v2891, 0
        %v3035 = vsel %vm434, %v2892, 0
        %v3038 = vsel %vm434, %v2893, 0
        %v3041 = vsel %vm434, %v2894, 0
        %v3044 = vsel %vm434, %v2895, 0
        %v3047 = vsel %vm434, %v2896, 0
        %v3050 = vsel %vm434, %v2897, 0
        %v3053 = vsel %vm434, %v2898, 0
        %v3056 = vsel %vm434, %v2899, 0
        %v3059 = vsel %vm434, %v2900, 0
        %v3062 = vsel %vm434, %v2901, 0
        %v3065 = vsel %vm434, %v2902, 0
        %v3068 = vsel %vm434, %v2903, 0
        %v3071 = vsel %vm434, %v2904, 0
        %v3074 = vsel %vm434, %v2905, 0
        %v3077 = vsel %vm434, %v2906, 0
        %v3080 = vsel %vm434, %v2907, 0
        %v3083 = vsel %vm434, %v2908, 0
        %v3086 = vsel %vm434, %v2909, 0
        %v3089 = vsel %vm434, %v2910, 0
        %v3092 = vsel %vm434, %v2911, 0
        %v3095 = vsel %vm434, %v2912, 0
        %v3098 = vsel %vm434, %v2913, 0
        %v3101 = vsel %vm434, %v2914, 0
        %v3104 = vsel %vm434, %v2915, 0
        %v3107 = vsel %vm434, %v2916, 0
        %v3110 = vsel %vm434, %v2917, 0
        %v3113 = vsel %vm627, %v2919, 0
        %3115 = vmatpush.msra.mxu0 0.0
        %3116 = vmatpush.msra.mxu0 0.0
        %3117 = vmatpush.msra.mxu0 0.0
        %3118 = vmatpush.msra.mxu0 0.0
        %3119 = vmatpush.msra.mxu0 0.0
        %3120 = vmatpush.msra.mxu0 0.0
        %3121 = vmatpush.msra.mxu0 0.0
        %3122 = vmatpush.msra.mxu0 0.0
        %3123 = vmatpush.msra.mxu0 0.0
        %3124 = vmatpush.msra.mxu0 0.0
        %3125 = vmatpush.msra.mxu0 0.0
        %3126 = vmatpush.msra.mxu0 0.0
        %3127 = vmatpush.msra.mxu0 0.0
        %3128 = vmatpush.msra.mxu0 0.0
        %3129 = vmatpush.msra.mxu0 0.0
        %3130 = vmatpush.msra.mxu0 %v3113
        %3131 = vmatmul.f32.gmra.mxu0 %v2921
        %v3132 = vpop.f32.mrf.mxu0
        %v3133 = vadd.f32 0.0, %v3132
        %3134 = vmatmul.f32.gmra.mxu0 %v2924
        %v3135 = vpop.f32.mrf.mxu0
        %v3136 = vadd.f32 0.0, %v3135
        %3137 = vmatmul.f32.gmra.mxu0 %v2927
        %v3138 = vpop.f32.mrf.mxu0
        %v3139 = vadd.f32 0.0, %v3138
        %3140 = vmatmul.f32.gmra.mxu0 %v2930
        %v3141 = vpop.f32.mrf.mxu0
        %v3142 = vadd.f32 0.0, %v3141
        %3143 = vmatmul.f32.gmra.mxu0 %v2933
        %v3144 = vpop.f32.mrf.mxu0
        %v3145 = vadd.f32 0.0, %v3144
        %3146 = vmatmul.f32.gmra.mxu0 %v2936
        %v3147 = vpop.f32.mrf.mxu0
        %v3148 = vadd.f32 0.0, %v3147
        %3149 = vmatmul.f32.gmra.mxu0 %v2939
        %v3150 = vpop.f32.mrf.mxu0
        %v3151 = vadd.f32 0.0, %v3150
        %3152 = vmatmul.f32.gmra.mxu0 %v2942
        %v3153 = vpop.f32.mrf.mxu0
        %v3154 = vadd.f32 0.0, %v3153
        %3155 = vmatmul.f32.gmra.mxu0 %v2945
        %v3156 = vpop.f32.mrf.mxu0
        %v3157 = vadd.f32 0.0, %v3156
        %3158 = vmatmul.f32.gmra.mxu0 %v2948
        %v3159 = vpop.f32.mrf.mxu0
        %v3160 = vadd.f32 0.0, %v3159
        %3161 = vmatmul.f32.gmra.mxu0 %v2951
        %v3162 = vpop.f32.mrf.mxu0
        %v3163 = vadd.f32 0.0, %v3162
        %3164 = vmatmul.f32.gmra.mxu0 %v2954
        %v3165 = vpop.f32.mrf.mxu0
        %v3166 = vadd.f32 0.0, %v3165
        %3167 = vmatmul.f32.gmra.mxu0 %v2957
        %v3168 = vpop.f32.mrf.mxu0
        %v3169 = vadd.f32 0.0, %v3168
        %3170 = vmatmul.f32.gmra.mxu0 %v2960
        %v3171 = vpop.f32.mrf.mxu0
        %v3172 = vadd.f32 0.0, %v3171
        %3173 = vmatmul.f32.gmra.mxu0 %v2963
        %v3174 = vpop.f32.mrf.mxu0
        %v3175 = vadd.f32 0.0, %v3174
        %3176 = vmatmul.f32.gmra.mxu0 %v2966
        %v3177 = vpop.f32.mrf.mxu0
        %v3178 = vadd.f32 0.0, %v3177
        %3179 = vmatmul.f32.gmra.mxu0 %v2969
        %v3180 = vpop.f32.mrf.mxu0
        %v3181 = vadd.f32 0.0, %v3180
        %3182 = vmatmul.f32.gmra.mxu0 %v2972
        %v3183 = vpop.f32.mrf.mxu0
        %v3184 = vadd.f32 0.0, %v3183
        %3185 = vmatmul.f32.gmra.mxu0 %v2975
        %v3186 = vpop.f32.mrf.mxu0
        %v3187 = vadd.f32 0.0, %v3186
        %3188 = vmatmul.f32.gmra.mxu0 %v2978
        %v3189 = vpop.f32.mrf.mxu0
        %v3190 = vadd.f32 0.0, %v3189
        %3191 = vmatmul.f32.gmra.mxu0 %v2981
        %v3192 = vpop.f32.mrf.mxu0
        %v3193 = vadd.f32 0.0, %v3192
        %3194 = vmatmul.f32.gmra.mxu0 %v2984
        %v3195 = vpop.f32.mrf.mxu0
        %v3196 = vadd.f32 0.0, %v3195
        %3197 = vmatmul.f32.gmra.mxu0 %v2987
        %v3198 = vpop.f32.mrf.mxu0
        %v3199 = vadd.f32 0.0, %v3198
        %3200 = vmatmul.f32.gmra.mxu0 %v2990
        %v3201 = vpop.f32.mrf.mxu0
        %v3202 = vadd.f32 0.0, %v3201
        %3203 = vmatmul.f32.gmra.mxu0 %v2993
        %v3204 = vpop.f32.mrf.mxu0
        %v3205 = vadd.f32 0.0, %v3204
        %3206 = vmatmul.f32.gmra.mxu0 %v2996
        %v3207 = vpop.f32.mrf.mxu0
        %v3208 = vadd.f32 0.0, %v3207
        %3209 = vmatmul.f32.gmra.mxu0 %v2999
        %v3210 = vpop.f32.mrf.mxu0
        %v3211 = vadd.f32 0.0, %v3210
        %3212 = vmatmul.f32.gmra.mxu0 %v3002
        %v3213 = vpop.f32.mrf.mxu0
        %v3214 = vadd.f32 0.0, %v3213
        %3215 = vmatmul.f32.gmra.mxu0 %v3005
        %v3216 = vpop.f32.mrf.mxu0
        %v3217 = vadd.f32 0.0, %v3216
        %3218 = vmatmul.f32.gmra.mxu0 %v3008
        %v3219 = vpop.f32.mrf.mxu0
        %v3220 = vadd.f32 0.0, %v3219
        %3221 = vmatmul.f32.gmra.mxu0 %v3011
        %v3222 = vpop.f32.mrf.mxu0
        %v3223 = vadd.f32 0.0, %v3222
        %3224 = vmatmul.f32.gmra.mxu0 %v3014
        %v3225 = vpop.f32.mrf.mxu0
        %v3226 = vadd.f32 0.0, %v3225
        %3227 = vmatmul.f32.gmra.mxu0 %v3017
        %v3228 = vpop.f32.mrf.mxu0
        %v3229 = vadd.f32 0.0, %v3228
        %3230 = vmatmul.f32.gmra.mxu0 %v3020
        %v3231 = vpop.f32.mrf.mxu0
        %v3232 = vadd.f32 0.0, %v3231
        %3233 = vmatmul.f32.gmra.mxu0 %v3023
        %v3234 = vpop.f32.mrf.mxu0
        %v3235 = vadd.f32 0.0, %v3234
        %3236 = vmatmul.f32.gmra.mxu0 %v3026
        %v3237 = vpop.f32.mrf.mxu0
        %v3238 = vadd.f32 0.0, %v3237
        %3239 = vmatmul.f32.gmra.mxu0 %v3029
        %v3240 = vpop.f32.mrf.mxu0
        %v3241 = vadd.f32 0.0, %v3240
        %3242 = vmatmul.f32.gmra.mxu0 %v3032
        %v3243 = vpop.f32.mrf.mxu0
        %v3244 = vadd.f32 0.0, %v3243
        %3245 = vmatmul.f32.gmra.mxu0 %v3035
        %v3246 = vpop.f32.mrf.mxu0
        %v3247 = vadd.f32 0.0, %v3246
        %3248 = vmatmul.f32.gmra.mxu0 %v3038
        %v3249 = vpop.f32.mrf.mxu0
        %v3250 = vadd.f32 0.0, %v3249
        %3251 = vmatmul.f32.gmra.mxu0 %v3041
        %v3252 = vpop.f32.mrf.mxu0
        %v3253 = vadd.f32 0.0, %v3252
        %3254 = vmatmul.f32.gmra.mxu0 %v3044
        %v3255 = vpop.f32.mrf.mxu0
        %v3256 = vadd.f32 0.0, %v3255
        %3257 = vmatmul.f32.gmra.mxu0 %v3047
        %v3258 = vpop.f32.mrf.mxu0
        %v3259 = vadd.f32 0.0, %v3258
        %3260 = vmatmul.f32.gmra.mxu0 %v3050
        %v3261 = vpop.f32.mrf.mxu0
        %v3262 = vadd.f32 0.0, %v3261
        %3263 = vmatmul.f32.gmra.mxu0 %v3053
        %v3264 = vpop.f32.mrf.mxu0
        %v3265 = vadd.f32 0.0, %v3264
        %3266 = vmatmul.f32.gmra.mxu0 %v3056
        %v3267 = vpop.f32.mrf.mxu0
        %v3268 = vadd.f32 0.0, %v3267
        %3269 = vmatmul.f32.gmra.mxu0 %v3059
        %v3270 = vpop.f32.mrf.mxu0
        %v3271 = vadd.f32 0.0, %v3270
        %3272 = vmatmul.f32.gmra.mxu0 %v3062
        %v3273 = vpop.f32.mrf.mxu0
        %v3274 = vadd.f32 0.0, %v3273
        %3275 = vmatmul.f32.gmra.mxu0 %v3065
        %v3276 = vpop.f32.mrf.mxu0
        %v3277 = vadd.f32 0.0, %v3276
        %3278 = vmatmul.f32.gmra.mxu0 %v3068
        %v3279 = vpop.f32.mrf.mxu0
        %v3280 = vadd.f32 0.0, %v3279
        %3281 = vmatmul.f32.gmra.mxu0 %v3071
        %v3282 = vpop.f32.mrf.mxu0
        %v3283 = vadd.f32 0.0, %v3282
        %3284 = vmatmul.f32.gmra.mxu0 %v3074
        %v3285 = vpop.f32.mrf.mxu0
        %v3286 = vadd.f32 0.0, %v3285
        %3287 = vmatmul.f32.gmra.mxu0 %v3077
        %v3288 = vpop.f32.mrf.mxu0
        %v3289 = vadd.f32 0.0, %v3288
        %3290 = vmatmul.f32.gmra.mxu0 %v3080
        %v3291 = vpop.f32.mrf.mxu0
        %v3292 = vadd.f32 0.0, %v3291
        %3293 = vmatmul.f32.gmra.mxu0 %v3083
        %v3294 = vpop.f32.mrf.mxu0
        %v3295 = vadd.f32 0.0, %v3294
        %3296 = vmatmul.f32.gmra.mxu0 %v3086
        %v3297 = vpop.f32.mrf.mxu0
        %v3298 = vadd.f32 0.0, %v3297
        %3299 = vmatmul.f32.gmra.mxu0 %v3089
        %v3300 = vpop.f32.mrf.mxu0
        %v3301 = vadd.f32 0.0, %v3300
        %3302 = vmatmul.f32.gmra.mxu0 %v3092
        %v3303 = vpop.f32.mrf.mxu0
        %v3304 = vadd.f32 0.0, %v3303
        %3305 = vmatmul.f32.gmra.mxu0 %v3095
        %v3306 = vpop.f32.mrf.mxu0
        %v3307 = vadd.f32 0.0, %v3306
        %3308 = vmatmul.f32.gmra.mxu0 %v3098
        %v3309 = vpop.f32.mrf.mxu0
        %v3310 = vadd.f32 0.0, %v3309
        %3311 = vmatmul.f32.gmra.mxu0 %v3101
        %v3312 = vpop.f32.mrf.mxu0
        %v3313 = vadd.f32 0.0, %v3312
        %3314 = vmatmul.f32.gmra.mxu0 %v3104
        %v3315 = vpop.f32.mrf.mxu0
        %v3316 = vadd.f32 0.0, %v3315
        %3317 = vmatmul.f32.gmra.mxu0 %v3107
        %v3318 = vpop.f32.mrf.mxu0
        %v3319 = vadd.f32 0.0, %v3318
        %3320 = vmatmul.f32.gmra.mxu0 %v3110
        %v3321 = vpop.f32.mrf.mxu0
        %v3322 = vadd.f32 0.0, %v3321
        %3323 = vdwg.mxu0
        %v3324 = vadd.f32 %v2788, %v3133
        %v3325 = vadd.f32 %v2789, %v3136
        %v3326 = vadd.f32 %v2790, %v3139
        %v3327 = vadd.f32 %v2791, %v3142
        %v3328 = vadd.f32 %v2792, %v3145
        %v3329 = vadd.f32 %v2793, %v3148
        %v3330 = vadd.f32 %v2794, %v3151
        %v3331 = vadd.f32 %v2795, %v3154
        %v3332 = vadd.f32 %v2796, %v3157
        %v3333 = vadd.f32 %v2797, %v3160
        %v3334 = vadd.f32 %v2798, %v3163
        %v3335 = vadd.f32 %v2799, %v3166
        %v3336 = vadd.f32 %v2800, %v3169
        %v3337 = vadd.f32 %v2801, %v3172
        %v3338 = vadd.f32 %v2802, %v3175
        %v3339 = vadd.f32 %v2803, %v3178
        %v3340 = vadd.f32 %v2804, %v3181
        %v3341 = vadd.f32 %v2805, %v3184
        %v3342 = vadd.f32 %v2806, %v3187
        %v3343 = vadd.f32 %v2807, %v3190
        %v3344 = vadd.f32 %v2808, %v3193
        %v3345 = vadd.f32 %v2809, %v3196
        %v3346 = vadd.f32 %v2810, %v3199
        %v3347 = vadd.f32 %v2811, %v3202
        %v3348 = vadd.f32 %v2812, %v3205
        %v3349 = vadd.f32 %v2813, %v3208
        %v3350 = vadd.f32 %v2814, %v3211
        %v3351 = vadd.f32 %v2815, %v3214
        %v3352 = vadd.f32 %v2816, %v3217
        %v3353 = vadd.f32 %v2817, %v3220
        %v3354 = vadd.f32 %v2818, %v3223
        %v3355 = vadd.f32 %v2819, %v3226
        %v3356 = vadd.f32 %v2820, %v3229
        %v3357 = vadd.f32 %v2821, %v3232
        %v3358 = vadd.f32 %v2822, %v3235
        %v3359 = vadd.f32 %v2823, %v3238
        %v3360 = vadd.f32 %v2824, %v3241
        %v3361 = vadd.f32 %v2825, %v3244
        %v3362 = vadd.f32 %v2826, %v3247
        %v3363 = vadd.f32 %v2827, %v3250
        %v3364 = vadd.f32 %v2828, %v3253
        %v3365 = vadd.f32 %v2829, %v3256
        %v3366 = vadd.f32 %v2830, %v3259
        %v3367 = vadd.f32 %v2831, %v3262
        %v3368 = vadd.f32 %v2832, %v3265
        %v3369 = vadd.f32 %v2833, %v3268
        %v3370 = vadd.f32 %v2834, %v3271
        %v3371 = vadd.f32 %v2835, %v3274
        %v3372 = vadd.f32 %v2836, %v3277
        %v3373 = vadd.f32 %v2837, %v3280
        %v3374 = vadd.f32 %v2838, %v3283
        %v3375 = vadd.f32 %v2839, %v3286
        %v3376 = vadd.f32 %v2840, %v3289
        %v3377 = vadd.f32 %v2841, %v3292
        %v3378 = vadd.f32 %v2842, %v3295
        %v3379 = vadd.f32 %v2843, %v3298
        %v3380 = vadd.f32 %v2844, %v3301
        %v3381 = vadd.f32 %v2845, %v3304
        %v3382 = vadd.f32 %v2846, %v3307
        %v3383 = vadd.f32 %v2847, %v3310
        %v3384 = vadd.f32 %v2848, %v3313
        %v3385 = vadd.f32 %v2849, %v3316
        %v3386 = vadd.f32 %v2850, %v3319
        %v3387 = vadd.f32 %v2851, %v3322
        %s3388 = sadd.s32 %s299, 36
        %s3389 = scalar_lea.vmem %s0, %s3388
        %v3390 = vld [vmem:[%s3389] sm:$0xff]
        %v3391 = vld [vmem:[%s3389 + $0x8] sm:$0xff]
        %v3392 = vld [vmem:[%s3389 + $0x10] sm:$0xff]
        %v3393 = vld [vmem:[%s3389 + $0x18] sm:$0xff]
        %v3394 = vld [vmem:[%s3389 + $0x20] sm:$0xff]
        %v3395 = vld [vmem:[%s3389 + $0x28] sm:$0xff]
        %v3396 = vld [vmem:[%s3389 + $0x30] sm:$0xff]
        %v3397 = vld [vmem:[%s3389 + $0x38] sm:$0xff]
        %v3398 = vld [vmem:[%s3389 + $0x40] sm:$0xff]
        %v3399 = vld [vmem:[%s3389 + $0x48] sm:$0xff]
        %v3400 = vld [vmem:[%s3389 + $0x50] sm:$0xff]
        %v3401 = vld [vmem:[%s3389 + $0x58] sm:$0xff]
        %v3402 = vld [vmem:[%s3389 + $0x60] sm:$0xff]
        %v3403 = vld [vmem:[%s3389 + $0x68] sm:$0xff]
        %v3404 = vld [vmem:[%s3389 + $0x70] sm:$0xff]
        %v3405 = vld [vmem:[%s3389 + $0x78] sm:$0xff]
        %v3406 = vld [vmem:[%s3389 + $0x80] sm:$0xff]
        %v3407 = vld [vmem:[%s3389 + $0x88] sm:$0xff]
        %v3408 = vld [vmem:[%s3389 + $0x90] sm:$0xff]
        %v3409 = vld [vmem:[%s3389 + $0x98] sm:$0xff]
        %v3410 = vld [vmem:[%s3389 + $0xa0] sm:$0xff]
        %v3411 = vld [vmem:[%s3389 + $0xa8] sm:$0xff]
        %v3412 = vld [vmem:[%s3389 + $0xb0] sm:$0xff]
        %v3413 = vld [vmem:[%s3389 + $0xb8] sm:$0xff]
        %v3414 = vld [vmem:[%s3389 + $0xc0] sm:$0xff]
        %v3415 = vld [vmem:[%s3389 + $0xc8] sm:$0xff]
        %v3416 = vld [vmem:[%s3389 + $0xd0] sm:$0xff]
        %v3417 = vld [vmem:[%s3389 + $0xd8] sm:$0xff]
        %v3418 = vld [vmem:[%s3389 + $0xe0] sm:$0xff]
        %v3419 = vld [vmem:[%s3389 + $0xe8] sm:$0xff]
        %v3420 = vld [vmem:[%s3389 + $0xf0] sm:$0xff]
        %v3421 = vld [vmem:[%s3389 + $0xf8] sm:$0xff]
        %v3422 = vld [vmem:[%s3389 + $0x100] sm:$0xff]
        %v3423 = vld [vmem:[%s3389 + $0x108] sm:$0xff]
        %v3424 = vld [vmem:[%s3389 + $0x110] sm:$0xff]
        %v3425 = vld [vmem:[%s3389 + $0x118] sm:$0xff]
        %v3426 = vld [vmem:[%s3389 + $0x120] sm:$0xff]
        %v3427 = vld [vmem:[%s3389 + $0x128] sm:$0xff]
        %v3428 = vld [vmem:[%s3389 + $0x130] sm:$0xff]
        %v3429 = vld [vmem:[%s3389 + $0x138] sm:$0xff]
        %v3430 = vld [vmem:[%s3389 + $0x140] sm:$0xff]
        %v3431 = vld [vmem:[%s3389 + $0x148] sm:$0xff]
        %v3432 = vld [vmem:[%s3389 + $0x150] sm:$0xff]
        %v3433 = vld [vmem:[%s3389 + $0x158] sm:$0xff]
        %v3434 = vld [vmem:[%s3389 + $0x160] sm:$0xff]
        %v3435 = vld [vmem:[%s3389 + $0x168] sm:$0xff]
        %v3436 = vld [vmem:[%s3389 + $0x170] sm:$0xff]
        %v3437 = vld [vmem:[%s3389 + $0x178] sm:$0xff]
        %v3438 = vld [vmem:[%s3389 + $0x180] sm:$0xff]
        %v3439 = vld [vmem:[%s3389 + $0x188] sm:$0xff]
        %v3440 = vld [vmem:[%s3389 + $0x190] sm:$0xff]
        %v3441 = vld [vmem:[%s3389 + $0x198] sm:$0xff]
        %v3442 = vld [vmem:[%s3389 + $0x1a0] sm:$0xff]
        %v3443 = vld [vmem:[%s3389 + $0x1a8] sm:$0xff]
        %v3444 = vld [vmem:[%s3389 + $0x1b0] sm:$0xff]
        %v3445 = vld [vmem:[%s3389 + $0x1b8] sm:$0xff]
        %v3446 = vld [vmem:[%s3389 + $0x1c0] sm:$0xff]
        %v3447 = vld [vmem:[%s3389 + $0x1c8] sm:$0xff]
        %v3448 = vld [vmem:[%s3389 + $0x1d0] sm:$0xff]
        %v3449 = vld [vmem:[%s3389 + $0x1d8] sm:$0xff]
        %v3450 = vld [vmem:[%s3389 + $0x1e0] sm:$0xff]
        %v3451 = vld [vmem:[%s3389 + $0x1e8] sm:$0xff]
        %v3452 = vld [vmem:[%s3389 + $0x1f0] sm:$0xff]
        %v3453 = vld [vmem:[%s3389 + $0x1f8] sm:$0xff]
        %s3454 = scalar_lea.vmem %s1, 24
        %v3455 = vld [vmem:[%s3454] sm:$0xf]
        %v3457 = vsel %vm434, %v3390, 0
        %v3460 = vsel %vm434, %v3391, 0
        %v3463 = vsel %vm434, %v3392, 0
        %v3466 = vsel %vm434, %v3393, 0
        %v3469 = vsel %vm434, %v3394, 0
        %v3472 = vsel %vm434, %v3395, 0
        %v3475 = vsel %vm434, %v3396, 0
        %v3478 = vsel %vm434, %v3397, 0
        %v3481 = vsel %vm434, %v3398, 0
        %v3484 = vsel %vm434, %v3399, 0
        %v3487 = vsel %vm434, %v3400, 0
        %v3490 = vsel %vm434, %v3401, 0
        %v3493 = vsel %vm434, %v3402, 0
        %v3496 = vsel %vm434, %v3403, 0
        %v3499 = vsel %vm434, %v3404, 0
        %v3502 = vsel %vm434, %v3405, 0
        %v3505 = vsel %vm434, %v3406, 0
        %v3508 = vsel %vm434, %v3407, 0
        %v3511 = vsel %vm434, %v3408, 0
        %v3514 = vsel %vm434, %v3409, 0
        %v3517 = vsel %vm434, %v3410, 0
        %v3520 = vsel %vm434, %v3411, 0
        %v3523 = vsel %vm434, %v3412, 0
        %v3526 = vsel %vm434, %v3413, 0
        %v3529 = vsel %vm434, %v3414, 0
        %v3532 = vsel %vm434, %v3415, 0
        %v3535 = vsel %vm434, %v3416, 0
        %v3538 = vsel %vm434, %v3417, 0
        %v3541 = vsel %vm434, %v3418, 0
        %v3544 = vsel %vm434, %v3419, 0
        %v3547 = vsel %vm434, %v3420, 0
        %v3550 = vsel %vm434, %v3421, 0
        %v3553 = vsel %vm434, %v3422, 0
        %v3556 = vsel %vm434, %v3423, 0
        %v3559 = vsel %vm434, %v3424, 0
        %v3562 = vsel %vm434, %v3425, 0
        %v3565 = vsel %vm434, %v3426, 0
        %v3568 = vsel %vm434, %v3427, 0
        %v3571 = vsel %vm434, %v3428, 0
        %v3574 = vsel %vm434, %v3429, 0
        %v3577 = vsel %vm434, %v3430, 0
        %v3580 = vsel %vm434, %v3431, 0
        %v3583 = vsel %vm434, %v3432, 0
        %v3586 = vsel %vm434, %v3433, 0
        %v3589 = vsel %vm434, %v3434, 0
        %v3592 = vsel %vm434, %v3435, 0
        %v3595 = vsel %vm434, %v3436, 0
        %v3598 = vsel %vm434, %v3437, 0
        %v3601 = vsel %vm434, %v3438, 0
        %v3604 = vsel %vm434, %v3439, 0
        %v3607 = vsel %vm434, %v3440, 0
        %v3610 = vsel %vm434, %v3441, 0
        %v3613 = vsel %vm434, %v3442, 0
        %v3616 = vsel %vm434, %v3443, 0
        %v3619 = vsel %vm434, %v3444, 0
        %v3622 = vsel %vm434, %v3445, 0
        %v3625 = vsel %vm434, %v3446, 0
        %v3628 = vsel %vm434, %v3447, 0
        %v3631 = vsel %vm434, %v3448, 0
        %v3634 = vsel %vm434, %v3449, 0
        %v3637 = vsel %vm434, %v3450, 0
        %v3640 = vsel %vm434, %v3451, 0
        %v3643 = vsel %vm434, %v3452, 0
        %v3646 = vsel %vm434, %v3453, 0
        %v3649 = vsel %vm627, %v3455, 0
        %3651 = vmatpush.msra.mxu0 0.0
        %3652 = vmatpush.msra.mxu0 0.0
        %3653 = vmatpush.msra.mxu0 0.0
        %3654 = vmatpush.msra.mxu0 0.0
        %3655 = vmatpush.msra.mxu0 0.0
        %3656 = vmatpush.msra.mxu0 0.0
        %3657 = vmatpush.msra.mxu0 0.0
        %3658 = vmatpush.msra.mxu0 0.0
        %3659 = vmatpush.msra.mxu0 0.0
        %3660 = vmatpush.msra.mxu0 0.0
        %3661 = vmatpush.msra.mxu0 0.0
        %3662 = vmatpush.msra.mxu0 0.0
        %3663 = vmatpush.msra.mxu0 0.0
        %3664 = vmatpush.msra.mxu0 0.0
        %3665 = vmatpush.msra.mxu0 0.0
        %3666 = vmatpush.msra.mxu0 %v3649
        %3667 = vmatmul.f32.gmra.mxu0 %v3457
        %v3668 = vpop.f32.mrf.mxu0
        %v3669 = vadd.f32 0.0, %v3668
        %3670 = vmatmul.f32.gmra.mxu0 %v3460
        %v3671 = vpop.f32.mrf.mxu0
        %v3672 = vadd.f32 0.0, %v3671
        %3673 = vmatmul.f32.gmra.mxu0 %v3463
        %v3674 = vpop.f32.mrf.mxu0
        %v3675 = vadd.f32 0.0, %v3674
        %3676 = vmatmul.f32.gmra.mxu0 %v3466
        %v3677 = vpop.f32.mrf.mxu0
        %v3678 = vadd.f32 0.0, %v3677
        %3679 = vmatmul.f32.gmra.mxu0 %v3469
        %v3680 = vpop.f32.mrf.mxu0
        %v3681 = vadd.f32 0.0, %v3680
        %3682 = vmatmul.f32.gmra.mxu0 %v3472
        %v3683 = vpop.f32.mrf.mxu0
        %v3684 = vadd.f32 0.0, %v3683
        %3685 = vmatmul.f32.gmra.mxu0 %v3475
        %v3686 = vpop.f32.mrf.mxu0
        %v3687 = vadd.f32 0.0, %v3686
        %3688 = vmatmul.f32.gmra.mxu0 %v3478
        %v3689 = vpop.f32.mrf.mxu0
        %v3690 = vadd.f32 0.0, %v3689
        %3691 = vmatmul.f32.gmra.mxu0 %v3481
        %v3692 = vpop.f32.mrf.mxu0
        %v3693 = vadd.f32 0.0, %v3692
        %3694 = vmatmul.f32.gmra.mxu0 %v3484
        %v3695 = vpop.f32.mrf.mxu0
        %v3696 = vadd.f32 0.0, %v3695
        %3697 = vmatmul.f32.gmra.mxu0 %v3487
        %v3698 = vpop.f32.mrf.mxu0
        %v3699 = vadd.f32 0.0, %v3698
        %3700 = vmatmul.f32.gmra.mxu0 %v3490
        %v3701 = vpop.f32.mrf.mxu0
        %v3702 = vadd.f32 0.0, %v3701
        %3703 = vmatmul.f32.gmra.mxu0 %v3493
        %v3704 = vpop.f32.mrf.mxu0
        %v3705 = vadd.f32 0.0, %v3704
        %3706 = vmatmul.f32.gmra.mxu0 %v3496
        %v3707 = vpop.f32.mrf.mxu0
        %v3708 = vadd.f32 0.0, %v3707
        %3709 = vmatmul.f32.gmra.mxu0 %v3499
        %v3710 = vpop.f32.mrf.mxu0
        %v3711 = vadd.f32 0.0, %v3710
        %3712 = vmatmul.f32.gmra.mxu0 %v3502
        %v3713 = vpop.f32.mrf.mxu0
        %v3714 = vadd.f32 0.0, %v3713
        %3715 = vmatmul.f32.gmra.mxu0 %v3505
        %v3716 = vpop.f32.mrf.mxu0
        %v3717 = vadd.f32 0.0, %v3716
        %3718 = vmatmul.f32.gmra.mxu0 %v3508
        %v3719 = vpop.f32.mrf.mxu0
        %v3720 = vadd.f32 0.0, %v3719
        %3721 = vmatmul.f32.gmra.mxu0 %v3511
        %v3722 = vpop.f32.mrf.mxu0
        %v3723 = vadd.f32 0.0, %v3722
        %3724 = vmatmul.f32.gmra.mxu0 %v3514
        %v3725 = vpop.f32.mrf.mxu0
        %v3726 = vadd.f32 0.0, %v3725
        %3727 = vmatmul.f32.gmra.mxu0 %v3517
        %v3728 = vpop.f32.mrf.mxu0
        %v3729 = vadd.f32 0.0, %v3728
        %3730 = vmatmul.f32.gmra.mxu0 %v3520
        %v3731 = vpop.f32.mrf.mxu0
        %v3732 = vadd.f32 0.0, %v3731
        %3733 = vmatmul.f32.gmra.mxu0 %v3523
        %v3734 = vpop.f32.mrf.mxu0
        %v3735 = vadd.f32 0.0, %v3734
        %3736 = vmatmul.f32.gmra.mxu0 %v3526
        %v3737 = vpop.f32.mrf.mxu0
        %v3738 = vadd.f32 0.0, %v3737
        %3739 = vmatmul.f32.gmra.mxu0 %v3529
        %v3740 = vpop.f32.mrf.mxu0
        %v3741 = vadd.f32 0.0, %v3740
        %3742 = vmatmul.f32.gmra.mxu0 %v3532
        %v3743 = vpop.f32.mrf.mxu0
        %v3744 = vadd.f32 0.0, %v3743
        %3745 = vmatmul.f32.gmra.mxu0 %v3535
        %v3746 = vpop.f32.mrf.mxu0
        %v3747 = vadd.f32 0.0, %v3746
        %3748 = vmatmul.f32.gmra.mxu0 %v3538
        %v3749 = vpop.f32.mrf.mxu0
        %v3750 = vadd.f32 0.0, %v3749
        %3751 = vmatmul.f32.gmra.mxu0 %v3541
        %v3752 = vpop.f32.mrf.mxu0
        %v3753 = vadd.f32 0.0, %v3752
        %3754 = vmatmul.f32.gmra.mxu0 %v3544
        %v3755 = vpop.f32.mrf.mxu0
        %v3756 = vadd.f32 0.0, %v3755
        %3757 = vmatmul.f32.gmra.mxu0 %v3547
        %v3758 = vpop.f32.mrf.mxu0
        %v3759 = vadd.f32 0.0, %v3758
        %3760 = vmatmul.f32.gmra.mxu0 %v3550
        %v3761 = vpop.f32.mrf.mxu0
        %v3762 = vadd.f32 0.0, %v3761
        %3763 = vmatmul.f32.gmra.mxu0 %v3553
        %v3764 = vpop.f32.mrf.mxu0
        %v3765 = vadd.f32 0.0, %v3764
        %3766 = vmatmul.f32.gmra.mxu0 %v3556
        %v3767 = vpop.f32.mrf.mxu0
        %v3768 = vadd.f32 0.0, %v3767
        %3769 = vmatmul.f32.gmra.mxu0 %v3559
        %v3770 = vpop.f32.mrf.mxu0
        %v3771 = vadd.f32 0.0, %v3770
        %3772 = vmatmul.f32.gmra.mxu0 %v3562
        %v3773 = vpop.f32.mrf.mxu0
        %v3774 = vadd.f32 0.0, %v3773
        %3775 = vmatmul.f32.gmra.mxu0 %v3565
        %v3776 = vpop.f32.mrf.mxu0
        %v3777 = vadd.f32 0.0, %v3776
        %3778 = vmatmul.f32.gmra.mxu0 %v3568
        %v3779 = vpop.f32.mrf.mxu0
        %v3780 = vadd.f32 0.0, %v3779
        %3781 = vmatmul.f32.gmra.mxu0 %v3571
        %v3782 = vpop.f32.mrf.mxu0
        %v3783 = vadd.f32 0.0, %v3782
        %3784 = vmatmul.f32.gmra.mxu0 %v3574
        %v3785 = vpop.f32.mrf.mxu0
        %v3786 = vadd.f32 0.0, %v3785
        %3787 = vmatmul.f32.gmra.mxu0 %v3577
        %v3788 = vpop.f32.mrf.mxu0
        %v3789 = vadd.f32 0.0, %v3788
        %3790 = vmatmul.f32.gmra.mxu0 %v3580
        %v3791 = vpop.f32.mrf.mxu0
        %v3792 = vadd.f32 0.0, %v3791
        %3793 = vmatmul.f32.gmra.mxu0 %v3583
        %v3794 = vpop.f32.mrf.mxu0
        %v3795 = vadd.f32 0.0, %v3794
        %3796 = vmatmul.f32.gmra.mxu0 %v3586
        %v3797 = vpop.f32.mrf.mxu0
        %v3798 = vadd.f32 0.0, %v3797
        %3799 = vmatmul.f32.gmra.mxu0 %v3589
        %v3800 = vpop.f32.mrf.mxu0
        %v3801 = vadd.f32 0.0, %v3800
        %3802 = vmatmul.f32.gmra.mxu0 %v3592
        %v3803 = vpop.f32.mrf.mxu0
        %v3804 = vadd.f32 0.0, %v3803
        %3805 = vmatmul.f32.gmra.mxu0 %v3595
        %v3806 = vpop.f32.mrf.mxu0
        %v3807 = vadd.f32 0.0, %v3806
        %3808 = vmatmul.f32.gmra.mxu0 %v3598
        %v3809 = vpop.f32.mrf.mxu0
        %v3810 = vadd.f32 0.0, %v3809
        %3811 = vmatmul.f32.gmra.mxu0 %v3601
        %v3812 = vpop.f32.mrf.mxu0
        %v3813 = vadd.f32 0.0, %v3812
        %3814 = vmatmul.f32.gmra.mxu0 %v3604
        %v3815 = vpop.f32.mrf.mxu0
        %v3816 = vadd.f32 0.0, %v3815
        %3817 = vmatmul.f32.gmra.mxu0 %v3607
        %v3818 = vpop.f32.mrf.mxu0
        %v3819 = vadd.f32 0.0, %v3818
        %3820 = vmatmul.f32.gmra.mxu0 %v3610
        %v3821 = vpop.f32.mrf.mxu0
        %v3822 = vadd.f32 0.0, %v3821
        %3823 = vmatmul.f32.gmra.mxu0 %v3613
        %v3824 = vpop.f32.mrf.mxu0
        %v3825 = vadd.f32 0.0, %v3824
        %3826 = vmatmul.f32.gmra.mxu0 %v3616
        %v3827 = vpop.f32.mrf.mxu0
        %v3828 = vadd.f32 0.0, %v3827
        %3829 = vmatmul.f32.gmra.mxu0 %v3619
        %v3830 = vpop.f32.mrf.mxu0
        %v3831 = vadd.f32 0.0, %v3830
        %3832 = vmatmul.f32.gmra.mxu0 %v3622
        %v3833 = vpop.f32.mrf.mxu0
        %v3834 = vadd.f32 0.0, %v3833
        %3835 = vmatmul.f32.gmra.mxu0 %v3625
        %v3836 = vpop.f32.mrf.mxu0
        %v3837 = vadd.f32 0.0, %v3836
        %3838 = vmatmul.f32.gmra.mxu0 %v3628
        %v3839 = vpop.f32.mrf.mxu0
        %v3840 = vadd.f32 0.0, %v3839
        %3841 = vmatmul.f32.gmra.mxu0 %v3631
        %v3842 = vpop.f32.mrf.mxu0
        %v3843 = vadd.f32 0.0, %v3842
        %3844 = vmatmul.f32.gmra.mxu0 %v3634
        %v3845 = vpop.f32.mrf.mxu0
        %v3846 = vadd.f32 0.0, %v3845
        %3847 = vmatmul.f32.gmra.mxu0 %v3637
        %v3848 = vpop.f32.mrf.mxu0
        %v3849 = vadd.f32 0.0, %v3848
        %3850 = vmatmul.f32.gmra.mxu0 %v3640
        %v3851 = vpop.f32.mrf.mxu0
        %v3852 = vadd.f32 0.0, %v3851
        %3853 = vmatmul.f32.gmra.mxu0 %v3643
        %v3854 = vpop.f32.mrf.mxu0
        %v3855 = vadd.f32 0.0, %v3854
        %3856 = vmatmul.f32.gmra.mxu0 %v3646
        %v3857 = vpop.f32.mrf.mxu0
        %v3858 = vadd.f32 0.0, %v3857
        %3859 = vdwg.mxu0
        %v3860 = vadd.f32 %v3324, %v3669
        %v3861 = vadd.f32 %v3325, %v3672
        %v3862 = vadd.f32 %v3326, %v3675
        %v3863 = vadd.f32 %v3327, %v3678
        %v3864 = vadd.f32 %v3328, %v3681
        %v3865 = vadd.f32 %v3329, %v3684
        %v3866 = vadd.f32 %v3330, %v3687
        %v3867 = vadd.f32 %v3331, %v3690
        %v3868 = vadd.f32 %v3332, %v3693
        %v3869 = vadd.f32 %v3333, %v3696
        %v3870 = vadd.f32 %v3334, %v3699
        %v3871 = vadd.f32 %v3335, %v3702
        %v3872 = vadd.f32 %v3336, %v3705
        %v3873 = vadd.f32 %v3337, %v3708
        %v3874 = vadd.f32 %v3338, %v3711
        %v3875 = vadd.f32 %v3339, %v3714
        %v3876 = vadd.f32 %v3340, %v3717
        %v3877 = vadd.f32 %v3341, %v3720
        %v3878 = vadd.f32 %v3342, %v3723
        %v3879 = vadd.f32 %v3343, %v3726
        %v3880 = vadd.f32 %v3344, %v3729
        %v3881 = vadd.f32 %v3345, %v3732
        %v3882 = vadd.f32 %v3346, %v3735
        %v3883 = vadd.f32 %v3347, %v3738
        %v3884 = vadd.f32 %v3348, %v3741
        %v3885 = vadd.f32 %v3349, %v3744
        %v3886 = vadd.f32 %v3350, %v3747
        %v3887 = vadd.f32 %v3351, %v3750
        %v3888 = vadd.f32 %v3352, %v3753
        %v3889 = vadd.f32 %v3353, %v3756
        %v3890 = vadd.f32 %v3354, %v3759
        %v3891 = vadd.f32 %v3355, %v3762
        %v3892 = vadd.f32 %v3356, %v3765
        %v3893 = vadd.f32 %v3357, %v3768
        %v3894 = vadd.f32 %v3358, %v3771
        %v3895 = vadd.f32 %v3359, %v3774
        %v3896 = vadd.f32 %v3360, %v3777
        %v3897 = vadd.f32 %v3361, %v3780
        %v3898 = vadd.f32 %v3362, %v3783
        %v3899 = vadd.f32 %v3363, %v3786
        %v3900 = vadd.f32 %v3364, %v3789
        %v3901 = vadd.f32 %v3365, %v3792
        %v3902 = vadd.f32 %v3366, %v3795
        %v3903 = vadd.f32 %v3367, %v3798
        %v3904 = vadd.f32 %v3368, %v3801
        %v3905 = vadd.f32 %v3369, %v3804
        %v3906 = vadd.f32 %v3370, %v3807
        %v3907 = vadd.f32 %v3371, %v3810
        %v3908 = vadd.f32 %v3372, %v3813
        %v3909 = vadd.f32 %v3373, %v3816
        %v3910 = vadd.f32 %v3374, %v3819
        %v3911 = vadd.f32 %v3375, %v3822
        %v3912 = vadd.f32 %v3376, %v3825
        %v3913 = vadd.f32 %v3377, %v3828
        %v3914 = vadd.f32 %v3378, %v3831
        %v3915 = vadd.f32 %v3379, %v3834
        %v3916 = vadd.f32 %v3380, %v3837
        %v3917 = vadd.f32 %v3381, %v3840
        %v3918 = vadd.f32 %v3382, %v3843
        %v3919 = vadd.f32 %v3383, %v3846
        %v3920 = vadd.f32 %v3384, %v3849
        %v3921 = vadd.f32 %v3385, %v3852
        %v3922 = vadd.f32 %v3386, %v3855
        %v3923 = vadd.f32 %v3387, %v3858
        %s3924 = sadd.s32 %s299, 37
        %s3925 = scalar_lea.vmem %s0, %s3924
        %v3926 = vld [vmem:[%s3925] sm:$0xff]
        %v3927 = vld [vmem:[%s3925 + $0x8] sm:$0xff]
        %v3928 = vld [vmem:[%s3925 + $0x10] sm:$0xff]
        %v3929 = vld [vmem:[%s3925 + $0x18] sm:$0xff]
        %v3930 = vld [vmem:[%s3925 + $0x20] sm:$0xff]
        %v3931 = vld [vmem:[%s3925 + $0x28] sm:$0xff]
        %v3932 = vld [vmem:[%s3925 + $0x30] sm:$0xff]
        %v3933 = vld [vmem:[%s3925 + $0x38] sm:$0xff]
        %v3934 = vld [vmem:[%s3925 + $0x40] sm:$0xff]
        %v3935 = vld [vmem:[%s3925 + $0x48] sm:$0xff]
        %v3936 = vld [vmem:[%s3925 + $0x50] sm:$0xff]
        %v3937 = vld [vmem:[%s3925 + $0x58] sm:$0xff]
        %v3938 = vld [vmem:[%s3925 + $0x60] sm:$0xff]
        %v3939 = vld [vmem:[%s3925 + $0x68] sm:$0xff]
        %v3940 = vld [vmem:[%s3925 + $0x70] sm:$0xff]
        %v3941 = vld [vmem:[%s3925 + $0x78] sm:$0xff]
        %v3942 = vld [vmem:[%s3925 + $0x80] sm:$0xff]
        %v3943 = vld [vmem:[%s3925 + $0x88] sm:$0xff]
        %v3944 = vld [vmem:[%s3925 + $0x90] sm:$0xff]
        %v3945 = vld [vmem:[%s3925 + $0x98] sm:$0xff]
        %v3946 = vld [vmem:[%s3925 + $0xa0] sm:$0xff]
        %v3947 = vld [vmem:[%s3925 + $0xa8] sm:$0xff]
        %v3948 = vld [vmem:[%s3925 + $0xb0] sm:$0xff]
        %v3949 = vld [vmem:[%s3925 + $0xb8] sm:$0xff]
        %v3950 = vld [vmem:[%s3925 + $0xc0] sm:$0xff]
        %v3951 = vld [vmem:[%s3925 + $0xc8] sm:$0xff]
        %v3952 = vld [vmem:[%s3925 + $0xd0] sm:$0xff]
        %v3953 = vld [vmem:[%s3925 + $0xd8] sm:$0xff]
        %v3954 = vld [vmem:[%s3925 + $0xe0] sm:$0xff]
        %v3955 = vld [vmem:[%s3925 + $0xe8] sm:$0xff]
        %v3956 = vld [vmem:[%s3925 + $0xf0] sm:$0xff]
        %v3957 = vld [vmem:[%s3925 + $0xf8] sm:$0xff]
        %v3958 = vld [vmem:[%s3925 + $0x100] sm:$0xff]
        %v3959 = vld [vmem:[%s3925 + $0x108] sm:$0xff]
        %v3960 = vld [vmem:[%s3925 + $0x110] sm:$0xff]
        %v3961 = vld [vmem:[%s3925 + $0x118] sm:$0xff]
        %v3962 = vld [vmem:[%s3925 + $0x120] sm:$0xff]
        %v3963 = vld [vmem:[%s3925 + $0x128] sm:$0xff]
        %v3964 = vld [vmem:[%s3925 + $0x130] sm:$0xff]
        %v3965 = vld [vmem:[%s3925 + $0x138] sm:$0xff]
        %v3966 = vld [vmem:[%s3925 + $0x140] sm:$0xff]
        %v3967 = vld [vmem:[%s3925 + $0x148] sm:$0xff]
        %v3968 = vld [vmem:[%s3925 + $0x150] sm:$0xff]
        %v3969 = vld [vmem:[%s3925 + $0x158] sm:$0xff]
        %v3970 = vld [vmem:[%s3925 + $0x160] sm:$0xff]
        %v3971 = vld [vmem:[%s3925 + $0x168] sm:$0xff]
        %v3972 = vld [vmem:[%s3925 + $0x170] sm:$0xff]
        %v3973 = vld [vmem:[%s3925 + $0x178] sm:$0xff]
        %v3974 = vld [vmem:[%s3925 + $0x180] sm:$0xff]
        %v3975 = vld [vmem:[%s3925 + $0x188] sm:$0xff]
        %v3976 = vld [vmem:[%s3925 + $0x190] sm:$0xff]
        %v3977 = vld [vmem:[%s3925 + $0x198] sm:$0xff]
        %v3978 = vld [vmem:[%s3925 + $0x1a0] sm:$0xff]
        %v3979 = vld [vmem:[%s3925 + $0x1a8] sm:$0xff]
        %v3980 = vld [vmem:[%s3925 + $0x1b0] sm:$0xff]
        %v3981 = vld [vmem:[%s3925 + $0x1b8] sm:$0xff]
        %v3982 = vld [vmem:[%s3925 + $0x1c0] sm:$0xff]
        %v3983 = vld [vmem:[%s3925 + $0x1c8] sm:$0xff]
        %v3984 = vld [vmem:[%s3925 + $0x1d0] sm:$0xff]
        %v3985 = vld [vmem:[%s3925 + $0x1d8] sm:$0xff]
        %v3986 = vld [vmem:[%s3925 + $0x1e0] sm:$0xff]
        %v3987 = vld [vmem:[%s3925 + $0x1e8] sm:$0xff]
        %v3988 = vld [vmem:[%s3925 + $0x1f0] sm:$0xff]
        %v3989 = vld [vmem:[%s3925 + $0x1f8] sm:$0xff]
        %s3990 = scalar_lea.vmem %s1, 28
        %v3991 = vld [vmem:[%s3990] sm:$0xf]
        %v3993 = vsel %vm434, %v3926, 0
        %v3996 = vsel %vm434, %v3927, 0
        %v3999 = vsel %vm434, %v3928, 0
        %v4002 = vsel %vm434, %v3929, 0
        %v4005 = vsel %vm434, %v3930, 0
        %v4008 = vsel %vm434, %v3931, 0
        %v4011 = vsel %vm434, %v3932, 0
        %v4014 = vsel %vm434, %v3933, 0
        %v4017 = vsel %vm434, %v3934, 0
        %v4020 = vsel %vm434, %v3935, 0
        %v4023 = vsel %vm434, %v3936, 0
        %v4026 = vsel %vm434, %v3937, 0
        %v4029 = vsel %vm434, %v3938, 0
        %v4032 = vsel %vm434, %v3939, 0
        %v4035 = vsel %vm434, %v3940, 0
        %v4038 = vsel %vm434, %v3941, 0
        %v4041 = vsel %vm434, %v3942, 0
        %v4044 = vsel %vm434, %v3943, 0
        %v4047 = vsel %vm434, %v3944, 0
        %v4050 = vsel %vm434, %v3945, 0
        %v4053 = vsel %vm434, %v3946, 0
        %v4056 = vsel %vm434, %v3947, 0
        %v4059 = vsel %vm434, %v3948, 0
        %v4062 = vsel %vm434, %v3949, 0
        %v4065 = vsel %vm434, %v3950, 0
        %v4068 = vsel %vm434, %v3951, 0
        %v4071 = vsel %vm434, %v3952, 0
        %v4074 = vsel %vm434, %v3953, 0
        %v4077 = vsel %vm434, %v3954, 0
        %v4080 = vsel %vm434, %v3955, 0
        %v4083 = vsel %vm434, %v3956, 0
        %v4086 = vsel %vm434, %v3957, 0
        %v4089 = vsel %vm434, %v3958, 0
        %v4092 = vsel %vm434, %v3959, 0
        %v4095 = vsel %vm434, %v3960, 0
        %v4098 = vsel %vm434, %v3961, 0
        %v4101 = vsel %vm434, %v3962, 0
        %v4104 = vsel %vm434, %v3963, 0
        %v4107 = vsel %vm434, %v3964, 0
        %v4110 = vsel %vm434, %v3965, 0
        %v4113 = vsel %vm434, %v3966, 0
        %v4116 = vsel %vm434, %v3967, 0
        %v4119 = vsel %vm434, %v3968, 0
        %v4122 = vsel %vm434, %v3969, 0
        %v4125 = vsel %vm434, %v3970, 0
        %v4128 = vsel %vm434, %v3971, 0
        %v4131 = vsel %vm434, %v3972, 0
        %v4134 = vsel %vm434, %v3973, 0
        %v4137 = vsel %vm434, %v3974, 0
        %v4140 = vsel %vm434, %v3975, 0
        %v4143 = vsel %vm434, %v3976, 0
        %v4146 = vsel %vm434, %v3977, 0
        %v4149 = vsel %vm434, %v3978, 0
        %v4152 = vsel %vm434, %v3979, 0
        %v4155 = vsel %vm434, %v3980, 0
        %v4158 = vsel %vm434, %v3981, 0
        %v4161 = vsel %vm434, %v3982, 0
        %v4164 = vsel %vm434, %v3983, 0
        %v4167 = vsel %vm434, %v3984, 0
        %v4170 = vsel %vm434, %v3985, 0
        %v4173 = vsel %vm434, %v3986, 0
        %v4176 = vsel %vm434, %v3987, 0
        %v4179 = vsel %vm434, %v3988, 0
        %v4182 = vsel %vm434, %v3989, 0
        %v4185 = vsel %vm627, %v3991, 0
        %4187 = vmatpush.msra.mxu0 0.0
        %4188 = vmatpush.msra.mxu0 0.0
        %4189 = vmatpush.msra.mxu0 0.0
        %4190 = vmatpush.msra.mxu0 0.0
        %4191 = vmatpush.msra.mxu0 0.0
        %4192 = vmatpush.msra.mxu0 0.0
        %4193 = vmatpush.msra.mxu0 0.0
        %4194 = vmatpush.msra.mxu0 0.0
        %4195 = vmatpush.msra.mxu0 0.0
        %4196 = vmatpush.msra.mxu0 0.0
        %4197 = vmatpush.msra.mxu0 0.0
        %4198 = vmatpush.msra.mxu0 0.0
        %4199 = vmatpush.msra.mxu0 0.0
        %4200 = vmatpush.msra.mxu0 0.0
        %4201 = vmatpush.msra.mxu0 0.0
        %4202 = vmatpush.msra.mxu0 %v4185
        %4203 = vmatmul.f32.gmra.mxu0 %v3993
        %v4204 = vpop.f32.mrf.mxu0
        %v4205 = vadd.f32 0.0, %v4204
        %4206 = vmatmul.f32.gmra.mxu0 %v3996
        %v4207 = vpop.f32.mrf.mxu0
        %v4208 = vadd.f32 0.0, %v4207
        %4209 = vmatmul.f32.gmra.mxu0 %v3999
        %v4210 = vpop.f32.mrf.mxu0
        %v4211 = vadd.f32 0.0, %v4210
        %4212 = vmatmul.f32.gmra.mxu0 %v4002
        %v4213 = vpop.f32.mrf.mxu0
        %v4214 = vadd.f32 0.0, %v4213
        %4215 = vmatmul.f32.gmra.mxu0 %v4005
        %v4216 = vpop.f32.mrf.mxu0
        %v4217 = vadd.f32 0.0, %v4216
        %4218 = vmatmul.f32.gmra.mxu0 %v4008
        %v4219 = vpop.f32.mrf.mxu0
        %v4220 = vadd.f32 0.0, %v4219
        %4221 = vmatmul.f32.gmra.mxu0 %v4011
        %v4222 = vpop.f32.mrf.mxu0
        %v4223 = vadd.f32 0.0, %v4222
        %4224 = vmatmul.f32.gmra.mxu0 %v4014
        %v4225 = vpop.f32.mrf.mxu0
        %v4226 = vadd.f32 0.0, %v4225
        %4227 = vmatmul.f32.gmra.mxu0 %v4017
        %v4228 = vpop.f32.mrf.mxu0
        %v4229 = vadd.f32 0.0, %v4228
        %4230 = vmatmul.f32.gmra.mxu0 %v4020
        %v4231 = vpop.f32.mrf.mxu0
        %v4232 = vadd.f32 0.0, %v4231
        %4233 = vmatmul.f32.gmra.mxu0 %v4023
        %v4234 = vpop.f32.mrf.mxu0
        %v4235 = vadd.f32 0.0, %v4234
        %4236 = vmatmul.f32.gmra.mxu0 %v4026
        %v4237 = vpop.f32.mrf.mxu0
        %v4238 = vadd.f32 0.0, %v4237
        %4239 = vmatmul.f32.gmra.mxu0 %v4029
        %v4240 = vpop.f32.mrf.mxu0
        %v4241 = vadd.f32 0.0, %v4240
        %4242 = vmatmul.f32.gmra.mxu0 %v4032
        %v4243 = vpop.f32.mrf.mxu0
        %v4244 = vadd.f32 0.0, %v4243
        %4245 = vmatmul.f32.gmra.mxu0 %v4035
        %v4246 = vpop.f32.mrf.mxu0
        %v4247 = vadd.f32 0.0, %v4246
        %4248 = vmatmul.f32.gmra.mxu0 %v4038
        %v4249 = vpop.f32.mrf.mxu0
        %v4250 = vadd.f32 0.0, %v4249
        %4251 = vmatmul.f32.gmra.mxu0 %v4041
        %v4252 = vpop.f32.mrf.mxu0
        %v4253 = vadd.f32 0.0, %v4252
        %4254 = vmatmul.f32.gmra.mxu0 %v4044
        %v4255 = vpop.f32.mrf.mxu0
        %v4256 = vadd.f32 0.0, %v4255
        %4257 = vmatmul.f32.gmra.mxu0 %v4047
        %v4258 = vpop.f32.mrf.mxu0
        %v4259 = vadd.f32 0.0, %v4258
        %4260 = vmatmul.f32.gmra.mxu0 %v4050
        %v4261 = vpop.f32.mrf.mxu0
        %v4262 = vadd.f32 0.0, %v4261
        %4263 = vmatmul.f32.gmra.mxu0 %v4053
        %v4264 = vpop.f32.mrf.mxu0
        %v4265 = vadd.f32 0.0, %v4264
        %4266 = vmatmul.f32.gmra.mxu0 %v4056
        %v4267 = vpop.f32.mrf.mxu0
        %v4268 = vadd.f32 0.0, %v4267
        %4269 = vmatmul.f32.gmra.mxu0 %v4059
        %v4270 = vpop.f32.mrf.mxu0
        %v4271 = vadd.f32 0.0, %v4270
        %4272 = vmatmul.f32.gmra.mxu0 %v4062
        %v4273 = vpop.f32.mrf.mxu0
        %v4274 = vadd.f32 0.0, %v4273
        %4275 = vmatmul.f32.gmra.mxu0 %v4065
        %v4276 = vpop.f32.mrf.mxu0
        %v4277 = vadd.f32 0.0, %v4276
        %4278 = vmatmul.f32.gmra.mxu0 %v4068
        %v4279 = vpop.f32.mrf.mxu0
        %v4280 = vadd.f32 0.0, %v4279
        %4281 = vmatmul.f32.gmra.mxu0 %v4071
        %v4282 = vpop.f32.mrf.mxu0
        %v4283 = vadd.f32 0.0, %v4282
        %4284 = vmatmul.f32.gmra.mxu0 %v4074
        %v4285 = vpop.f32.mrf.mxu0
        %v4286 = vadd.f32 0.0, %v4285
        %4287 = vmatmul.f32.gmra.mxu0 %v4077
        %v4288 = vpop.f32.mrf.mxu0
        %v4289 = vadd.f32 0.0, %v4288
        %4290 = vmatmul.f32.gmra.mxu0 %v4080
        %v4291 = vpop.f32.mrf.mxu0
        %v4292 = vadd.f32 0.0, %v4291
        %4293 = vmatmul.f32.gmra.mxu0 %v4083
        %v4294 = vpop.f32.mrf.mxu0
        %v4295 = vadd.f32 0.0, %v4294
        %4296 = vmatmul.f32.gmra.mxu0 %v4086
        %v4297 = vpop.f32.mrf.mxu0
        %v4298 = vadd.f32 0.0, %v4297
        %4299 = vmatmul.f32.gmra.mxu0 %v4089
        %v4300 = vpop.f32.mrf.mxu0
        %v4301 = vadd.f32 0.0, %v4300
        %4302 = vmatmul.f32.gmra.mxu0 %v4092
        %v4303 = vpop.f32.mrf.mxu0
        %v4304 = vadd.f32 0.0, %v4303
        %4305 = vmatmul.f32.gmra.mxu0 %v4095
        %v4306 = vpop.f32.mrf.mxu0
        %v4307 = vadd.f32 0.0, %v4306
        %4308 = vmatmul.f32.gmra.mxu0 %v4098
        %v4309 = vpop.f32.mrf.mxu0
        %v4310 = vadd.f32 0.0, %v4309
        %4311 = vmatmul.f32.gmra.mxu0 %v4101
        %v4312 = vpop.f32.mrf.mxu0
        %v4313 = vadd.f32 0.0, %v4312
        %4314 = vmatmul.f32.gmra.mxu0 %v4104
        %v4315 = vpop.f32.mrf.mxu0
        %v4316 = vadd.f32 0.0, %v4315
        %4317 = vmatmul.f32.gmra.mxu0 %v4107
        %v4318 = vpop.f32.mrf.mxu0
        %v4319 = vadd.f32 0.0, %v4318
        %4320 = vmatmul.f32.gmra.mxu0 %v4110
        %v4321 = vpop.f32.mrf.mxu0
        %v4322 = vadd.f32 0.0, %v4321
        %4323 = vmatmul.f32.gmra.mxu0 %v4113
        %v4324 = vpop.f32.mrf.mxu0
        %v4325 = vadd.f32 0.0, %v4324
        %4326 = vmatmul.f32.gmra.mxu0 %v4116
        %v4327 = vpop.f32.mrf.mxu0
        %v4328 = vadd.f32 0.0, %v4327
        %4329 = vmatmul.f32.gmra.mxu0 %v4119
        %v4330 = vpop.f32.mrf.mxu0
        %v4331 = vadd.f32 0.0, %v4330
        %4332 = vmatmul.f32.gmra.mxu0 %v4122
        %v4333 = vpop.f32.mrf.mxu0
        %v4334 = vadd.f32 0.0, %v4333
        %4335 = vmatmul.f32.gmra.mxu0 %v4125
        %v4336 = vpop.f32.mrf.mxu0
        %v4337 = vadd.f32 0.0, %v4336
        %4338 = vmatmul.f32.gmra.mxu0 %v4128
        %v4339 = vpop.f32.mrf.mxu0
        %v4340 = vadd.f32 0.0, %v4339
        %4341 = vmatmul.f32.gmra.mxu0 %v4131
        %v4342 = vpop.f32.mrf.mxu0
        %v4343 = vadd.f32 0.0, %v4342
        %4344 = vmatmul.f32.gmra.mxu0 %v4134
        %v4345 = vpop.f32.mrf.mxu0
        %v4346 = vadd.f32 0.0, %v4345
        %4347 = vmatmul.f32.gmra.mxu0 %v4137
        %v4348 = vpop.f32.mrf.mxu0
        %v4349 = vadd.f32 0.0, %v4348
        %4350 = vmatmul.f32.gmra.mxu0 %v4140
        %v4351 = vpop.f32.mrf.mxu0
        %v4352 = vadd.f32 0.0, %v4351
        %4353 = vmatmul.f32.gmra.mxu0 %v4143
        %v4354 = vpop.f32.mrf.mxu0
        %v4355 = vadd.f32 0.0, %v4354
        %4356 = vmatmul.f32.gmra.mxu0 %v4146
        %v4357 = vpop.f32.mrf.mxu0
        %v4358 = vadd.f32 0.0, %v4357
        %4359 = vmatmul.f32.gmra.mxu0 %v4149
        %v4360 = vpop.f32.mrf.mxu0
        %v4361 = vadd.f32 0.0, %v4360
        %4362 = vmatmul.f32.gmra.mxu0 %v4152
        %v4363 = vpop.f32.mrf.mxu0
        %v4364 = vadd.f32 0.0, %v4363
        %4365 = vmatmul.f32.gmra.mxu0 %v4155
        %v4366 = vpop.f32.mrf.mxu0
        %v4367 = vadd.f32 0.0, %v4366
        %4368 = vmatmul.f32.gmra.mxu0 %v4158
        %v4369 = vpop.f32.mrf.mxu0
        %v4370 = vadd.f32 0.0, %v4369
        %4371 = vmatmul.f32.gmra.mxu0 %v4161
        %v4372 = vpop.f32.mrf.mxu0
        %v4373 = vadd.f32 0.0, %v4372
        %4374 = vmatmul.f32.gmra.mxu0 %v4164
        %v4375 = vpop.f32.mrf.mxu0
        %v4376 = vadd.f32 0.0, %v4375
        %4377 = vmatmul.f32.gmra.mxu0 %v4167
        %v4378 = vpop.f32.mrf.mxu0
        %v4379 = vadd.f32 0.0, %v4378
        %4380 = vmatmul.f32.gmra.mxu0 %v4170
        %v4381 = vpop.f32.mrf.mxu0
        %v4382 = vadd.f32 0.0, %v4381
        %4383 = vmatmul.f32.gmra.mxu0 %v4173
        %v4384 = vpop.f32.mrf.mxu0
        %v4385 = vadd.f32 0.0, %v4384
        %4386 = vmatmul.f32.gmra.mxu0 %v4176
        %v4387 = vpop.f32.mrf.mxu0
        %v4388 = vadd.f32 0.0, %v4387
        %4389 = vmatmul.f32.gmra.mxu0 %v4179
        %v4390 = vpop.f32.mrf.mxu0
        %v4391 = vadd.f32 0.0, %v4390
        %4392 = vmatmul.f32.gmra.mxu0 %v4182
        %v4393 = vpop.f32.mrf.mxu0
        %v4394 = vadd.f32 0.0, %v4393
        %4395 = vdwg.mxu0
        %v4396 = vadd.f32 %v3860, %v4205
        %v4397 = vadd.f32 %v3861, %v4208
        %v4398 = vadd.f32 %v3862, %v4211
        %v4399 = vadd.f32 %v3863, %v4214
        %v4400 = vadd.f32 %v3864, %v4217
        %v4401 = vadd.f32 %v3865, %v4220
        %v4402 = vadd.f32 %v3866, %v4223
        %v4403 = vadd.f32 %v3867, %v4226
        %v4404 = vadd.f32 %v3868, %v4229
        %v4405 = vadd.f32 %v3869, %v4232
        %v4406 = vadd.f32 %v3870, %v4235
        %v4407 = vadd.f32 %v3871, %v4238
        %v4408 = vadd.f32 %v3872, %v4241
        %v4409 = vadd.f32 %v3873, %v4244
        %v4410 = vadd.f32 %v3874, %v4247
        %v4411 = vadd.f32 %v3875, %v4250
        %v4412 = vadd.f32 %v3876, %v4253
        %v4413 = vadd.f32 %v3877, %v4256
        %v4414 = vadd.f32 %v3878, %v4259
        %v4415 = vadd.f32 %v3879, %v4262
        %v4416 = vadd.f32 %v3880, %v4265
        %v4417 = vadd.f32 %v3881, %v4268
        %v4418 = vadd.f32 %v3882, %v4271
        %v4419 = vadd.f32 %v3883, %v4274
        %v4420 = vadd.f32 %v3884, %v4277
        %v4421 = vadd.f32 %v3885, %v4280
        %v4422 = vadd.f32 %v3886, %v4283
        %v4423 = vadd.f32 %v3887, %v4286
        %v4424 = vadd.f32 %v3888, %v4289
        %v4425 = vadd.f32 %v3889, %v4292
        %v4426 = vadd.f32 %v3890, %v4295
        %v4427 = vadd.f32 %v3891, %v4298
        %v4428 = vadd.f32 %v3892, %v4301
        %v4429 = vadd.f32 %v3893, %v4304
        %v4430 = vadd.f32 %v3894, %v4307
        %v4431 = vadd.f32 %v3895, %v4310
        %v4432 = vadd.f32 %v3896, %v4313
        %v4433 = vadd.f32 %v3897, %v4316
        %v4434 = vadd.f32 %v3898, %v4319
        %v4435 = vadd.f32 %v3899, %v4322
        %v4436 = vadd.f32 %v3900, %v4325
        %v4437 = vadd.f32 %v3901, %v4328
        %v4438 = vadd.f32 %v3902, %v4331
        %v4439 = vadd.f32 %v3903, %v4334
        %v4440 = vadd.f32 %v3904, %v4337
        %v4441 = vadd.f32 %v3905, %v4340
        %v4442 = vadd.f32 %v3906, %v4343
        %v4443 = vadd.f32 %v3907, %v4346
        %v4444 = vadd.f32 %v3908, %v4349
        %v4445 = vadd.f32 %v3909, %v4352
        %v4446 = vadd.f32 %v3910, %v4355
        %v4447 = vadd.f32 %v3911, %v4358
        %v4448 = vadd.f32 %v3912, %v4361
        %v4449 = vadd.f32 %v3913, %v4364
        %v4450 = vadd.f32 %v3914, %v4367
        %v4451 = vadd.f32 %v3915, %v4370
        %v4452 = vadd.f32 %v3916, %v4373
        %v4453 = vadd.f32 %v3917, %v4376
        %v4454 = vadd.f32 %v3918, %v4379
        %v4455 = vadd.f32 %v3919, %v4382
        %v4456 = vadd.f32 %v3920, %v4385
        %v4457 = vadd.f32 %v3921, %v4388
        %v4458 = vadd.f32 %v3922, %v4391
        %v4459 = vadd.f32 %v3923, %v4394
        %s4460 = sadd.s32 %s299, 38
        %s4461 = scalar_lea.vmem %s0, %s4460
        %v4462 = vld [vmem:[%s4461] sm:$0xff]
        %v4463 = vld [vmem:[%s4461 + $0x8] sm:$0xff]
        %v4464 = vld [vmem:[%s4461 + $0x10] sm:$0xff]
        %v4465 = vld [vmem:[%s4461 + $0x18] sm:$0xff]
        %v4466 = vld [vmem:[%s4461 + $0x20] sm:$0xff]
        %v4467 = vld [vmem:[%s4461 + $0x28] sm:$0xff]
        %v4468 = vld [vmem:[%s4461 + $0x30] sm:$0xff]
        %v4469 = vld [vmem:[%s4461 + $0x38] sm:$0xff]
        %v4470 = vld [vmem:[%s4461 + $0x40] sm:$0xff]
        %v4471 = vld [vmem:[%s4461 + $0x48] sm:$0xff]
        %v4472 = vld [vmem:[%s4461 + $0x50] sm:$0xff]
        %v4473 = vld [vmem:[%s4461 + $0x58] sm:$0xff]
        %v4474 = vld [vmem:[%s4461 + $0x60] sm:$0xff]
        %v4475 = vld [vmem:[%s4461 + $0x68] sm:$0xff]
        %v4476 = vld [vmem:[%s4461 + $0x70] sm:$0xff]
        %v4477 = vld [vmem:[%s4461 + $0x78] sm:$0xff]
        %v4478 = vld [vmem:[%s4461 + $0x80] sm:$0xff]
        %v4479 = vld [vmem:[%s4461 + $0x88] sm:$0xff]
        %v4480 = vld [vmem:[%s4461 + $0x90] sm:$0xff]
        %v4481 = vld [vmem:[%s4461 + $0x98] sm:$0xff]
        %v4482 = vld [vmem:[%s4461 + $0xa0] sm:$0xff]
        %v4483 = vld [vmem:[%s4461 + $0xa8] sm:$0xff]
        %v4484 = vld [vmem:[%s4461 + $0xb0] sm:$0xff]
        %v4485 = vld [vmem:[%s4461 + $0xb8] sm:$0xff]
        %v4486 = vld [vmem:[%s4461 + $0xc0] sm:$0xff]
        %v4487 = vld [vmem:[%s4461 + $0xc8] sm:$0xff]
        %v4488 = vld [vmem:[%s4461 + $0xd0] sm:$0xff]
        %v4489 = vld [vmem:[%s4461 + $0xd8] sm:$0xff]
        %v4490 = vld [vmem:[%s4461 + $0xe0] sm:$0xff]
        %v4491 = vld [vmem:[%s4461 + $0xe8] sm:$0xff]
        %v4492 = vld [vmem:[%s4461 + $0xf0] sm:$0xff]
        %v4493 = vld [vmem:[%s4461 + $0xf8] sm:$0xff]
        %v4494 = vld [vmem:[%s4461 + $0x100] sm:$0xff]
        %v4495 = vld [vmem:[%s4461 + $0x108] sm:$0xff]
        %v4496 = vld [vmem:[%s4461 + $0x110] sm:$0xff]
        %v4497 = vld [vmem:[%s4461 + $0x118] sm:$0xff]
        %v4498 = vld [vmem:[%s4461 + $0x120] sm:$0xff]
        %v4499 = vld [vmem:[%s4461 + $0x128] sm:$0xff]
        %v4500 = vld [vmem:[%s4461 + $0x130] sm:$0xff]
        %v4501 = vld [vmem:[%s4461 + $0x138] sm:$0xff]
        %v4502 = vld [vmem:[%s4461 + $0x140] sm:$0xff]
        %v4503 = vld [vmem:[%s4461 + $0x148] sm:$0xff]
        %v4504 = vld [vmem:[%s4461 + $0x150] sm:$0xff]
        %v4505 = vld [vmem:[%s4461 + $0x158] sm:$0xff]
        %v4506 = vld [vmem:[%s4461 + $0x160] sm:$0xff]
        %v4507 = vld [vmem:[%s4461 + $0x168] sm:$0xff]
        %v4508 = vld [vmem:[%s4461 + $0x170] sm:$0xff]
        %v4509 = vld [vmem:[%s4461 + $0x178] sm:$0xff]
        %v4510 = vld [vmem:[%s4461 + $0x180] sm:$0xff]
        %v4511 = vld [vmem:[%s4461 + $0x188] sm:$0xff]
        %v4512 = vld [vmem:[%s4461 + $0x190] sm:$0xff]
        %v4513 = vld [vmem:[%s4461 + $0x198] sm:$0xff]
        %v4514 = vld [vmem:[%s4461 + $0x1a0] sm:$0xff]
        %v4515 = vld [vmem:[%s4461 + $0x1a8] sm:$0xff]
        %v4516 = vld [vmem:[%s4461 + $0x1b0] sm:$0xff]
        %v4517 = vld [vmem:[%s4461 + $0x1b8] sm:$0xff]
        %v4518 = vld [vmem:[%s4461 + $0x1c0] sm:$0xff]
        %v4519 = vld [vmem:[%s4461 + $0x1c8] sm:$0xff]
        %v4520 = vld [vmem:[%s4461 + $0x1d0] sm:$0xff]
        %v4521 = vld [vmem:[%s4461 + $0x1d8] sm:$0xff]
        %v4522 = vld [vmem:[%s4461 + $0x1e0] sm:$0xff]
        %v4523 = vld [vmem:[%s4461 + $0x1e8] sm:$0xff]
        %v4524 = vld [vmem:[%s4461 + $0x1f0] sm:$0xff]
        %v4525 = vld [vmem:[%s4461 + $0x1f8] sm:$0xff]
        %s4526 = scalar_lea.vmem %s1, 32
        %v4527 = vld [vmem:[%s4526] sm:$0xf]
        %v4529 = vsel %vm434, %v4462, 0
        %v4532 = vsel %vm434, %v4463, 0
        %v4535 = vsel %vm434, %v4464, 0
        %v4538 = vsel %vm434, %v4465, 0
        %v4541 = vsel %vm434, %v4466, 0
        %v4544 = vsel %vm434, %v4467, 0
        %v4547 = vsel %vm434, %v4468, 0
        %v4550 = vsel %vm434, %v4469, 0
        %v4553 = vsel %vm434, %v4470, 0
        %v4556 = vsel %vm434, %v4471, 0
        %v4559 = vsel %vm434, %v4472, 0
        %v4562 = vsel %vm434, %v4473, 0
        %v4565 = vsel %vm434, %v4474, 0
        %v4568 = vsel %vm434, %v4475, 0
        %v4571 = vsel %vm434, %v4476, 0
        %v4574 = vsel %vm434, %v4477, 0
        %v4577 = vsel %vm434, %v4478, 0
        %v4580 = vsel %vm434, %v4479, 0
        %v4583 = vsel %vm434, %v4480, 0
        %v4586 = vsel %vm434, %v4481, 0
        %v4589 = vsel %vm434, %v4482, 0
        %v4592 = vsel %vm434, %v4483, 0
        %v4595 = vsel %vm434, %v4484, 0
        %v4598 = vsel %vm434, %v4485, 0
        %v4601 = vsel %vm434, %v4486, 0
        %v4604 = vsel %vm434, %v4487, 0
        %v4607 = vsel %vm434, %v4488, 0
        %v4610 = vsel %vm434, %v4489, 0
        %v4613 = vsel %vm434, %v4490, 0
        %v4616 = vsel %vm434, %v4491, 0
        %v4619 = vsel %vm434, %v4492, 0
        %v4622 = vsel %vm434, %v4493, 0
        %v4625 = vsel %vm434, %v4494, 0
        %v4628 = vsel %vm434, %v4495, 0
        %v4631 = vsel %vm434, %v4496, 0
        %v4634 = vsel %vm434, %v4497, 0
        %v4637 = vsel %vm434, %v4498, 0
        %v4640 = vsel %vm434, %v4499, 0
        %v4643 = vsel %vm434, %v4500, 0
        %v4646 = vsel %vm434, %v4501, 0
        %v4649 = vsel %vm434, %v4502, 0
        %v4652 = vsel %vm434, %v4503, 0
        %v4655 = vsel %vm434, %v4504, 0
        %v4658 = vsel %vm434, %v4505, 0
        %v4661 = vsel %vm434, %v4506, 0
        %v4664 = vsel %vm434, %v4507, 0
        %v4667 = vsel %vm434, %v4508, 0
        %v4670 = vsel %vm434, %v4509, 0
        %v4673 = vsel %vm434, %v4510, 0
        %v4676 = vsel %vm434, %v4511, 0
        %v4679 = vsel %vm434, %v4512, 0
        %v4682 = vsel %vm434, %v4513, 0
        %v4685 = vsel %vm434, %v4514, 0
        %v4688 = vsel %vm434, %v4515, 0
        %v4691 = vsel %vm434, %v4516, 0
        %v4694 = vsel %vm434, %v4517, 0
        %v4697 = vsel %vm434, %v4518, 0
        %v4700 = vsel %vm434, %v4519, 0
        %v4703 = vsel %vm434, %v4520, 0
        %v4706 = vsel %vm434, %v4521, 0
        %v4709 = vsel %vm434, %v4522, 0
        %v4712 = vsel %vm434, %v4523, 0
        %v4715 = vsel %vm434, %v4524, 0
        %v4718 = vsel %vm434, %v4525, 0
        %v4721 = vsel %vm627, %v4527, 0
        %4723 = vmatpush.msra.mxu0 0.0
        %4724 = vmatpush.msra.mxu0 0.0
        %4725 = vmatpush.msra.mxu0 0.0
        %4726 = vmatpush.msra.mxu0 0.0
        %4727 = vmatpush.msra.mxu0 0.0
        %4728 = vmatpush.msra.mxu0 0.0
        %4729 = vmatpush.msra.mxu0 0.0
        %4730 = vmatpush.msra.mxu0 0.0
        %4731 = vmatpush.msra.mxu0 0.0
        %4732 = vmatpush.msra.mxu0 0.0
        %4733 = vmatpush.msra.mxu0 0.0
        %4734 = vmatpush.msra.mxu0 0.0
        %4735 = vmatpush.msra.mxu0 0.0
        %4736 = vmatpush.msra.mxu0 0.0
        %4737 = vmatpush.msra.mxu0 0.0
        %4738 = vmatpush.msra.mxu0 %v4721
        %4739 = vmatmul.f32.gmra.mxu0 %v4529
        %v4740 = vpop.f32.mrf.mxu0
        %v4741 = vadd.f32 0.0, %v4740
        %4742 = vmatmul.f32.gmra.mxu0 %v4532
        %v4743 = vpop.f32.mrf.mxu0
        %v4744 = vadd.f32 0.0, %v4743
        %4745 = vmatmul.f32.gmra.mxu0 %v4535
        %v4746 = vpop.f32.mrf.mxu0
        %v4747 = vadd.f32 0.0, %v4746
        %4748 = vmatmul.f32.gmra.mxu0 %v4538
        %v4749 = vpop.f32.mrf.mxu0
        %v4750 = vadd.f32 0.0, %v4749
        %4751 = vmatmul.f32.gmra.mxu0 %v4541
        %v4752 = vpop.f32.mrf.mxu0
        %v4753 = vadd.f32 0.0, %v4752
        %4754 = vmatmul.f32.gmra.mxu0 %v4544
        %v4755 = vpop.f32.mrf.mxu0
        %v4756 = vadd.f32 0.0, %v4755
        %4757 = vmatmul.f32.gmra.mxu0 %v4547
        %v4758 = vpop.f32.mrf.mxu0
        %v4759 = vadd.f32 0.0, %v4758
        %4760 = vmatmul.f32.gmra.mxu0 %v4550
        %v4761 = vpop.f32.mrf.mxu0
        %v4762 = vadd.f32 0.0, %v4761
        %4763 = vmatmul.f32.gmra.mxu0 %v4553
        %v4764 = vpop.f32.mrf.mxu0
        %v4765 = vadd.f32 0.0, %v4764
        %4766 = vmatmul.f32.gmra.mxu0 %v4556
        %v4767 = vpop.f32.mrf.mxu0
        %v4768 = vadd.f32 0.0, %v4767
        %4769 = vmatmul.f32.gmra.mxu0 %v4559
        %v4770 = vpop.f32.mrf.mxu0
        %v4771 = vadd.f32 0.0, %v4770
        %4772 = vmatmul.f32.gmra.mxu0 %v4562
        %v4773 = vpop.f32.mrf.mxu0
        %v4774 = vadd.f32 0.0, %v4773
        %4775 = vmatmul.f32.gmra.mxu0 %v4565
        %v4776 = vpop.f32.mrf.mxu0
        %v4777 = vadd.f32 0.0, %v4776
        %4778 = vmatmul.f32.gmra.mxu0 %v4568
        %v4779 = vpop.f32.mrf.mxu0
        %v4780 = vadd.f32 0.0, %v4779
        %4781 = vmatmul.f32.gmra.mxu0 %v4571
        %v4782 = vpop.f32.mrf.mxu0
        %v4783 = vadd.f32 0.0, %v4782
        %4784 = vmatmul.f32.gmra.mxu0 %v4574
        %v4785 = vpop.f32.mrf.mxu0
        %v4786 = vadd.f32 0.0, %v4785
        %4787 = vmatmul.f32.gmra.mxu0 %v4577
        %v4788 = vpop.f32.mrf.mxu0
        %v4789 = vadd.f32 0.0, %v4788
        %4790 = vmatmul.f32.gmra.mxu0 %v4580
        %v4791 = vpop.f32.mrf.mxu0
        %v4792 = vadd.f32 0.0, %v4791
        %4793 = vmatmul.f32.gmra.mxu0 %v4583
        %v4794 = vpop.f32.mrf.mxu0
        %v4795 = vadd.f32 0.0, %v4794
        %4796 = vmatmul.f32.gmra.mxu0 %v4586
        %v4797 = vpop.f32.mrf.mxu0
        %v4798 = vadd.f32 0.0, %v4797
        %4799 = vmatmul.f32.gmra.mxu0 %v4589
        %v4800 = vpop.f32.mrf.mxu0
        %v4801 = vadd.f32 0.0, %v4800
        %4802 = vmatmul.f32.gmra.mxu0 %v4592
        %v4803 = vpop.f32.mrf.mxu0
        %v4804 = vadd.f32 0.0, %v4803
        %4805 = vmatmul.f32.gmra.mxu0 %v4595
        %v4806 = vpop.f32.mrf.mxu0
        %v4807 = vadd.f32 0.0, %v4806
        %4808 = vmatmul.f32.gmra.mxu0 %v4598
        %v4809 = vpop.f32.mrf.mxu0
        %v4810 = vadd.f32 0.0, %v4809
        %4811 = vmatmul.f32.gmra.mxu0 %v4601
        %v4812 = vpop.f32.mrf.mxu0
        %v4813 = vadd.f32 0.0, %v4812
        %4814 = vmatmul.f32.gmra.mxu0 %v4604
        %v4815 = vpop.f32.mrf.mxu0
        %v4816 = vadd.f32 0.0, %v4815
        %4817 = vmatmul.f32.gmra.mxu0 %v4607
        %v4818 = vpop.f32.mrf.mxu0
        %v4819 = vadd.f32 0.0, %v4818
        %4820 = vmatmul.f32.gmra.mxu0 %v4610
        %v4821 = vpop.f32.mrf.mxu0
        %v4822 = vadd.f32 0.0, %v4821
        %4823 = vmatmul.f32.gmra.mxu0 %v4613
        %v4824 = vpop.f32.mrf.mxu0
        %v4825 = vadd.f32 0.0, %v4824
        %4826 = vmatmul.f32.gmra.mxu0 %v4616
        %v4827 = vpop.f32.mrf.mxu0
        %v4828 = vadd.f32 0.0, %v4827
        %4829 = vmatmul.f32.gmra.mxu0 %v4619
        %v4830 = vpop.f32.mrf.mxu0
        %v4831 = vadd.f32 0.0, %v4830
        %4832 = vmatmul.f32.gmra.mxu0 %v4622
        %v4833 = vpop.f32.mrf.mxu0
        %v4834 = vadd.f32 0.0, %v4833
        %4835 = vmatmul.f32.gmra.mxu0 %v4625
        %v4836 = vpop.f32.mrf.mxu0
        %v4837 = vadd.f32 0.0, %v4836
        %4838 = vmatmul.f32.gmra.mxu0 %v4628
        %v4839 = vpop.f32.mrf.mxu0
        %v4840 = vadd.f32 0.0, %v4839
        %4841 = vmatmul.f32.gmra.mxu0 %v4631
        %v4842 = vpop.f32.mrf.mxu0
        %v4843 = vadd.f32 0.0, %v4842
        %4844 = vmatmul.f32.gmra.mxu0 %v4634
        %v4845 = vpop.f32.mrf.mxu0
        %v4846 = vadd.f32 0.0, %v4845
        %4847 = vmatmul.f32.gmra.mxu0 %v4637
        %v4848 = vpop.f32.mrf.mxu0
        %v4849 = vadd.f32 0.0, %v4848
        %4850 = vmatmul.f32.gmra.mxu0 %v4640
        %v4851 = vpop.f32.mrf.mxu0
        %v4852 = vadd.f32 0.0, %v4851
        %4853 = vmatmul.f32.gmra.mxu0 %v4643
        %v4854 = vpop.f32.mrf.mxu0
        %v4855 = vadd.f32 0.0, %v4854
        %4856 = vmatmul.f32.gmra.mxu0 %v4646
        %v4857 = vpop.f32.mrf.mxu0
        %v4858 = vadd.f32 0.0, %v4857
        %4859 = vmatmul.f32.gmra.mxu0 %v4649
        %v4860 = vpop.f32.mrf.mxu0
        %v4861 = vadd.f32 0.0, %v4860
        %4862 = vmatmul.f32.gmra.mxu0 %v4652
        %v4863 = vpop.f32.mrf.mxu0
        %v4864 = vadd.f32 0.0, %v4863
        %4865 = vmatmul.f32.gmra.mxu0 %v4655
        %v4866 = vpop.f32.mrf.mxu0
        %v4867 = vadd.f32 0.0, %v4866
        %4868 = vmatmul.f32.gmra.mxu0 %v4658
        %v4869 = vpop.f32.mrf.mxu0
        %v4870 = vadd.f32 0.0, %v4869
        %4871 = vmatmul.f32.gmra.mxu0 %v4661
        %v4872 = vpop.f32.mrf.mxu0
        %v4873 = vadd.f32 0.0, %v4872
        %4874 = vmatmul.f32.gmra.mxu0 %v4664
        %v4875 = vpop.f32.mrf.mxu0
        %v4876 = vadd.f32 0.0, %v4875
        %4877 = vmatmul.f32.gmra.mxu0 %v4667
        %v4878 = vpop.f32.mrf.mxu0
        %v4879 = vadd.f32 0.0, %v4878
        %4880 = vmatmul.f32.gmra.mxu0 %v4670
        %v4881 = vpop.f32.mrf.mxu0
        %v4882 = vadd.f32 0.0, %v4881
        %4883 = vmatmul.f32.gmra.mxu0 %v4673
        %v4884 = vpop.f32.mrf.mxu0
        %v4885 = vadd.f32 0.0, %v4884
        %4886 = vmatmul.f32.gmra.mxu0 %v4676
        %v4887 = vpop.f32.mrf.mxu0
        %v4888 = vadd.f32 0.0, %v4887
        %4889 = vmatmul.f32.gmra.mxu0 %v4679
        %v4890 = vpop.f32.mrf.mxu0
        %v4891 = vadd.f32 0.0, %v4890
        %4892 = vmatmul.f32.gmra.mxu0 %v4682
        %v4893 = vpop.f32.mrf.mxu0
        %v4894 = vadd.f32 0.0, %v4893
        %4895 = vmatmul.f32.gmra.mxu0 %v4685
        %v4896 = vpop.f32.mrf.mxu0
        %v4897 = vadd.f32 0.0, %v4896
        %4898 = vmatmul.f32.gmra.mxu0 %v4688
        %v4899 = vpop.f32.mrf.mxu0
        %v4900 = vadd.f32 0.0, %v4899
        %4901 = vmatmul.f32.gmra.mxu0 %v4691
        %v4902 = vpop.f32.mrf.mxu0
        %v4903 = vadd.f32 0.0, %v4902
        %4904 = vmatmul.f32.gmra.mxu0 %v4694
        %v4905 = vpop.f32.mrf.mxu0
        %v4906 = vadd.f32 0.0, %v4905
        %4907 = vmatmul.f32.gmra.mxu0 %v4697
        %v4908 = vpop.f32.mrf.mxu0
        %v4909 = vadd.f32 0.0, %v4908
        %4910 = vmatmul.f32.gmra.mxu0 %v4700
        %v4911 = vpop.f32.mrf.mxu0
        %v4912 = vadd.f32 0.0, %v4911
        %4913 = vmatmul.f32.gmra.mxu0 %v4703
        %v4914 = vpop.f32.mrf.mxu0
        %v4915 = vadd.f32 0.0, %v4914
        %4916 = vmatmul.f32.gmra.mxu0 %v4706
        %v4917 = vpop.f32.mrf.mxu0
        %v4918 = vadd.f32 0.0, %v4917
        %4919 = vmatmul.f32.gmra.mxu0 %v4709
        %v4920 = vpop.f32.mrf.mxu0
        %v4921 = vadd.f32 0.0, %v4920
        %4922 = vmatmul.f32.gmra.mxu0 %v4712
        %v4923 = vpop.f32.mrf.mxu0
        %v4924 = vadd.f32 0.0, %v4923
        %4925 = vmatmul.f32.gmra.mxu0 %v4715
        %v4926 = vpop.f32.mrf.mxu0
        %v4927 = vadd.f32 0.0, %v4926
        %4928 = vmatmul.f32.gmra.mxu0 %v4718
        %v4929 = vpop.f32.mrf.mxu0
        %v4930 = vadd.f32 0.0, %v4929
        %4931 = vdwg.mxu0
        %v4932 = vadd.f32 %v4396, %v4741
        %v4933 = vadd.f32 %v4397, %v4744
        %v4934 = vadd.f32 %v4398, %v4747
        %v4935 = vadd.f32 %v4399, %v4750
        %v4936 = vadd.f32 %v4400, %v4753
        %v4937 = vadd.f32 %v4401, %v4756
        %v4938 = vadd.f32 %v4402, %v4759
        %v4939 = vadd.f32 %v4403, %v4762
        %v4940 = vadd.f32 %v4404, %v4765
        %v4941 = vadd.f32 %v4405, %v4768
        %v4942 = vadd.f32 %v4406, %v4771
        %v4943 = vadd.f32 %v4407, %v4774
        %v4944 = vadd.f32 %v4408, %v4777
        %v4945 = vadd.f32 %v4409, %v4780
        %v4946 = vadd.f32 %v4410, %v4783
        %v4947 = vadd.f32 %v4411, %v4786
        %v4948 = vadd.f32 %v4412, %v4789
        %v4949 = vadd.f32 %v4413, %v4792
        %v4950 = vadd.f32 %v4414, %v4795
        %v4951 = vadd.f32 %v4415, %v4798
        %v4952 = vadd.f32 %v4416, %v4801
        %v4953 = vadd.f32 %v4417, %v4804
        %v4954 = vadd.f32 %v4418, %v4807
        %v4955 = vadd.f32 %v4419, %v4810
        %v4956 = vadd.f32 %v4420, %v4813
        %v4957 = vadd.f32 %v4421, %v4816
        %v4958 = vadd.f32 %v4422, %v4819
        %v4959 = vadd.f32 %v4423, %v4822
        %v4960 = vadd.f32 %v4424, %v4825
        %v4961 = vadd.f32 %v4425, %v4828
        %v4962 = vadd.f32 %v4426, %v4831
        %v4963 = vadd.f32 %v4427, %v4834
        %v4964 = vadd.f32 %v4428, %v4837
        %v4965 = vadd.f32 %v4429, %v4840
        %v4966 = vadd.f32 %v4430, %v4843
        %v4967 = vadd.f32 %v4431, %v4846
        %v4968 = vadd.f32 %v4432, %v4849
        %v4969 = vadd.f32 %v4433, %v4852
        %v4970 = vadd.f32 %v4434, %v4855
        %v4971 = vadd.f32 %v4435, %v4858
        %v4972 = vadd.f32 %v4436, %v4861
        %v4973 = vadd.f32 %v4437, %v4864
        %v4974 = vadd.f32 %v4438, %v4867
        %v4975 = vadd.f32 %v4439, %v4870
        %v4976 = vadd.f32 %v4440, %v4873
        %v4977 = vadd.f32 %v4441, %v4876
        %v4978 = vadd.f32 %v4442, %v4879
        %v4979 = vadd.f32 %v4443, %v4882
        %v4980 = vadd.f32 %v4444, %v4885
        %v4981 = vadd.f32 %v4445, %v4888
        %v4982 = vadd.f32 %v4446, %v4891
        %v4983 = vadd.f32 %v4447, %v4894
        %v4984 = vadd.f32 %v4448, %v4897
        %v4985 = vadd.f32 %v4449, %v4900
        %v4986 = vadd.f32 %v4450, %v4903
        %v4987 = vadd.f32 %v4451, %v4906
        %v4988 = vadd.f32 %v4452, %v4909
        %v4989 = vadd.f32 %v4453, %v4912
        %v4990 = vadd.f32 %v4454, %v4915
        %v4991 = vadd.f32 %v4455, %v4918
        %v4992 = vadd.f32 %v4456, %v4921
        %v4993 = vadd.f32 %v4457, %v4924
        %v4994 = vadd.f32 %v4458, %v4927
        %v4995 = vadd.f32 %v4459, %v4930
        %v4996 = vld [vmem:[%s2] sm:$0x1]
        %v4998 = vperm.slane %v4996, 0
        %v5000 = vadd.f32 %v4932, %v4998
        %v5001 = vadd.f32 %v4933, %v4998
        %v5002 = vadd.f32 %v4934, %v4998
        %v5003 = vadd.f32 %v4935, %v4998
        %v5004 = vadd.f32 %v4936, %v4998
        %v5005 = vadd.f32 %v4937, %v4998
        %v5006 = vadd.f32 %v4938, %v4998
        %v5007 = vadd.f32 %v4939, %v4998
        %v5008 = vadd.f32 %v4940, %v4998
        %v5009 = vadd.f32 %v4941, %v4998
        %v5010 = vadd.f32 %v4942, %v4998
        %v5011 = vadd.f32 %v4943, %v4998
        %v5012 = vadd.f32 %v4944, %v4998
        %v5013 = vadd.f32 %v4945, %v4998
        %v5014 = vadd.f32 %v4946, %v4998
        %v5015 = vadd.f32 %v4947, %v4998
        %v5016 = vadd.f32 %v4948, %v4998
        %v5017 = vadd.f32 %v4949, %v4998
        %v5018 = vadd.f32 %v4950, %v4998
        %v5019 = vadd.f32 %v4951, %v4998
        %v5020 = vadd.f32 %v4952, %v4998
        %v5021 = vadd.f32 %v4953, %v4998
        %v5022 = vadd.f32 %v4954, %v4998
        %v5023 = vadd.f32 %v4955, %v4998
        %v5024 = vadd.f32 %v4956, %v4998
        %v5025 = vadd.f32 %v4957, %v4998
        %v5026 = vadd.f32 %v4958, %v4998
        %v5027 = vadd.f32 %v4959, %v4998
        %v5028 = vadd.f32 %v4960, %v4998
        %v5029 = vadd.f32 %v4961, %v4998
        %v5030 = vadd.f32 %v4962, %v4998
        %v5031 = vadd.f32 %v4963, %v4998
        %v5032 = vadd.f32 %v4964, %v4998
        %v5033 = vadd.f32 %v4965, %v4998
        %v5034 = vadd.f32 %v4966, %v4998
        %v5035 = vadd.f32 %v4967, %v4998
        %v5036 = vadd.f32 %v4968, %v4998
        %v5037 = vadd.f32 %v4969, %v4998
        %v5038 = vadd.f32 %v4970, %v4998
        %v5039 = vadd.f32 %v4971, %v4998
        %v5040 = vadd.f32 %v4972, %v4998
        %v5041 = vadd.f32 %v4973, %v4998
        %v5042 = vadd.f32 %v4974, %v4998
        %v5043 = vadd.f32 %v4975, %v4998
        %v5044 = vadd.f32 %v4976, %v4998
        %v5045 = vadd.f32 %v4977, %v4998
        %v5046 = vadd.f32 %v4978, %v4998
        %v5047 = vadd.f32 %v4979, %v4998
        %v5048 = vadd.f32 %v4980, %v4998
        %v5049 = vadd.f32 %v4981, %v4998
        %v5050 = vadd.f32 %v4982, %v4998
        %v5051 = vadd.f32 %v4983, %v4998
        %v5052 = vadd.f32 %v4984, %v4998
        %v5053 = vadd.f32 %v4985, %v4998
        %v5054 = vadd.f32 %v4986, %v4998
        %v5055 = vadd.f32 %v4987, %v4998
        %v5056 = vadd.f32 %v4988, %v4998
        %v5057 = vadd.f32 %v4989, %v4998
        %v5058 = vadd.f32 %v4990, %v4998
        %v5059 = vadd.f32 %v4991, %v4998
        %v5060 = vadd.f32 %v4992, %v4998
        %v5061 = vadd.f32 %v4993, %v4998
        %v5062 = vadd.f32 %v4994, %v4998
        %v5063 = vadd.f32 %v4995, %v4998
        %vm5064 = vcmask 64512
        %5065 = vst.msk [vmem:[%s295] sm:$0xff] %vm5064, %v5000
        %5066 = vst.msk [vmem:[%s295 + $0x8] sm:$0xff] %vm5064, %v5001
        %5067 = vst.msk [vmem:[%s295 + $0x10] sm:$0xff] %vm5064, %v5002
        %5068 = vst.msk [vmem:[%s295 + $0x18] sm:$0xff] %vm5064, %v5003
        %5069 = vst.msk [vmem:[%s295 + $0x20] sm:$0xff] %vm5064, %v5004
        %5070 = vst.msk [vmem:[%s295 + $0x28] sm:$0xff] %vm5064, %v5005
        %5071 = vst.msk [vmem:[%s295 + $0x30] sm:$0xff] %vm5064, %v5006
        %5072 = vst.msk [vmem:[%s295 + $0x38] sm:$0xff] %vm5064, %v5007
        %5073 = vst.msk [vmem:[%s295 + $0x40] sm:$0xff] %vm5064, %v5008
        %5074 = vst.msk [vmem:[%s295 + $0x48] sm:$0xff] %vm5064, %v5009
        %5075 = vst.msk [vmem:[%s295 + $0x50] sm:$0xff] %vm5064, %v5010
        %5076 = vst.msk [vmem:[%s295 + $0x58] sm:$0xff] %vm5064, %v5011
        %5077 = vst.msk [vmem:[%s295 + $0x60] sm:$0xff] %vm5064, %v5012
        %5078 = vst.msk [vmem:[%s295 + $0x68] sm:$0xff] %vm5064, %v5013
        %5079 = vst.msk [vmem:[%s295 + $0x70] sm:$0xff] %vm5064, %v5014
        %5080 = vst.msk [vmem:[%s295 + $0x78] sm:$0xff] %vm5064, %v5015
        %5081 = vst.msk [vmem:[%s295 + $0x80] sm:$0xff] %vm5064, %v5016
        %5082 = vst.msk [vmem:[%s295 + $0x88] sm:$0xff] %vm5064, %v5017
        %5083 = vst.msk [vmem:[%s295 + $0x90] sm:$0xff] %vm5064, %v5018
        %5084 = vst.msk [vmem:[%s295 + $0x98] sm:$0xff] %vm5064, %v5019
        %5085 = vst.msk [vmem:[%s295 + $0xa0] sm:$0xff] %vm5064, %v5020
        %5086 = vst.msk [vmem:[%s295 + $0xa8] sm:$0xff] %vm5064, %v5021
        %5087 = vst.msk [vmem:[%s295 + $0xb0] sm:$0xff] %vm5064, %v5022
        %5088 = vst.msk [vmem:[%s295 + $0xb8] sm:$0xff] %vm5064, %v5023
        %5089 = vst.msk [vmem:[%s295 + $0xc0] sm:$0xff] %vm5064, %v5024
        %5090 = vst.msk [vmem:[%s295 + $0xc8] sm:$0xff] %vm5064, %v5025
        %5091 = vst.msk [vmem:[%s295 + $0xd0] sm:$0xff] %vm5064, %v5026
        %5092 = vst.msk [vmem:[%s295 + $0xd8] sm:$0xff] %vm5064, %v5027
        %5093 = vst.msk [vmem:[%s295 + $0xe0] sm:$0xff] %vm5064, %v5028
        %5094 = vst.msk [vmem:[%s295 + $0xe8] sm:$0xff] %vm5064, %v5029
        %5095 = vst.msk [vmem:[%s295 + $0xf0] sm:$0xff] %vm5064, %v5030
        %5096 = vst.msk [vmem:[%s295 + $0xf8] sm:$0xff] %vm5064, %v5031
        %5097 = vst.msk [vmem:[%s295 + $0x100] sm:$0xff] %vm5064, %v5032
        %5098 = vst.msk [vmem:[%s295 + $0x108] sm:$0xff] %vm5064, %v5033
        %5099 = vst.msk [vmem:[%s295 + $0x110] sm:$0xff] %vm5064, %v5034
        %5100 = vst.msk [vmem:[%s295 + $0x118] sm:$0xff] %vm5064, %v5035
        %5101 = vst.msk [vmem:[%s295 + $0x120] sm:$0xff] %vm5064, %v5036
        %5102 = vst.msk [vmem:[%s295 + $0x128] sm:$0xff] %vm5064, %v5037
        %5103 = vst.msk [vmem:[%s295 + $0x130] sm:$0xff] %vm5064, %v5038
        %5104 = vst.msk [vmem:[%s295 + $0x138] sm:$0xff] %vm5064, %v5039
        %5105 = vst.msk [vmem:[%s295 + $0x140] sm:$0xff] %vm5064, %v5040
        %5106 = vst.msk [vmem:[%s295 + $0x148] sm:$0xff] %vm5064, %v5041
        %5107 = vst.msk [vmem:[%s295 + $0x150] sm:$0xff] %vm5064, %v5042
        %5108 = vst.msk [vmem:[%s295 + $0x158] sm:$0xff] %vm5064, %v5043
        %5109 = vst.msk [vmem:[%s295 + $0x160] sm:$0xff] %vm5064, %v5044
        %5110 = vst.msk [vmem:[%s295 + $0x168] sm:$0xff] %vm5064, %v5045
        %5111 = vst.msk [vmem:[%s295 + $0x170] sm:$0xff] %vm5064, %v5046
        %5112 = vst.msk [vmem:[%s295 + $0x178] sm:$0xff] %vm5064, %v5047
        %5113 = vst.msk [vmem:[%s295 + $0x180] sm:$0xff] %vm5064, %v5048
        %5114 = vst.msk [vmem:[%s295 + $0x188] sm:$0xff] %vm5064, %v5049
        %5115 = vst.msk [vmem:[%s295 + $0x190] sm:$0xff] %vm5064, %v5050
        %5116 = vst.msk [vmem:[%s295 + $0x198] sm:$0xff] %vm5064, %v5051
        %5117 = vst.msk [vmem:[%s295 + $0x1a0] sm:$0xff] %vm5064, %v5052
        %5118 = vst.msk [vmem:[%s295 + $0x1a8] sm:$0xff] %vm5064, %v5053
        %5119 = vst.msk [vmem:[%s295 + $0x1b0] sm:$0xff] %vm5064, %v5054
        %5120 = vst.msk [vmem:[%s295 + $0x1b8] sm:$0xff] %vm5064, %v5055
        %5121 = vst.msk [vmem:[%s295 + $0x1c0] sm:$0xff] %vm5064, %v5056
        %5122 = vst.msk [vmem:[%s295 + $0x1c8] sm:$0xff] %vm5064, %v5057
        %5123 = vst.msk [vmem:[%s295 + $0x1d0] sm:$0xff] %vm5064, %v5058
        %5124 = vst.msk [vmem:[%s295 + $0x1d8] sm:$0xff] %vm5064, %v5059
        %5125 = vst.msk [vmem:[%s295 + $0x1e0] sm:$0xff] %vm5064, %v5060
        %5126 = vst.msk [vmem:[%s295 + $0x1e8] sm:$0xff] %vm5064, %v5061
        %5127 = vst.msk [vmem:[%s295 + $0x1f0] sm:$0xff] %vm5064, %v5062
        %5128 = vst.msk [vmem:[%s295 + $0x1f8] sm:$0xff] %vm5064, %v5063
        %p5129 = scmp.eq.s32.totalorder %s29, 0
        // Predicated region
        $region37: #{tpu_custom_call.1} parent=35 // pred_check
          %p5130 = pneg %p5129
        $region38: #{tpu_custom_call.1} parent=35 // pred_check_branch
          %5132 = sbr.rel (%p5130) target = $region40
        $region39: #{tpu_custom_call.1} parent=35 // pred_region
          %vm5133 = vcmask 57344
          %5134 = vst.msk [vmem:[%s275] sm:$0x1] %vm5133, 0.0
          %5135 = vst.msk [vmem:[%s281] sm:$0x1] %vm5133, 0.0
        $region40: #{tpu_custom_call.1} parent=35 // pred_fallthru
          _
        %v5136 = vld [vmem:[%s287] sm:$0xff]
        %v5137 = vld [vmem:[%s287 + $0x8] sm:$0xff]
        %v5138 = vld [vmem:[%s287 + $0x10] sm:$0xff]
        %v5139 = vld [vmem:[%s287 + $0x18] sm:$0xff]
        %v5140 = vld [vmem:[%s287 + $0x20] sm:$0xff]
        %v5141 = vld [vmem:[%s287 + $0x28] sm:$0xff]
        %v5142 = vld [vmem:[%s287 + $0x30] sm:$0xff]
        %v5143 = vld [vmem:[%s287 + $0x38] sm:$0xff]
        %v5144 = vld [vmem:[%s287 + $0x40] sm:$0xff]
        %v5145 = vld [vmem:[%s287 + $0x48] sm:$0xff]
        %v5146 = vld [vmem:[%s287 + $0x50] sm:$0xff]
        %v5147 = vld [vmem:[%s287 + $0x58] sm:$0xff]
        %v5148 = vld [vmem:[%s287 + $0x60] sm:$0xff]
        %v5149 = vld [vmem:[%s287 + $0x68] sm:$0xff]
        %v5150 = vld [vmem:[%s287 + $0x70] sm:$0xff]
        %v5151 = vld [vmem:[%s287 + $0x78] sm:$0xff]
        %v5152 = vld [vmem:[%s287 + $0x80] sm:$0xff]
        %v5153 = vld [vmem:[%s287 + $0x88] sm:$0xff]
        %v5154 = vld [vmem:[%s287 + $0x90] sm:$0xff]
        %v5155 = vld [vmem:[%s287 + $0x98] sm:$0xff]
        %v5156 = vld [vmem:[%s287 + $0xa0] sm:$0xff]
        %v5157 = vld [vmem:[%s287 + $0xa8] sm:$0xff]
        %v5158 = vld [vmem:[%s287 + $0xb0] sm:$0xff]
        %v5159 = vld [vmem:[%s287 + $0xb8] sm:$0xff]
        %v5160 = vld [vmem:[%s287 + $0xc0] sm:$0xff]
        %v5161 = vld [vmem:[%s287 + $0xc8] sm:$0xff]
        %v5162 = vld [vmem:[%s287 + $0xd0] sm:$0xff]
        %v5163 = vld [vmem:[%s287 + $0xd8] sm:$0xff]
        %v5164 = vld [vmem:[%s287 + $0xe0] sm:$0xff]
        %v5165 = vld [vmem:[%s287 + $0xe8] sm:$0xff]
        %v5166 = vld [vmem:[%s287 + $0xf0] sm:$0xff]
        %v5167 = vld [vmem:[%s287 + $0xf8] sm:$0xff]
        %v5168 = vld [vmem:[%s287 + $0x100] sm:$0xff]
        %v5169 = vld [vmem:[%s287 + $0x108] sm:$0xff]
        %v5170 = vld [vmem:[%s287 + $0x110] sm:$0xff]
        %v5171 = vld [vmem:[%s287 + $0x118] sm:$0xff]
        %v5172 = vld [vmem:[%s287 + $0x120] sm:$0xff]
        %v5173 = vld [vmem:[%s287 + $0x128] sm:$0xff]
        %v5174 = vld [vmem:[%s287 + $0x130] sm:$0xff]
        %v5175 = vld [vmem:[%s287 + $0x138] sm:$0xff]
        %v5176 = vld [vmem:[%s287 + $0x140] sm:$0xff]
        %v5177 = vld [vmem:[%s287 + $0x148] sm:$0xff]
        %v5178 = vld [vmem:[%s287 + $0x150] sm:$0xff]
        %v5179 = vld [vmem:[%s287 + $0x158] sm:$0xff]
        %v5180 = vld [vmem:[%s287 + $0x160] sm:$0xff]
        %v5181 = vld [vmem:[%s287 + $0x168] sm:$0xff]
        %v5182 = vld [vmem:[%s287 + $0x170] sm:$0xff]
        %v5183 = vld [vmem:[%s287 + $0x178] sm:$0xff]
        %v5184 = vld [vmem:[%s287 + $0x180] sm:$0xff]
        %v5185 = vld [vmem:[%s287 + $0x188] sm:$0xff]
        %v5186 = vld [vmem:[%s287 + $0x190] sm:$0xff]
        %v5187 = vld [vmem:[%s287 + $0x198] sm:$0xff]
        %v5188 = vld [vmem:[%s287 + $0x1a0] sm:$0xff]
        %v5189 = vld [vmem:[%s287 + $0x1a8] sm:$0xff]
        %v5190 = vld [vmem:[%s287 + $0x1b0] sm:$0xff]
        %v5191 = vld [vmem:[%s287 + $0x1b8] sm:$0xff]
        %v5192 = vld [vmem:[%s287 + $0x1c0] sm:$0xff]
        %v5193 = vld [vmem:[%s287 + $0x1c8] sm:$0xff]
        %v5194 = vld [vmem:[%s287 + $0x1d0] sm:$0xff]
        %v5195 = vld [vmem:[%s287 + $0x1d8] sm:$0xff]
        %v5196 = vld [vmem:[%s287 + $0x1e0] sm:$0xff]
        %v5197 = vld [vmem:[%s287 + $0x1e8] sm:$0xff]
        %v5198 = vld [vmem:[%s287 + $0x1f0] sm:$0xff]
        %v5199 = vld [vmem:[%s287 + $0x1f8] sm:$0xff]
        %5201 = vset.pattern.permute.xlu0 0
        %5202 = vperm.xlu0 %5201, %v5136
        %v5203 = vpop.permute.xlu0 %5202
        %5206 = vset.pattern.permute.xlu0 0
        %5207 = vperm.xlu0 %5206, %v5137
        %v5208 = vpop.permute.xlu0 %5207
        %5211 = vset.pattern.permute.xlu0 0
        %5212 = vperm.xlu0 %5211, %v5138
        %v5213 = vpop.permute.xlu0 %5212
        %5216 = vset.pattern.permute.xlu0 0
        %5217 = vperm.xlu0 %5216, %v5139
        %v5218 = vpop.permute.xlu0 %5217
        %5221 = vset.pattern.permute.xlu0 0
        %5222 = vperm.xlu0 %5221, %v5140
        %v5223 = vpop.permute.xlu0 %5222
        %5226 = vset.pattern.permute.xlu0 0
        %5227 = vperm.xlu0 %5226, %v5141
        %v5228 = vpop.permute.xlu0 %5227
        %5231 = vset.pattern.permute.xlu0 0
        %5232 = vperm.xlu0 %5231, %v5142
        %v5233 = vpop.permute.xlu0 %5232
        %5236 = vset.pattern.permute.xlu0 0
        %5237 = vperm.xlu0 %5236, %v5143
        %v5238 = vpop.permute.xlu0 %5237
        %5241 = vset.pattern.permute.xlu0 0
        %5242 = vperm.xlu0 %5241, %v5144
        %v5243 = vpop.permute.xlu0 %5242
        %5246 = vset.pattern.permute.xlu0 0
        %5247 = vperm.xlu0 %5246, %v5145
        %v5248 = vpop.permute.xlu0 %5247
        %5251 = vset.pattern.permute.xlu0 0
        %5252 = vperm.xlu0 %5251, %v5146
        %v5253 = vpop.permute.xlu0 %5252
        %5256 = vset.pattern.permute.xlu0 0
        %5257 = vperm.xlu0 %5256, %v5147
        %v5258 = vpop.permute.xlu0 %5257
        %5261 = vset.pattern.permute.xlu0 0
        %5262 = vperm.xlu0 %5261, %v5148
        %v5263 = vpop.permute.xlu0 %5262
        %5266 = vset.pattern.permute.xlu0 0
        %5267 = vperm.xlu0 %5266, %v5149
        %v5268 = vpop.permute.xlu0 %5267
        %5271 = vset.pattern.permute.xlu0 0
        %5272 = vperm.xlu0 %5271, %v5150
        %v5273 = vpop.permute.xlu0 %5272
        %5276 = vset.pattern.permute.xlu0 0
        %5277 = vperm.xlu0 %5276, %v5151
        %v5278 = vpop.permute.xlu0 %5277
        %5281 = vset.pattern.permute.xlu0 0
        %5282 = vperm.xlu0 %5281, %v5152
        %v5283 = vpop.permute.xlu0 %5282
        %5286 = vset.pattern.permute.xlu0 0
        %5287 = vperm.xlu0 %5286, %v5153
        %v5288 = vpop.permute.xlu0 %5287
        %5291 = vset.pattern.permute.xlu0 0
        %5292 = vperm.xlu0 %5291, %v5154
        %v5293 = vpop.permute.xlu0 %5292
        %5296 = vset.pattern.permute.xlu0 0
        %5297 = vperm.xlu0 %5296, %v5155
        %v5298 = vpop.permute.xlu0 %5297
        %5301 = vset.pattern.permute.xlu0 0
        %5302 = vperm.xlu0 %5301, %v5156
        %v5303 = vpop.permute.xlu0 %5302
        %5306 = vset.pattern.permute.xlu0 0
        %5307 = vperm.xlu0 %5306, %v5157
        %v5308 = vpop.permute.xlu0 %5307
        %5311 = vset.pattern.permute.xlu0 0
        %5312 = vperm.xlu0 %5311, %v5158
        %v5313 = vpop.permute.xlu0 %5312
        %5316 = vset.pattern.permute.xlu0 0
        %5317 = vperm.xlu0 %5316, %v5159
        %v5318 = vpop.permute.xlu0 %5317
        %5321 = vset.pattern.permute.xlu0 0
        %5322 = vperm.xlu0 %5321, %v5160
        %v5323 = vpop.permute.xlu0 %5322
        %5326 = vset.pattern.permute.xlu0 0
        %5327 = vperm.xlu0 %5326, %v5161
        %v5328 = vpop.permute.xlu0 %5327
        %5331 = vset.pattern.permute.xlu0 0
        %5332 = vperm.xlu0 %5331, %v5162
        %v5333 = vpop.permute.xlu0 %5332
        %5336 = vset.pattern.permute.xlu0 0
        %5337 = vperm.xlu0 %5336, %v5163
        %v5338 = vpop.permute.xlu0 %5337
        %5341 = vset.pattern.permute.xlu0 0
        %5342 = vperm.xlu0 %5341, %v5164
        %v5343 = vpop.permute.xlu0 %5342
        %5346 = vset.pattern.permute.xlu0 0
        %5347 = vperm.xlu0 %5346, %v5165
        %v5348 = vpop.permute.xlu0 %5347
        %5351 = vset.pattern.permute.xlu0 0
        %5352 = vperm.xlu0 %5351, %v5166
        %v5353 = vpop.permute.xlu0 %5352
        %5356 = vset.pattern.permute.xlu0 0
        %5357 = vperm.xlu0 %5356, %v5167
        %v5358 = vpop.permute.xlu0 %5357
        %5361 = vset.pattern.permute.xlu0 0
        %5362 = vperm.xlu0 %5361, %v5168
        %v5363 = vpop.permute.xlu0 %5362
        %5366 = vset.pattern.permute.xlu0 0
        %5367 = vperm.xlu0 %5366, %v5169
        %v5368 = vpop.permute.xlu0 %5367
        %5371 = vset.pattern.permute.xlu0 0
        %5372 = vperm.xlu0 %5371, %v5170
        %v5373 = vpop.permute.xlu0 %5372
        %5376 = vset.pattern.permute.xlu0 0
        %5377 = vperm.xlu0 %5376, %v5171
        %v5378 = vpop.permute.xlu0 %5377
        %5381 = vset.pattern.permute.xlu0 0
        %5382 = vperm.xlu0 %5381, %v5172
        %v5383 = vpop.permute.xlu0 %5382
        %5386 = vset.pattern.permute.xlu0 0
        %5387 = vperm.xlu0 %5386, %v5173
        %v5388 = vpop.permute.xlu0 %5387
        %5391 = vset.pattern.permute.xlu0 0
        %5392 = vperm.xlu0 %5391, %v5174
        %v5393 = vpop.permute.xlu0 %5392
        %5396 = vset.pattern.permute.xlu0 0
        %5397 = vperm.xlu0 %5396, %v5175
        %v5398 = vpop.permute.xlu0 %5397
        %5401 = vset.pattern.permute.xlu0 0
        %5402 = vperm.xlu0 %5401, %v5176
        %v5403 = vpop.permute.xlu0 %5402
        %5406 = vset.pattern.permute.xlu0 0
        %5407 = vperm.xlu0 %5406, %v5177
        %v5408 = vpop.permute.xlu0 %5407
        %5411 = vset.pattern.permute.xlu0 0
        %5412 = vperm.xlu0 %5411, %v5178
        %v5413 = vpop.permute.xlu0 %5412
        %5416 = vset.pattern.permute.xlu0 0
        %5417 = vperm.xlu0 %5416, %v5179
        %v5418 = vpop.permute.xlu0 %5417
        %5421 = vset.pattern.permute.xlu0 0
        %5422 = vperm.xlu0 %5421, %v5180
        %v5423 = vpop.permute.xlu0 %5422
        %5426 = vset.pattern.permute.xlu0 0
        %5427 = vperm.xlu0 %5426, %v5181
        %v5428 = vpop.permute.xlu0 %5427
        %5431 = vset.pattern.permute.xlu0 0
        %5432 = vperm.xlu0 %5431, %v5182
        %v5433 = vpop.permute.xlu0 %5432
        %5436 = vset.pattern.permute.xlu0 0
        %5437 = vperm.xlu0 %5436, %v5183
        %v5438 = vpop.permute.xlu0 %5437
        %5441 = vset.pattern.permute.xlu0 0
        %5442 = vperm.xlu0 %5441, %v5184
        %v5443 = vpop.permute.xlu0 %5442
        %5446 = vset.pattern.permute.xlu0 0
        %5447 = vperm.xlu0 %5446, %v5185
        %v5448 = vpop.permute.xlu0 %5447
        %5451 = vset.pattern.permute.xlu0 0
        %5452 = vperm.xlu0 %5451, %v5186
        %v5453 = vpop.permute.xlu0 %5452
        %5456 = vset.pattern.permute.xlu0 0
        %5457 = vperm.xlu0 %5456, %v5187
        %v5458 = vpop.permute.xlu0 %5457
        %5461 = vset.pattern.permute.xlu0 0
        %5462 = vperm.xlu0 %5461, %v5188
        %v5463 = vpop.permute.xlu0 %5462
        %5466 = vset.pattern.permute.xlu0 0
        %5467 = vperm.xlu0 %5466, %v5189
        %v5468 = vpop.permute.xlu0 %5467
        %5471 = vset.pattern.permute.xlu0 0
        %5472 = vperm.xlu0 %5471, %v5190
        %v5473 = vpop.permute.xlu0 %5472
        %5476 = vset.pattern.permute.xlu0 0
        %5477 = vperm.xlu0 %5476, %v5191
        %v5478 = vpop.permute.xlu0 %5477
        %5481 = vset.pattern.permute.xlu0 0
        %5482 = vperm.xlu0 %5481, %v5192
        %v5483 = vpop.permute.xlu0 %5482
        %5486 = vset.pattern.permute.xlu0 0
        %5487 = vperm.xlu0 %5486, %v5193
        %v5488 = vpop.permute.xlu0 %5487
        %5491 = vset.pattern.permute.xlu0 0
        %5492 = vperm.xlu0 %5491, %v5194
        %v5493 = vpop.permute.xlu0 %5492
        %5496 = vset.pattern.permute.xlu0 0
        %5497 = vperm.xlu0 %5496, %v5195
        %v5498 = vpop.permute.xlu0 %5497
        %5501 = vset.pattern.permute.xlu0 0
        %5502 = vperm.xlu0 %5501, %v5196
        %v5503 = vpop.permute.xlu0 %5502
        %5506 = vset.pattern.permute.xlu0 0
        %5507 = vperm.xlu0 %5506, %v5197
        %v5508 = vpop.permute.xlu0 %5507
        %5511 = vset.pattern.permute.xlu0 0
        %5512 = vperm.xlu0 %5511, %v5198
        %v5513 = vpop.permute.xlu0 %5512
        %5516 = vset.pattern.permute.xlu0 0
        %5517 = vperm.xlu0 %5516, %v5199
        %v5518 = vpop.permute.xlu0 %5517
        %v5520 = vmul.f32 %v5000, %v5203
        %v5521 = vmul.f32 %v5001, %v5208
        %v5522 = vmul.f32 %v5002, %v5213
        %v5523 = vmul.f32 %v5003, %v5218
        %v5524 = vmul.f32 %v5004, %v5223
        %v5525 = vmul.f32 %v5005, %v5228
        %v5526 = vmul.f32 %v5006, %v5233
        %v5527 = vmul.f32 %v5007, %v5238
        %v5528 = vmul.f32 %v5008, %v5243
        %v5529 = vmul.f32 %v5009, %v5248
        %v5530 = vmul.f32 %v5010, %v5253
        %v5531 = vmul.f32 %v5011, %v5258
        %v5532 = vmul.f32 %v5012, %v5263
        %v5533 = vmul.f32 %v5013, %v5268
        %v5534 = vmul.f32 %v5014, %v5273
        %v5535 = vmul.f32 %v5015, %v5278
        %v5536 = vmul.f32 %v5016, %v5283
        %v5537 = vmul.f32 %v5017, %v5288
        %v5538 = vmul.f32 %v5018, %v5293
        %v5539 = vmul.f32 %v5019, %v5298
        %v5540 = vmul.f32 %v5020, %v5303
        %v5541 = vmul.f32 %v5021, %v5308
        %v5542 = vmul.f32 %v5022, %v5313
        %v5543 = vmul.f32 %v5023, %v5318
        %v5544 = vmul.f32 %v5024, %v5323
        %v5545 = vmul.f32 %v5025, %v5328
        %v5546 = vmul.f32 %v5026, %v5333
        %v5547 = vmul.f32 %v5027, %v5338
        %v5548 = vmul.f32 %v5028, %v5343
        %v5549 = vmul.f32 %v5029, %v5348
        %v5550 = vmul.f32 %v5030, %v5353
        %v5551 = vmul.f32 %v5031, %v5358
        %v5552 = vmul.f32 %v5032, %v5363
        %v5553 = vmul.f32 %v5033, %v5368
        %v5554 = vmul.f32 %v5034, %v5373
        %v5555 = vmul.f32 %v5035, %v5378
        %v5556 = vmul.f32 %v5036, %v5383
        %v5557 = vmul.f32 %v5037, %v5388
        %v5558 = vmul.f32 %v5038, %v5393
        %v5559 = vmul.f32 %v5039, %v5398
        %v5560 = vmul.f32 %v5040, %v5403
        %v5561 = vmul.f32 %v5041, %v5408
        %v5562 = vmul.f32 %v5042, %v5413
        %v5563 = vmul.f32 %v5043, %v5418
        %v5564 = vmul.f32 %v5044, %v5423
        %v5565 = vmul.f32 %v5045, %v5428
        %v5566 = vmul.f32 %v5046, %v5433
        %v5567 = vmul.f32 %v5047, %v5438
        %v5568 = vmul.f32 %v5048, %v5443
        %v5569 = vmul.f32 %v5049, %v5448
        %v5570 = vmul.f32 %v5050, %v5453
        %v5571 = vmul.f32 %v5051, %v5458
        %v5572 = vmul.f32 %v5052, %v5463
        %v5573 = vmul.f32 %v5053, %v5468
        %v5574 = vmul.f32 %v5054, %v5473
        %v5575 = vmul.f32 %v5055, %v5478
        %v5576 = vmul.f32 %v5056, %v5483
        %v5577 = vmul.f32 %v5057, %v5488
        %v5578 = vmul.f32 %v5058, %v5493
        %v5579 = vmul.f32 %v5059, %v5498
        %v5580 = vmul.f32 %v5060, %v5503
        %v5581 = vmul.f32 %v5061, %v5508
        %v5582 = vmul.f32 %v5062, %v5513
        %v5583 = vmul.f32 %v5063, %v5518
        %v5584 = vld [vmem:[%s275] sm:$0x1]
        %v5585 = vsel %vm5064, %v5520, 0.0
        %v5586 = vsel %vm5064, %v5521, 0.0
        %v5587 = vadd.f32 %v5585, %v5586
        %v5588 = vsel %vm5064, %v5522, 0.0
        %v5589 = vadd.f32 %v5587, %v5588
        %v5590 = vsel %vm5064, %v5523, 0.0
        %v5591 = vadd.f32 %v5589, %v5590
        %v5592 = vsel %vm5064, %v5524, 0.0
        %v5593 = vadd.f32 %v5591, %v5592
        %v5594 = vsel %vm5064, %v5525, 0.0
        %v5595 = vadd.f32 %v5593, %v5594
        %v5596 = vsel %vm5064, %v5526, 0.0
        %v5597 = vadd.f32 %v5595, %v5596
        %v5598 = vsel %vm5064, %v5527, 0.0
        %v5599 = vadd.f32 %v5597, %v5598
        %v5600 = vsel %vm5064, %v5528, 0.0
        %v5601 = vadd.f32 %v5599, %v5600
        %v5602 = vsel %vm5064, %v5529, 0.0
        %v5603 = vadd.f32 %v5601, %v5602
        %v5604 = vsel %vm5064, %v5530, 0.0
        %v5605 = vadd.f32 %v5603, %v5604
        %v5606 = vsel %vm5064, %v5531, 0.0
        %v5607 = vadd.f32 %v5605, %v5606
        %v5608 = vsel %vm5064, %v5532, 0.0
        %v5609 = vadd.f32 %v5607, %v5608
        %v5610 = vsel %vm5064, %v5533, 0.0
        %v5611 = vadd.f32 %v5609, %v5610
        %v5612 = vsel %vm5064, %v5534, 0.0
        %v5613 = vadd.f32 %v5611, %v5612
        %v5614 = vsel %vm5064, %v5535, 0.0
        %v5615 = vadd.f32 %v5613, %v5614
        %v5616 = vsel %vm5064, %v5536, 0.0
        %v5617 = vadd.f32 %v5615, %v5616
        %v5618 = vsel %vm5064, %v5537, 0.0
        %v5619 = vadd.f32 %v5617, %v5618
        %v5620 = vsel %vm5064, %v5538, 0.0
        %v5621 = vadd.f32 %v5619, %v5620
        %v5622 = vsel %vm5064, %v5539, 0.0
        %v5623 = vadd.f32 %v5621, %v5622
        %v5624 = vsel %vm5064, %v5540, 0.0
        %v5625 = vadd.f32 %v5623, %v5624
        %v5626 = vsel %vm5064, %v5541, 0.0
        %v5627 = vadd.f32 %v5625, %v5626
        %v5628 = vsel %vm5064, %v5542, 0.0
        %v5629 = vadd.f32 %v5627, %v5628
        %v5630 = vsel %vm5064, %v5543, 0.0
        %v5631 = vadd.f32 %v5629, %v5630
        %v5632 = vsel %vm5064, %v5544, 0.0
        %v5633 = vadd.f32 %v5631, %v5632
        %v5634 = vsel %vm5064, %v5545, 0.0
        %v5635 = vadd.f32 %v5633, %v5634
        %v5636 = vsel %vm5064, %v5546, 0.0
        %v5637 = vadd.f32 %v5635, %v5636
        %v5638 = vsel %vm5064, %v5547, 0.0
        %v5639 = vadd.f32 %v5637, %v5638
        %v5640 = vsel %vm5064, %v5548, 0.0
        %v5641 = vadd.f32 %v5639, %v5640
        %v5642 = vsel %vm5064, %v5549, 0.0
        %v5643 = vadd.f32 %v5641, %v5642
        %v5644 = vsel %vm5064, %v5550, 0.0
        %v5645 = vadd.f32 %v5643, %v5644
        %v5646 = vsel %vm5064, %v5551, 0.0
        %v5647 = vadd.f32 %v5645, %v5646
        %v5648 = vsel %vm5064, %v5552, 0.0
        %v5649 = vadd.f32 %v5647, %v5648
        %v5650 = vsel %vm5064, %v5553, 0.0
        %v5651 = vadd.f32 %v5649, %v5650
        %v5652 = vsel %vm5064, %v5554, 0.0
        %v5653 = vadd.f32 %v5651, %v5652
        %v5654 = vsel %vm5064, %v5555, 0.0
        %v5655 = vadd.f32 %v5653, %v5654
        %v5656 = vsel %vm5064, %v5556, 0.0
        %v5657 = vadd.f32 %v5655, %v5656
        %v5658 = vsel %vm5064, %v5557, 0.0
        %v5659 = vadd.f32 %v5657, %v5658
        %v5660 = vsel %vm5064, %v5558, 0.0
        %v5661 = vadd.f32 %v5659, %v5660
        %v5662 = vsel %vm5064, %v5559, 0.0
        %v5663 = vadd.f32 %v5661, %v5662
        %v5664 = vsel %vm5064, %v5560, 0.0
        %v5665 = vadd.f32 %v5663, %v5664
        %v5666 = vsel %vm5064, %v5561, 0.0
        %v5667 = vadd.f32 %v5665, %v5666
        %v5668 = vsel %vm5064, %v5562, 0.0
        %v5669 = vadd.f32 %v5667, %v5668
        %v5670 = vsel %vm5064, %v5563, 0.0
        %v5671 = vadd.f32 %v5669, %v5670
        %v5672 = vsel %vm5064, %v5564, 0.0
        %v5673 = vadd.f32 %v5671, %v5672
        %v5674 = vsel %vm5064, %v5565, 0.0
        %v5675 = vadd.f32 %v5673, %v5674
        %v5676 = vsel %vm5064, %v5566, 0.0
        %v5677 = vadd.f32 %v5675, %v5676
        %v5678 = vsel %vm5064, %v5567, 0.0
        %v5679 = vadd.f32 %v5677, %v5678
        %v5680 = vsel %vm5064, %v5568, 0.0
        %v5681 = vadd.f32 %v5679, %v5680
        %v5682 = vsel %vm5064, %v5569, 0.0
        %v5683 = vadd.f32 %v5681, %v5682
        %v5684 = vsel %vm5064, %v5570, 0.0
        %v5685 = vadd.f32 %v5683, %v5684
        %v5686 = vsel %vm5064, %v5571, 0.0
        %v5687 = vadd.f32 %v5685, %v5686
        %v5688 = vsel %vm5064, %v5572, 0.0
        %v5689 = vadd.f32 %v5687, %v5688
        %v5690 = vsel %vm5064, %v5573, 0.0
        %v5691 = vadd.f32 %v5689, %v5690
        %v5692 = vsel %vm5064, %v5574, 0.0
        %v5693 = vadd.f32 %v5691, %v5692
        %v5694 = vsel %vm5064, %v5575, 0.0
        %v5695 = vadd.f32 %v5693, %v5694
        %v5696 = vsel %vm5064, %v5576, 0.0
        %v5697 = vadd.f32 %v5695, %v5696
        %v5698 = vsel %vm5064, %v5577, 0.0
        %v5699 = vadd.f32 %v5697, %v5698
        %v5700 = vsel %vm5064, %v5578, 0.0
        %v5701 = vadd.f32 %v5699, %v5700
        %v5702 = vsel %vm5064, %v5579, 0.0
        %v5703 = vadd.f32 %v5701, %v5702
        %v5704 = vsel %vm5064, %v5580, 0.0
        %v5705 = vadd.f32 %v5703, %v5704
        %v5706 = vsel %vm5064, %v5581, 0.0
        %v5707 = vadd.f32 %v5705, %v5706
        %v5708 = vsel %vm5064, %v5582, 0.0
        %v5709 = vadd.f32 %v5707, %v5708
        %v5710 = vsel %vm5064, %v5583, 0.0
        %v5711 = vadd.f32 %v5709, %v5710
        %v5712 = vrot.slane %v5711, 4
        %v5713 = vadd.f32 %v5711, %v5712
        %v5714 = vrot.slane %v5713, 2
        %v5715 = vadd.f32 %v5713, %v5714
        %v5716 = vrot.slane %v5715, 1
        %v5717 = vadd.f32 %v5715, %v5716
        %v5718 = vadd.f32 %v5584, %v5717
        %vm5719 = vcmask 57344
        %5720 = vst.msk [vmem:[%s275] sm:$0x1] %vm5719, %v5718
        %v5721 = vld [vmem:[%s281] sm:$0x1]
        %v5722 = vmul.f32 %v5520, %v5520
        %v5723 = vmul.f32 %v5521, %v5521
        %v5724 = vmul.f32 %v5522, %v5522
        %v5725 = vmul.f32 %v5523, %v5523
        %v5726 = vmul.f32 %v5524, %v5524
        %v5727 = vmul.f32 %v5525, %v5525
        %v5728 = vmul.f32 %v5526, %v5526
        %v5729 = vmul.f32 %v5527, %v5527
        %v5730 = vmul.f32 %v5528, %v5528
        %v5731 = vmul.f32 %v5529, %v5529
        %v5732 = vmul.f32 %v5530, %v5530
        %v5733 = vmul.f32 %v5531, %v5531
        %v5734 = vmul.f32 %v5532, %v5532
        %v5735 = vmul.f32 %v5533, %v5533
        %v5736 = vmul.f32 %v5534, %v5534
        %v5737 = vmul.f32 %v5535, %v5535
        %v5738 = vmul.f32 %v5536, %v5536
        %v5739 = vmul.f32 %v5537, %v5537
        %v5740 = vmul.f32 %v5538, %v5538
        %v5741 = vmul.f32 %v5539, %v5539
        %v5742 = vmul.f32 %v5540, %v5540
        %v5743 = vmul.f32 %v5541, %v5541
        %v5744 = vmul.f32 %v5542, %v5542
        %v5745 = vmul.f32 %v5543, %v5543
        %v5746 = vmul.f32 %v5544, %v5544
        %v5747 = vmul.f32 %v5545, %v5545
        %v5748 = vmul.f32 %v5546, %v5546
        %v5749 = vmul.f32 %v5547, %v5547
        %v5750 = vmul.f32 %v5548, %v5548
        %v5751 = vmul.f32 %v5549, %v5549
        %v5752 = vmul.f32 %v5550, %v5550
        %v5753 = vmul.f32 %v5551, %v5551
        %v5754 = vmul.f32 %v5552, %v5552
        %v5755 = vmul.f32 %v5553, %v5553
        %v5756 = vmul.f32 %v5554, %v5554
        %v5757 = vmul.f32 %v5555, %v5555
        %v5758 = vmul.f32 %v5556, %v5556
        %v5759 = vmul.f32 %v5557, %v5557
        %v5760 = vmul.f32 %v5558, %v5558
        %v5761 = vmul.f32 %v5559, %v5559
        %v5762 = vmul.f32 %v5560, %v5560
        %v5763 = vmul.f32 %v5561, %v5561
        %v5764 = vmul.f32 %v5562, %v5562
        %v5765 = vmul.f32 %v5563, %v5563
        %v5766 = vmul.f32 %v5564, %v5564
        %v5767 = vmul.f32 %v5565, %v5565
        %v5768 = vmul.f32 %v5566, %v5566
        %v5769 = vmul.f32 %v5567, %v5567
        %v5770 = vmul.f32 %v5568, %v5568
        %v5771 = vmul.f32 %v5569, %v5569
        %v5772 = vmul.f32 %v5570, %v5570
        %v5773 = vmul.f32 %v5571, %v5571
        %v5774 = vmul.f32 %v5572, %v5572
        %v5775 = vmul.f32 %v5573, %v5573
        %v5776 = vmul.f32 %v5574, %v5574
        %v5777 = vmul.f32 %v5575, %v5575
        %v5778 = vmul.f32 %v5576, %v5576
        %v5779 = vmul.f32 %v5577, %v5577
        %v5780 = vmul.f32 %v5578, %v5578
        %v5781 = vmul.f32 %v5579, %v5579
        %v5782 = vmul.f32 %v5580, %v5580
        %v5783 = vmul.f32 %v5581, %v5581
        %v5784 = vmul.f32 %v5582, %v5582
        %v5785 = vmul.f32 %v5583, %v5583
        %v5786 = vsel %vm5064, %v5722, 0.0
        %v5787 = vsel %vm5064, %v5723, 0.0
        %v5788 = vadd.f32 %v5786, %v5787
        %v5789 = vsel %vm5064, %v5724, 0.0
        %v5790 = vadd.f32 %v5788, %v5789
        %v5791 = vsel %vm5064, %v5725, 0.0
        %v5792 = vadd.f32 %v5790, %v5791
        %v5793 = vsel %vm5064, %v5726, 0.0
        %v5794 = vadd.f32 %v5792, %v5793
        %v5795 = vsel %vm5064, %v5727, 0.0
        %v5796 = vadd.f32 %v5794, %v5795
        %v5797 = vsel %vm5064, %v5728, 0.0
        %v5798 = vadd.f32 %v5796, %v5797
        %v5799 = vsel %vm5064, %v5729, 0.0
        %v5800 = vadd.f32 %v5798, %v5799
        %v5801 = vsel %vm5064, %v5730, 0.0
        %v5802 = vadd.f32 %v5800, %v5801
        %v5803 = vsel %vm5064, %v5731, 0.0
        %v5804 = vadd.f32 %v5802, %v5803
        %v5805 = vsel %vm5064, %v5732, 0.0
        %v5806 = vadd.f32 %v5804, %v5805
        %v5807 = vsel %vm5064, %v5733, 0.0
        %v5808 = vadd.f32 %v5806, %v5807
        %v5809 = vsel %vm5064, %v5734, 0.0
        %v5810 = vadd.f32 %v5808, %v5809
        %v5811 = vsel %vm5064, %v5735, 0.0
        %v5812 = vadd.f32 %v5810, %v5811
        %v5813 = vsel %vm5064, %v5736, 0.0
        %v5814 = vadd.f32 %v5812, %v5813
        %v5815 = vsel %vm5064, %v5737, 0.0
        %v5816 = vadd.f32 %v5814, %v5815
        %v5817 = vsel %vm5064, %v5738, 0.0
        %v5818 = vadd.f32 %v5816, %v5817
        %v5819 = vsel %vm5064, %v5739, 0.0
        %v5820 = vadd.f32 %v5818, %v5819
        %v5821 = vsel %vm5064, %v5740, 0.0
        %v5822 = vadd.f32 %v5820, %v5821
        %v5823 = vsel %vm5064, %v5741, 0.0
        %v5824 = vadd.f32 %v5822, %v5823
        %v5825 = vsel %vm5064, %v5742, 0.0
        %v5826 = vadd.f32 %v5824, %v5825
        %v5827 = vsel %vm5064, %v5743, 0.0
        %v5828 = vadd.f32 %v5826, %v5827
        %v5829 = vsel %vm5064, %v5744, 0.0
        %v5830 = vadd.f32 %v5828, %v5829
        %v5831 = vsel %vm5064, %v5745, 0.0
        %v5832 = vadd.f32 %v5830, %v5831
        %v5833 = vsel %vm5064, %v5746, 0.0
        %v5834 = vadd.f32 %v5832, %v5833
        %v5835 = vsel %vm5064, %v5747, 0.0
        %v5836 = vadd.f32 %v5834, %v5835
        %v5837 = vsel %vm5064, %v5748, 0.0
        %v5838 = vadd.f32 %v5836, %v5837
        %v5839 = vsel %vm5064, %v5749, 0.0
        %v5840 = vadd.f32 %v5838, %v5839
        %v5841 = vsel %vm5064, %v5750, 0.0
        %v5842 = vadd.f32 %v5840, %v5841
        %v5843 = vsel %vm5064, %v5751, 0.0
        %v5844 = vadd.f32 %v5842, %v5843
        %v5845 = vsel %vm5064, %v5752, 0.0
        %v5846 = vadd.f32 %v5844, %v5845
        %v5847 = vsel %vm5064, %v5753, 0.0
        %v5848 = vadd.f32 %v5846, %v5847
        %v5849 = vsel %vm5064, %v5754, 0.0
        %v5850 = vadd.f32 %v5848, %v5849
        %v5851 = vsel %vm5064, %v5755, 0.0
        %v5852 = vadd.f32 %v5850, %v5851
        %v5853 = vsel %vm5064, %v5756, 0.0
        %v5854 = vadd.f32 %v5852, %v5853
        %v5855 = vsel %vm5064, %v5757, 0.0
        %v5856 = vadd.f32 %v5854, %v5855
        %v5857 = vsel %vm5064, %v5758, 0.0
        %v5858 = vadd.f32 %v5856, %v5857
        %v5859 = vsel %vm5064, %v5759, 0.0
        %v5860 = vadd.f32 %v5858, %v5859
        %v5861 = vsel %vm5064, %v5760, 0.0
        %v5862 = vadd.f32 %v5860, %v5861
        %v5863 = vsel %vm5064, %v5761, 0.0
        %v5864 = vadd.f32 %v5862, %v5863
        %v5865 = vsel %vm5064, %v5762, 0.0
        %v5866 = vadd.f32 %v5864, %v5865
        %v5867 = vsel %vm5064, %v5763, 0.0
        %v5868 = vadd.f32 %v5866, %v5867
        %v5869 = vsel %vm5064, %v5764, 0.0
        %v5870 = vadd.f32 %v5868, %v5869
        %v5871 = vsel %vm5064, %v5765, 0.0
        %v5872 = vadd.f32 %v5870, %v5871
        %v5873 = vsel %vm5064, %v5766, 0.0
        %v5874 = vadd.f32 %v5872, %v5873
        %v5875 = vsel %vm5064, %v5767, 0.0
        %v5876 = vadd.f32 %v5874, %v5875
        %v5877 = vsel %vm5064, %v5768, 0.0
        %v5878 = vadd.f32 %v5876, %v5877
        %v5879 = vsel %vm5064, %v5769, 0.0
        %v5880 = vadd.f32 %v5878, %v5879
        %v5881 = vsel %vm5064, %v5770, 0.0
        %v5882 = vadd.f32 %v5880, %v5881
        %v5883 = vsel %vm5064, %v5771, 0.0
        %v5884 = vadd.f32 %v5882, %v5883
        %v5885 = vsel %vm5064, %v5772, 0.0
        %v5886 = vadd.f32 %v5884, %v5885
        %v5887 = vsel %vm5064, %v5773, 0.0
        %v5888 = vadd.f32 %v5886, %v5887
        %v5889 = vsel %vm5064, %v5774, 0.0
        %v5890 = vadd.f32 %v5888, %v5889
        %v5891 = vsel %vm5064, %v5775, 0.0
        %v5892 = vadd.f32 %v5890, %v5891
        %v5893 = vsel %vm5064, %v5776, 0.0
        %v5894 = vadd.f32 %v5892, %v5893
        %v5895 = vsel %vm5064, %v5777, 0.0
        %v5896 = vadd.f32 %v5894, %v5895
        %v5897 = vsel %vm5064, %v5778, 0.0
        %v5898 = vadd.f32 %v5896, %v5897
        %v5899 = vsel %vm5064, %v5779, 0.0
        %v5900 = vadd.f32 %v5898, %v5899
        %v5901 = vsel %vm5064, %v5780, 0.0
        %v5902 = vadd.f32 %v5900, %v5901
        %v5903 = vsel %vm5064, %v5781, 0.0
        %v5904 = vadd.f32 %v5902, %v5903
        %v5905 = vsel %vm5064, %v5782, 0.0
        %v5906 = vadd.f32 %v5904, %v5905
        %v5907 = vsel %vm5064, %v5783, 0.0
        %v5908 = vadd.f32 %v5906, %v5907
        %v5909 = vsel %vm5064, %v5784, 0.0
        %v5910 = vadd.f32 %v5908, %v5909
        %v5911 = vsel %vm5064, %v5785, 0.0
        %v5912 = vadd.f32 %v5910, %v5911
        %v5913 = vrot.slane %v5912, 4
        %v5914 = vadd.f32 %v5912, %v5913
        %v5915 = vrot.slane %v5914, 2
        %v5916 = vadd.f32 %v5914, %v5915
        %v5917 = vrot.slane %v5916, 1
        %v5918 = vadd.f32 %v5916, %v5917
        %v5919 = vadd.f32 %v5721, %v5918
        %5920 = vst.msk [vmem:[%s281] sm:$0x1] %vm5719, %v5919
        %s5921 = sadd.s32 %s28, %s29
        %s5922 = smul.u32 64, %s5921
        %p5923 = scmp.lt.s32.totalorder %s5922, 127
        %s5924 = scalar_select %p5923, %s5922, 127
        %s5925 = smul.addr %s5924, 8
        %s5926 = scalar_lea.vmem %s4, %s5925
        %s5927 = sand.u32 %s163, 1
        %s5928 = scalar_lea.sflag [#allocation3], %s5927
        %s5929 = sand.u32 %s163, 1
        %s5930 = scalar_lea.vmem [#allocation2], %s5929
        %s5931 = sand.u32 %s189, 1
        %s5932 = scalar_lea.sflag [#allocation5], %s5931
        %s5933 = sand.u32 %s189, 1
        %s5934 = scalar_lea.vmem [#allocation4], %s5933
        // Predicated region
        $region41: #{tpu_custom_call.1} parent=35 // pred_check
          %p5935 = pneg %p147
        $region42: #{tpu_custom_call.1} parent=35 // pred_check_branch
          %5937 = sbr.rel (%p5935) target = $region44
        $region43: #{tpu_custom_call.1} parent=35 // pred_region
          %s5938 = sadd.s32 %s28, %s29
          %s5939 = smul.u32 64, %s5938
        $region44: #{tpu_custom_call.1} parent=35 // pred_fallthru
          _
        // Predicated region
        $region45: #{tpu_custom_call.1} parent=35 // pred_check
          %p5940 = pneg %p173
        $region46: #{tpu_custom_call.1} parent=35 // pred_check_branch
          %5942 = sbr.rel (%p5940) target = $region48
        $region47: #{tpu_custom_call.1} parent=35 // pred_region
          %5944 = vsyncadd %s5928, 0
          %s5945 = scalar_lea.hbm %s5, %s28
          %s5947 = sshll.u32 %s5930, 4
          %s5948 = int_to_ptr.vmem [resolvable:$true] %s5947
          %s5949 = sshll.u32 %s5945, 4
          %s5950 = int_to_ptr.hbm [resolvable:$true] %s5949
          %5952 = dma.vmem_to_hbm [thread:$0]  %s5948, 16, %s5950, %s5928
        $region48: #{tpu_custom_call.1} parent=35 // pred_fallthru
          _
        // Predicated region
        $region49: #{tpu_custom_call.1} parent=35 // pred_check
          %p5953 = pneg %p199
        $region50: #{tpu_custom_call.1} parent=35 // pred_check_branch
          %5955 = sbr.rel (%p5953) target = $region52
        $region51: #{tpu_custom_call.1} parent=35 // pred_region
          %5957 = vsyncadd %s5932, 0
          %s5958 = scalar_lea.hbm %s6, %s28
          %s5960 = sshll.u32 %s5934, 4
          %s5961 = int_to_ptr.vmem [resolvable:$true] %s5960
          %s5962 = sshll.u32 %s5958, 4
          %s5963 = int_to_ptr.hbm [resolvable:$true] %s5962
          %5965 = dma.vmem_to_hbm [thread:$0]  %s5961, 16, %s5963, %s5932
        $region52: #{tpu_custom_call.1} parent=35 // pred_fallthru
          _
      $region36: #{tpu_custom_call.1} parent=5 // pred_fallthru
        _
      %p5966 = scmp.le.s32.totalorder 2, %s19
      // Predicated region
      $region53: #{tpu_custom_call.1} parent=5 // pred_check
        %p5967 = pneg %p5966
      $region54: #{tpu_custom_call.1} parent=5 // pred_check_branch
        %5969 = sbr.rel (%p5967) target = $region56
      $region55: #{tpu_custom_call.1} parent=5 // pred_region
        %s5970 = ssub.s32 %s19, 2
        // Predicated region
        $region57: #{tpu_custom_call.1} parent=55 // pred_check
          %p5971 = pneg %p153
        $region58: #{tpu_custom_call.1} parent=55 // pred_check_branch
          %5973 = sbr.rel (%p5971) target = $region60
        $region59: #{tpu_custom_call.1} parent=55 // pred_region
          %s5974 = sadd.s32 %s30, %s31
          %s5975 = smul.u32 64, %s5974
          %p5976 = scmp.lt.s32.totalorder %s5975, 127
          %s5977 = scalar_select %p5976, %s5975, 127
          %s5978 = smul.addr %s5977, 8
          %s5979 = scalar_lea.vmem %s4, %s5978
        $region60: #{tpu_custom_call.1} parent=55 // pred_fallthru
          _
        // Predicated region
        $region61: #{tpu_custom_call.1} parent=55 // pred_check
          %p5980 = pneg %p179
        $region62: #{tpu_custom_call.1} parent=55 // pred_check_branch
          %5982 = sbr.rel (%p5980) target = $region64
        $region63: #{tpu_custom_call.1} parent=55 // pred_region
          %s5983 = sand.u32 %s164, 1
          %s5984 = scalar_lea.sflag [#allocation3], %s5983
          %s5985 = sand.u32 %s164, 1
          %s5986 = scalar_lea.vmem [#allocation2], %s5985
          %5988 = dma.done %s5984, 16
        $region64: #{tpu_custom_call.1} parent=55 // pred_fallthru
          _
        // Predicated region
        $region65: #{tpu_custom_call.1} parent=55 // pred_check
          %p5989 = pneg %p205
        $region66: #{tpu_custom_call.1} parent=55 // pred_check_branch
          %5991 = sbr.rel (%p5989) target = $region68
        $region67: #{tpu_custom_call.1} parent=55 // pred_region
          %s5992 = sand.u32 %s190, 1
          %s5993 = scalar_lea.sflag [#allocation5], %s5992
          %s5994 = sand.u32 %s190, 1
          %s5995 = scalar_lea.vmem [#allocation4], %s5994
          %5997 = dma.done %s5993, 16
        $region68: #{tpu_custom_call.1} parent=55 // pred_fallthru
          _
      $region56: #{tpu_custom_call.1} parent=5 // pred_fallthru
        _
    $region6: #{tpu_custom_call.1} parent=1 // loop_footer
      %s23 = sadd.s32 1, %s19
    $region7: #{tpu_custom_call.1} parent=1 // loop_footer_branch
      %18 = sbr.rel target = $region3
    $region8: #{tpu_custom_call.1} parent=1 // loop_exit
      _
    %5998 = vsyncpa [#allocation3], 1
    %s5999 = scalar_lea.sflag [#allocation3], 1
    %6000 = vsyncpa %s5999, 1
    %6001 = vsyncpa [#allocation5], 1
    %s6002 = scalar_lea.sflag [#allocation5], 1
    %6003 = vsyncpa %s6002, 1

</llo_original>
